<compile_context>
chip_gen: v5e
topology: v5e:2x2
jax: 0.10.0
libtpu: 0.0.40
codegen_flags: <defaults>
</compile_context>

<pallas_src>
import jax
import jax.numpy as jnp
from jax.experimental import pallas as pl
from jax.experimental.pallas import tpu as pltpu

Z_DIM = 64
I_DIM = 784
I_DIM_PAD = 896          # 7 * 128 — lane-dense padded final width
H_DIM = 128
BN_EPS = 1e-5

# Layout of the packed per-feature parameter slab (2, GB_TOTAL):
#   row 0: [gamma1 | gamma2 | gamma3 | gamma4 | b5(padded to 896)]
#   row 1: [beta1  | beta2  | beta3  | beta4  | zeros              ]
_BN_WIDTHS = (H_DIM, H_DIM * 2, H_DIM * 4, H_DIM * 8)        # 128,256,512,1024
_BN_STARTS = (0, 128, 384, 896)                               # running offsets
_B5_START = 1920                                              # sum(_BN_WIDTHS)
GB_TOTAL = _B5_START + I_DIM_PAD                               # 2816 = 22*128


# ---------------------------------------------------------------- kernel ----
def generator_kernel(x_ref, gb_ref, w1, w2, w3, w4, w5, o_ref):
    """Fused 4x(Linear+BN+ReLU) + Linear + Sigmoid for one batch (grid step).

    x_ref: (1, B, 64) f32   gb_ref: (2, 2816) f32   wK: bf16 weights
    o_ref: (1, B, 896) f32
    """

    def block(x, w_ref, start, width):
        # bf16 matmul on the MXU, f32 accumulation.  No Linear bias: it is
        # exactly cancelled by the BN mean subtraction below.
        y = jnp.dot(x.astype(jnp.bfloat16), w_ref[...],
                    preferred_element_type=jnp.float32)        # (B, width)
        gamma = gb_ref[0:1, start:start + width]                # (1, width)
        beta = gb_ref[1:2, start:start + width]                 # (1, width)
        # One-pass batch statistics (biased variance, PyTorch training mode).
        inv_b = 1.0 / y.shape[0]
        s1 = jnp.sum(y, axis=0, keepdims=True)
        s2 = jnp.sum(y * y, axis=0, keepdims=True)
        mean = s1 * inv_b
        var = jnp.maximum(s2 * inv_b - mean * mean, 0.0)        # fp guard
        # Folded BN: single scale/shift FMA per element, then ReLU.
        scale = gamma * jax.lax.rsqrt(var + BN_EPS)
        shift = beta - mean * scale
        return jnp.maximum(y * scale + shift, 0.0)

    x = x_ref[0]                                                # (B, 64) f32
    x = block(x, w1, _BN_STARTS[0], _BN_WIDTHS[0])              # (B, 128)
    x = block(x, w2, _BN_STARTS[1], _BN_WIDTHS[1])              # (B, 256)
    x = block(x, w3, _BN_STARTS[2], _BN_WIDTHS[2])              # (B, 512)
    x = block(x, w4, _BN_STARTS[3], _BN_WIDTHS[3])              # (B, 1024)

    b5 = gb_ref[0:1, _B5_START:_B5_START + I_DIM_PAD]           # (1, 896)
    y = jnp.dot(x.astype(jnp.bfloat16), w5[...],
                preferred_element_type=jnp.float32) + b5        # (B, 896)
    o_ref[0] = jax.nn.sigmoid(y)


# --------------------------------------------------------------- wrapper ----
def generator_pallas_batched(noise_batches, params):
    """noise_batches: (N, B, Z_DIM).  Each of the N batches is an independent
    forward pass (its own BN batch statistics), exactly as if the PyTorch
    module were called N times.  Weights are fetched once per pallas_call."""
    N, B, Z = noise_batches.shape
    gb, w1, w2, w3, w4, w5 = params
    const2d = lambda n: (0, 0)          # weight/param blocks stay VMEM-resident

    out_padded = pl.pallas_call(
        generator_kernel,
        out_shape=jax.ShapeDtypeStruct((N, B, I_DIM_PAD), jnp.float32),
        grid=(N,),
        in_specs=[
            pl.BlockSpec((1, B, Z), lambda n: (n, 0, 0)),       # noise streams
            pl.BlockSpec(gb.shape, const2d),                    # packed vectors
            pl.BlockSpec(w1.shape, const2d),
            pl.BlockSpec(w2.shape, const2d),
            pl.BlockSpec(w3.shape, const2d),
            pl.BlockSpec(w4.shape, const2d),
            pl.BlockSpec(w5.shape, const2d),
        ],
        out_specs=pl.BlockSpec((1, B, I_DIM_PAD), lambda n: (n, 0, 0)),
        compiler_params=pltpu.CompilerParams(
            dimension_semantics=("parallel",)),                 # both TCs on v7x
    )(noise_batches, gb, w1, w2, w3, w4, w5)
    # Drop zero-padded lanes (store itself was lane-dense; slice is cheap).
    return out_padded[..., :I_DIM]


@jax.jit
def generator_forward_batched(noise_batches, params):
    return generator_pallas_batched(noise_batches, params)


@jax.jit
def generator_forward(noise, params):
    """Single-batch API matching Generator.forward(noise): noise (B, Z_DIM)."""
    return generator_pallas_batched(noise[None], params)[0]


# ---------------------------------------------------------------- params ----
def init_params(key, z_dim=Z_DIM, i_dim=I_DIM, h_dim=H_DIM):
    """PyTorch-default Linear init U(-1/sqrt(fan_in), 1/sqrt(fan_in)); BN
    gamma=1, beta=0.  Layers 1-4 biases are omitted (exactly cancelled by BN
    mean subtraction in training-mode forward).  Weights pre-transposed to
    (in, out) and stored bf16.  Returns (gb_slab, w1, w2, w3, w4, w5)."""
    dims = [z_dim, h_dim, h_dim * 2, h_dim * 4, h_dim * 8, i_dim]
    weights = []
    gb = jnp.zeros((2, GB_TOTAL), jnp.float32)
    for li in range(5):
        fan_in, fan_out = dims[li], dims[li + 1]
        key, kw, kb = jax.random.split(key, 3)
        bound = 1.0 / jnp.sqrt(fan_in)
        w_t = jax.random.uniform(kw, (fan_in, fan_out), jnp.float32,
                                 minval=-bound, maxval=bound)
        if li < 4:
            # genBlock: Linear (bias dropped — cancelled by BN) + BN + ReLU
            weights.append(w_t.astype(jnp.bfloat16))
            gb = gb.at[0, _BN_STARTS[li]:_BN_STARTS[li] + fan_out].set(1.0)
            # beta row stays zero
        else:
            # final Linear: pad 784 -> 896 (7*128) so the output is lane-dense
            b = jax.random.uniform(kb, (fan_out,), jnp.float32,
                                   minval=-bound, maxval=bound)
            w_pad = jnp.zeros((fan_in, I_DIM_PAD), jnp.float32)
            w_pad = w_pad.at[:, :fan_out].set(w_t)
            weights.append(w_pad.astype(jnp.bfloat16))
            gb = gb.at[0, _B5_START:_B5_START + fan_out].set(b)
    # TODO(synk): BatchNorm running_mean/running_var buffers are not tracked
    # (training-mode forward output does not depend on them).
    return (gb, *weights)


# ------------------------------------------------------------------- main ---
if __name__ == "__main__":
    key = jax.random.PRNGKey(0)
    key, knoise = jax.random.split(key)

    N_BATCHES = 4   # independent batches streamed through one pallas_call
    B = 8           # >1 so BatchNorm batch statistics are well-defined
    noise = jax.random.normal(knoise, (N_BATCHES, B, Z_DIM), jnp.float32)

    params = init_params(jax.random.PRNGKey(0))

    # Batched path (grid over independent batches, weights fetched once).
    out = generator_forward_batched(noise, params)
    out = jax.block_until_ready(out)
    assert out.shape == (N_BATCHES, B, I_DIM), out.shape
    assert bool(jnp.all(jnp.isfinite(out)))
    assert bool(jnp.all((out >= 0.0) & (out <= 1.0)))   # sigmoid range

    # Single-batch path matching the original module's forward(noise).
    out1 = generator_forward(noise[0], params)
    out1 = jax.block_until_ready(out1)
    assert out1.shape == (B, I_DIM), out1.shape
    assert bool(jnp.all(jnp.isfinite(out1)))
    assert bool(jnp.allclose(out1, out[0], atol=1e-5))

    print("KERNEL_OK")
</pallas_src>

<mosaic_0001>
module attributes {stable_mosaic.version = 11 : i64} {
  func.func @generator_kernel(%arg0: i32, %arg1: memref<1x8x64xf32, #tpu.memory_space<vmem>>, %arg2: memref<2x2816xf32, #tpu.memory_space<vmem>>, %arg3: memref<64x128xbf16, #tpu.memory_space<vmem>>, %arg4: memref<128x256xbf16, #tpu.memory_space<vmem>>, %arg5: memref<256x512xbf16, #tpu.memory_space<vmem>>, %arg6: memref<512x1024xbf16, #tpu.memory_space<vmem>>, %arg7: memref<1024x896xbf16, #tpu.memory_space<vmem>>, %arg8: memref<1x8x896xf32, #tpu.memory_space<vmem>>) attributes {dimension_semantics = [#tpu.dimension_semantics<parallel>], iteration_bounds = array<i64: 4>, scalar_prefetch = 0 : i64, scratch_operands = 0 : i64, tpu.core_type = #tpu.core_type<tc>, window_params = [{transform_indices = @transform_0, window_bounds = array<i64: 1, 8, 64>}, {pipeline_mode = #tpu.pipeline_mode<synchronous>, transform_indices = @transform_1, window_bounds = array<i64: 2, 2816>}, {pipeline_mode = #tpu.pipeline_mode<synchronous>, transform_indices = @transform_2, window_bounds = array<i64: 64, 128>}, {pipeline_mode = #tpu.pipeline_mode<synchronous>, transform_indices = @transform_3, window_bounds = array<i64: 128, 256>}, {pipeline_mode = #tpu.pipeline_mode<synchronous>, transform_indices = @transform_4, window_bounds = array<i64: 256, 512>}, {pipeline_mode = #tpu.pipeline_mode<synchronous>, transform_indices = @transform_5, window_bounds = array<i64: 512, 1024>}, {pipeline_mode = #tpu.pipeline_mode<synchronous>, transform_indices = @transform_6, window_bounds = array<i64: 1024, 896>}, {transform_indices = @transform_7, window_bounds = array<i64: 1, 8, 896>}]} {
    %c0 = arith.constant 0 : index
    %c0_0 = arith.constant 0 : index
    %c0_1 = arith.constant 0 : index
    %0 = vector.load %arg1[%c0, %c0_0, %c0_1] : memref<1x8x64xf32, #tpu.memory_space<vmem>>, vector<1x8x64xf32>
    %1 = vector.shape_cast %0 : vector<1x8x64xf32> to vector<8x64xf32>
    %2 = arith.truncf %1 : vector<8x64xf32> to vector<8x64xbf16>
    %c0_2 = arith.constant 0 : index
    %c0_3 = arith.constant 0 : index
    %3 = vector.load %arg3[%c0_2, %c0_3] : memref<64x128xbf16, #tpu.memory_space<vmem>>, vector<64x128xbf16>
    %cst = arith.constant dense<0.000000e+00> : vector<8x128xf32>
    %4 = tpu.matmul %2, %3, %cst {dimension_numbers = #tpu.dot_dimension_numbers<[1], [0], [0], [1], [0, 0, 1, 1], [], []>} : vector<8x64xbf16>, vector<64x128xbf16>, vector<8x128xf32> -> vector<8x128xf32>
    %c0_4 = arith.constant 0 : index
    %c0_5 = arith.constant 0 : index
    %5 = vector.load %arg2[%c0_4, %c0_5] : memref<2x2816xf32, #tpu.memory_space<vmem>>, vector<1x128xf32>
    %c1 = arith.constant 1 : index
    %c0_6 = arith.constant 0 : index
    %6 = vector.load %arg2[%c1, %c0_6] : memref<2x2816xf32, #tpu.memory_space<vmem>>, vector<1x128xf32>
    %cst_7 = arith.constant dense<0.000000e+00> : vector<128xf32>
    %7 = vector.multi_reduction <add>, %4, %cst_7 [0] : vector<8x128xf32> to vector<128xf32>
    %8 = vector.shape_cast %7 : vector<128xf32> to vector<1x128xf32>
    %9 = arith.mulf %4, %4 : vector<8x128xf32>
    %cst_8 = arith.constant dense<0.000000e+00> : vector<128xf32>
    %10 = vector.multi_reduction <add>, %9, %cst_8 [0] : vector<8x128xf32> to vector<128xf32>
    %11 = vector.shape_cast %10 : vector<128xf32> to vector<1x128xf32>
    %cst_9 = arith.constant 1.250000e-01 : f32
    %12 = vector.broadcast %cst_9 : f32 to vector<1x128xf32>
    %13 = arith.mulf %8, %12 : vector<1x128xf32>
    %cst_10 = arith.constant 1.250000e-01 : f32
    %14 = vector.broadcast %cst_10 : f32 to vector<1x128xf32>
    %15 = arith.mulf %11, %14 : vector<1x128xf32>
    %16 = arith.mulf %13, %13 : vector<1x128xf32>
    %17 = arith.subf %15, %16 : vector<1x128xf32>
    %cst_11 = arith.constant 0.000000e+00 : f32
    %18 = vector.broadcast %cst_11 : f32 to vector<1x128xf32>
    %19 = arith.maximumf %17, %18 : vector<1x128xf32>
    %cst_12 = arith.constant 9.99999974E-6 : f32
    %20 = vector.broadcast %cst_12 : f32 to vector<1x128xf32>
    %21 = arith.addf %19, %20 : vector<1x128xf32>
    %22 = math.rsqrt %21 : vector<1x128xf32>
    %23 = arith.mulf %5, %22 : vector<1x128xf32>
    %24 = arith.mulf %13, %23 : vector<1x128xf32>
    %25 = arith.subf %6, %24 : vector<1x128xf32>
    %26 = vector.broadcast %23 : vector<1x128xf32> to vector<8x128xf32>
    %27 = arith.mulf %4, %26 : vector<8x128xf32>
    %28 = vector.broadcast %25 : vector<1x128xf32> to vector<8x128xf32>
    %29 = arith.addf %27, %28 : vector<8x128xf32>
    %cst_13 = arith.constant 0.000000e+00 : f32
    %30 = vector.broadcast %cst_13 : f32 to vector<8x128xf32>
    %31 = arith.maximumf %29, %30 : vector<8x128xf32>
    %32 = arith.truncf %31 : vector<8x128xf32> to vector<8x128xbf16>
    %c0_14 = arith.constant 0 : index
    %c0_15 = arith.constant 0 : index
    %33 = vector.load %arg4[%c0_14, %c0_15] : memref<128x256xbf16, #tpu.memory_space<vmem>>, vector<128x256xbf16>
    %cst_16 = arith.constant dense<0.000000e+00> : vector<8x256xf32>
    %34 = tpu.matmul %32, %33, %cst_16 {dimension_numbers = #tpu.dot_dimension_numbers<[1], [0], [0], [1], [0, 0, 1, 1], [], []>} : vector<8x128xbf16>, vector<128x256xbf16>, vector<8x256xf32> -> vector<8x256xf32>
    %c0_17 = arith.constant 0 : index
    %c128 = arith.constant 128 : index
    %35 = vector.load %arg2[%c0_17, %c128] : memref<2x2816xf32, #tpu.memory_space<vmem>>, vector<1x256xf32>
    %c1_18 = arith.constant 1 : index
    %c128_19 = arith.constant 128 : index
    %36 = vector.load %arg2[%c1_18, %c128_19] : memref<2x2816xf32, #tpu.memory_space<vmem>>, vector<1x256xf32>
    %cst_20 = arith.constant dense<0.000000e+00> : vector<256xf32>
    %37 = vector.multi_reduction <add>, %34, %cst_20 [0] : vector<8x256xf32> to vector<256xf32>
    %38 = vector.shape_cast %37 : vector<256xf32> to vector<1x256xf32>
    %39 = arith.mulf %34, %34 : vector<8x256xf32>
    %cst_21 = arith.constant dense<0.000000e+00> : vector<256xf32>
    %40 = vector.multi_reduction <add>, %39, %cst_21 [0] : vector<8x256xf32> to vector<256xf32>
    %41 = vector.shape_cast %40 : vector<256xf32> to vector<1x256xf32>
    %cst_22 = arith.constant 1.250000e-01 : f32
    %42 = vector.broadcast %cst_22 : f32 to vector<1x256xf32>
    %43 = arith.mulf %38, %42 : vector<1x256xf32>
    %cst_23 = arith.constant 1.250000e-01 : f32
    %44 = vector.broadcast %cst_23 : f32 to vector<1x256xf32>
    %45 = arith.mulf %41, %44 : vector<1x256xf32>
    %46 = arith.mulf %43, %43 : vector<1x256xf32>
    %47 = arith.subf %45, %46 : vector<1x256xf32>
    %cst_24 = arith.constant 0.000000e+00 : f32
    %48 = vector.broadcast %cst_24 : f32 to vector<1x256xf32>
    %49 = arith.maximumf %47, %48 : vector<1x256xf32>
    %cst_25 = arith.constant 9.99999974E-6 : f32
    %50 = vector.broadcast %cst_25 : f32 to vector<1x256xf32>
    %51 = arith.addf %49, %50 : vector<1x256xf32>
    %52 = math.rsqrt %51 : vector<1x256xf32>
    %53 = arith.mulf %35, %52 : vector<1x256xf32>
    %54 = arith.mulf %43, %53 : vector<1x256xf32>
    %55 = arith.subf %36, %54 : vector<1x256xf32>
    %56 = vector.broadcast %53 : vector<1x256xf32> to vector<8x256xf32>
    %57 = arith.mulf %34, %56 : vector<8x256xf32>
    %58 = vector.broadcast %55 : vector<1x256xf32> to vector<8x256xf32>
    %59 = arith.addf %57, %58 : vector<8x256xf32>
    %cst_26 = arith.constant 0.000000e+00 : f32
    %60 = vector.broadcast %cst_26 : f32 to vector<8x256xf32>
    %61 = arith.maximumf %59, %60 : vector<8x256xf32>
    %62 = arith.truncf %61 : vector<8x256xf32> to vector<8x256xbf16>
    %c0_27 = arith.constant 0 : index
    %c0_28 = arith.constant 0 : index
    %63 = vector.load %arg5[%c0_27, %c0_28] : memref<256x512xbf16, #tpu.memory_space<vmem>>, vector<256x512xbf16>
    %cst_29 = arith.constant dense<0.000000e+00> : vector<8x512xf32>
    %64 = tpu.matmul %62, %63, %cst_29 {dimension_numbers = #tpu.dot_dimension_numbers<[1], [0], [0], [1], [0, 0, 1, 1], [], []>} : vector<8x256xbf16>, vector<256x512xbf16>, vector<8x512xf32> -> vector<8x512xf32>
    %c0_30 = arith.constant 0 : index
    %c384 = arith.constant 384 : index
    %65 = vector.load %arg2[%c0_30, %c384] : memref<2x2816xf32, #tpu.memory_space<vmem>>, vector<1x512xf32>
    %c1_31 = arith.constant 1 : index
    %c384_32 = arith.constant 384 : index
    %66 = vector.load %arg2[%c1_31, %c384_32] : memref<2x2816xf32, #tpu.memory_space<vmem>>, vector<1x512xf32>
    %cst_33 = arith.constant dense<0.000000e+00> : vector<512xf32>
    %67 = vector.multi_reduction <add>, %64, %cst_33 [0] : vector<8x512xf32> to vector<512xf32>
    %68 = vector.shape_cast %67 : vector<512xf32> to vector<1x512xf32>
    %69 = arith.mulf %64, %64 : vector<8x512xf32>
    %cst_34 = arith.constant dense<0.000000e+00> : vector<512xf32>
    %70 = vector.multi_reduction <add>, %69, %cst_34 [0] : vector<8x512xf32> to vector<512xf32>
    %71 = vector.shape_cast %70 : vector<512xf32> to vector<1x512xf32>
    %cst_35 = arith.constant 1.250000e-01 : f32
    %72 = vector.broadcast %cst_35 : f32 to vector<1x512xf32>
    %73 = arith.mulf %68, %72 : vector<1x512xf32>
    %cst_36 = arith.constant 1.250000e-01 : f32
    %74 = vector.broadcast %cst_36 : f32 to vector<1x512xf32>
    %75 = arith.mulf %71, %74 : vector<1x512xf32>
    %76 = arith.mulf %73, %73 : vector<1x512xf32>
    %77 = arith.subf %75, %76 : vector<1x512xf32>
    %cst_37 = arith.constant 0.000000e+00 : f32
    %78 = vector.broadcast %cst_37 : f32 to vector<1x512xf32>
    %79 = arith.maximumf %77, %78 : vector<1x512xf32>
    %cst_38 = arith.constant 9.99999974E-6 : f32
    %80 = vector.broadcast %cst_38 : f32 to vector<1x512xf32>
    %81 = arith.addf %79, %80 : vector<1x512xf32>
    %82 = math.rsqrt %81 : vector<1x512xf32>
    %83 = arith.mulf %65, %82 : vector<1x512xf32>
    %84 = arith.mulf %73, %83 : vector<1x512xf32>
    %85 = arith.subf %66, %84 : vector<1x512xf32>
    %86 = vector.broadcast %83 : vector<1x512xf32> to vector<8x512xf32>
    %87 = arith.mulf %64, %86 : vector<8x512xf32>
    %88 = vector.broadcast %85 : vector<1x512xf32> to vector<8x512xf32>
    %89 = arith.addf %87, %88 : vector<8x512xf32>
    %cst_39 = arith.constant 0.000000e+00 : f32
    %90 = vector.broadcast %cst_39 : f32 to vector<8x512xf32>
    %91 = arith.maximumf %89, %90 : vector<8x512xf32>
    %92 = arith.truncf %91 : vector<8x512xf32> to vector<8x512xbf16>
    %c0_40 = arith.constant 0 : index
    %c0_41 = arith.constant 0 : index
    %93 = vector.load %arg6[%c0_40, %c0_41] : memref<512x1024xbf16, #tpu.memory_space<vmem>>, vector<512x1024xbf16>
    %cst_42 = arith.constant dense<0.000000e+00> : vector<8x1024xf32>
    %94 = tpu.matmul %92, %93, %cst_42 {dimension_numbers = #tpu.dot_dimension_numbers<[1], [0], [0], [1], [0, 0, 1, 1], [], []>} : vector<8x512xbf16>, vector<512x1024xbf16>, vector<8x1024xf32> -> vector<8x1024xf32>
    %c0_43 = arith.constant 0 : index
    %c896 = arith.constant 896 : index
    %95 = vector.load %arg2[%c0_43, %c896] : memref<2x2816xf32, #tpu.memory_space<vmem>>, vector<1x1024xf32>
    %c1_44 = arith.constant 1 : index
    %c896_45 = arith.constant 896 : index
    %96 = vector.load %arg2[%c1_44, %c896_45] : memref<2x2816xf32, #tpu.memory_space<vmem>>, vector<1x1024xf32>
    %cst_46 = arith.constant dense<0.000000e+00> : vector<1024xf32>
    %97 = vector.multi_reduction <add>, %94, %cst_46 [0] : vector<8x1024xf32> to vector<1024xf32>
    %98 = vector.shape_cast %97 : vector<1024xf32> to vector<1x1024xf32>
    %99 = arith.mulf %94, %94 : vector<8x1024xf32>
    %cst_47 = arith.constant dense<0.000000e+00> : vector<1024xf32>
    %100 = vector.multi_reduction <add>, %99, %cst_47 [0] : vector<8x1024xf32> to vector<1024xf32>
    %101 = vector.shape_cast %100 : vector<1024xf32> to vector<1x1024xf32>
    %cst_48 = arith.constant 1.250000e-01 : f32
    %102 = vector.broadcast %cst_48 : f32 to vector<1x1024xf32>
    %103 = arith.mulf %98, %102 : vector<1x1024xf32>
    %cst_49 = arith.constant 1.250000e-01 : f32
    %104 = vector.broadcast %cst_49 : f32 to vector<1x1024xf32>
    %105 = arith.mulf %101, %104 : vector<1x1024xf32>
    %106 = arith.mulf %103, %103 : vector<1x1024xf32>
    %107 = arith.subf %105, %106 : vector<1x1024xf32>
    %cst_50 = arith.constant 0.000000e+00 : f32
    %108 = vector.broadcast %cst_50 : f32 to vector<1x1024xf32>
    %109 = arith.maximumf %107, %108 : vector<1x1024xf32>
    %cst_51 = arith.constant 9.99999974E-6 : f32
    %110 = vector.broadcast %cst_51 : f32 to vector<1x1024xf32>
    %111 = arith.addf %109, %110 : vector<1x1024xf32>
    %112 = math.rsqrt %111 : vector<1x1024xf32>
    %113 = arith.mulf %95, %112 : vector<1x1024xf32>
    %114 = arith.mulf %103, %113 : vector<1x1024xf32>
    %115 = arith.subf %96, %114 : vector<1x1024xf32>
    %116 = vector.broadcast %113 : vector<1x1024xf32> to vector<8x1024xf32>
    %117 = arith.mulf %94, %116 : vector<8x1024xf32>
    %118 = vector.broadcast %115 : vector<1x1024xf32> to vector<8x1024xf32>
    %119 = arith.addf %117, %118 : vector<8x1024xf32>
    %cst_52 = arith.constant 0.000000e+00 : f32
    %120 = vector.broadcast %cst_52 : f32 to vector<8x1024xf32>
    %121 = arith.maximumf %119, %120 : vector<8x1024xf32>
    %c0_53 = arith.constant 0 : index
    %c1920 = arith.constant 1920 : index
    %122 = vector.load %arg2[%c0_53, %c1920] : memref<2x2816xf32, #tpu.memory_space<vmem>>, vector<1x896xf32>
    %123 = arith.truncf %121 : vector<8x1024xf32> to vector<8x1024xbf16>
    %c0_54 = arith.constant 0 : index
    %c0_55 = arith.constant 0 : index
    %124 = vector.load %arg7[%c0_54, %c0_55] : memref<1024x896xbf16, #tpu.memory_space<vmem>>, vector<1024x896xbf16>
    %cst_56 = arith.constant dense<0.000000e+00> : vector<8x896xf32>
    %125 = tpu.matmul %123, %124, %cst_56 {dimension_numbers = #tpu.dot_dimension_numbers<[1], [0], [0], [1], [0, 0, 1, 1], [], []>} : vector<8x1024xbf16>, vector<1024x896xbf16>, vector<8x896xf32> -> vector<8x896xf32>
    %126 = vector.broadcast %122 : vector<1x896xf32> to vector<8x896xf32>
    %127 = arith.addf %125, %126 : vector<8x896xf32>
    %128 = arith.negf %127 : vector<8x896xf32>
    %129 = math.exp %128 : vector<8x896xf32>
    %cst_57 = arith.constant 1.000000e+00 : f32
    %130 = vector.broadcast %cst_57 : f32 to vector<8x896xf32>
    %131 = arith.addf %130, %129 : vector<8x896xf32>
    %132 = arith.divf %130, %131 : vector<8x896xf32>
    %c0_58 = arith.constant 0 : index
    %c0_59 = arith.constant 0 : index
    %c0_60 = arith.constant 0 : index
    %133 = vector.load %arg8[%c0_58, %c0_59, %c0_60] : memref<1x8x896xf32, #tpu.memory_space<vmem>>, vector<1x8x896xf32>
    %134 = vector.shape_cast %133 : vector<1x8x896xf32> to vector<8x896xf32>
    %135 = vector.shape_cast %132 : vector<8x896xf32> to vector<1x8x896xf32>
    tpu.vector_store %arg8[%c0_58, %c0_59, %c0_60], %135 {strides = array<i32>} : memref<1x8x896xf32, #tpu.memory_space<vmem>>, vector<1x8x896xf32>,
    return
  }
  func.func @transform_0(%arg0: i32) -> (i32, i32, i32) {
    %c0_i32 = arith.constant 0 : i32
    %c0_i32_0 = arith.constant 0 : i32
    %c0_i32_1 = arith.constant 0 : i32
    return %arg0, %c0_i32, %c0_i32_0 : i32, i32, i32
  }
  func.func @transform_1(%arg0: i32) -> (i32, i32) {
    %c0_i32 = arith.constant 0 : i32
    %c0_i32_0 = arith.constant 0 : i32
    %c0_i32_1 = arith.constant 0 : i32
    return %c0_i32, %c0_i32_0 : i32, i32
  }
  func.func @transform_2(%arg0: i32) -> (i32, i32) {
    %c0_i32 = arith.constant 0 : i32
    %c0_i32_0 = arith.constant 0 : i32
    %c0_i32_1 = arith.constant 0 : i32
    return %c0_i32, %c0_i32_0 : i32, i32
  }
  func.func @transform_3(%arg0: i32) -> (i32, i32) {
    %c0_i32 = arith.constant 0 : i32
    %c0_i32_0 = arith.constant 0 : i32
    %c0_i32_1 = arith.constant 0 : i32
    return %c0_i32, %c0_i32_0 : i32, i32
  }
  func.func @transform_4(%arg0: i32) -> (i32, i32) {
    %c0_i32 = arith.constant 0 : i32
    %c0_i32_0 = arith.constant 0 : i32
    %c0_i32_1 = arith.constant 0 : i32
    return %c0_i32, %c0_i32_0 : i32, i32
  }
  func.func @transform_5(%arg0: i32) -> (i32, i32) {
    %c0_i32 = arith.constant 0 : i32
    %c0_i32_0 = arith.constant 0 : i32
    %c0_i32_1 = arith.constant 0 : i32
    return %c0_i32, %c0_i32_0 : i32, i32
  }
  func.func @transform_6(%arg0: i32) -> (i32, i32) {
    %c0_i32 = arith.constant 0 : i32
    %c0_i32_0 = arith.constant 0 : i32
    %c0_i32_1 = arith.constant 0 : i32
    return %c0_i32, %c0_i32_0 : i32, i32
  }
  func.func @transform_7(%arg0: i32) -> (i32, i32, i32) {
    %c0_i32 = arith.constant 0 : i32
    %c0_i32_0 = arith.constant 0 : i32
    %c0_i32_1 = arith.constant 0 : i32
    return %arg0, %c0_i32, %c0_i32_0 : i32, i32, i32
  }
}

</mosaic_0001>

<llo_original>
// kernel: generator_forward_batched.1
$region0: #{generator_forward_batched.1}
  #allocation0 [shape = 'u32[]', space=smem, size = 0x4, offset = 0x4, fixed_abs, tag = 'smem constant byte address 0x4 - core index']
  #allocation1 [shape = 'u32[72,128]{1,0:T(1,128)}', space=vmem, size = 0x9000, scoped, tag = 'internal scratch']
  %s0 = inlined_call_operand.hbm [shape: f32[4,8,64], index: 0, kind: input, shape index: {}]
  %s1 = inlined_call_operand.hbm [shape: f32[2,2816], index: 1, kind: input, shape index: {}]
  %s2 = inlined_call_operand.hbm [shape: bf16[64,128], index: 2, kind: input, shape index: {}]
  %s3 = inlined_call_operand.hbm [shape: bf16[128,256], index: 3, kind: input, shape index: {}]
  %s4 = inlined_call_operand.hbm [shape: bf16[256,512], index: 4, kind: input, shape index: {}]
  %s5 = inlined_call_operand.hbm [shape: bf16[512,1024], index: 5, kind: input, shape index: {}]
  %s6 = inlined_call_operand.hbm [shape: bf16[1024,896], index: 6, kind: input, shape index: {}]
  %s7 = inlined_call_operand.hbm [shape: f32[4,8,896], index: 7, kind: output, shape index: {}]
  %s8 = sld [smem:[#allocation0]]
  $region89: #{generator_forward_batched.1} parent=0
    _
  %s10 = ssub.s32 1, %s8
  %s11 = scalar_select 0, %s10, %s8
  $region1: #{generator_forward_batched.1} parent=0
    #allocation2 [shape = 'u8[8192]{0}', space=vmem, size = 0x2000, scoped, tag = 'input window, operand 0']
    #allocation3 [shape = 's32[2]{0}', space=sflag, size = 0x8, scoped, tag = 'scoped memory for generator_forward_batched.1']
    #allocation4 [shape = 's32[2]{0}', space=sflag, size = 0x8, scoped, tag = 'scoped memory for generator_forward_batched.1']
    #allocation5 [shape = 'u8[22528]{0}', space=vmem, size = 0x5800, scoped, tag = 'input window, operand 1, single buffered']
    #allocation6 [shape = 's32[1]{0}', space=sflag, size = 0x4, scoped, tag = 'scoped memory for generator_forward_batched.1']
    #allocation7 [shape = 'u8[16384]{0}', space=vmem, size = 0x4000, scoped, tag = 'input window, operand 2, single buffered']
    #allocation8 [shape = 'u8[65536]{0}', space=vmem, size = 0x10000, scoped, tag = 'input window, operand 3, single buffered']
    #allocation9 [shape = 's32[1]{0}', space=sflag, size = 0x4, scoped, tag = 'scoped memory for generator_forward_batched.1']
    #allocation10 [shape = 'u8[262144]{0}', space=vmem, size = 0x40000, scoped, tag = 'input window, operand 4, single buffered']
    #allocation11 [shape = 'u8[1048576]{0}', space=vmem, size = 0x100000, scoped, tag = 'input window, operand 5, single buffered']
    #allocation12 [shape = 's32[1]{0}', space=sflag, size = 0x4, scoped, tag = 'scoped memory for generator_forward_batched.1']
    #allocation13 [shape = 'u8[1835008]{0}', space=vmem, size = 0x1c0000, scoped, tag = 'input window, operand 6, single buffered']
    #allocation14 [shape = 'u8[57344]{0}', space=vmem, size = 0xe000, scoped, tag = 'output window, operand 0']
    %12 = vsyncpa [#allocation3], 0
    %s13 = scalar_lea.sflag [#allocation3], 1
    %14 = vsyncpa %s13, 0
    %15 = vsyncpa [#allocation6], 0
    %16 = vsyncpa [#allocation9], 0
    %17 = vsyncpa [#allocation12], 0
    %18 = vsyncpa [#allocation4], 0
    %s19 = scalar_lea.sflag [#allocation4], 1
    %20 = vsyncpa %s19, 0
    loop: start=0, step=1, limit=6
    $region2: #{generator_forward_batched.1} parent=1 // loop_pre_header
      _
    $region3: #{generator_forward_batched.1} parent=1 // loop_header
      %s22 = sphi 0, %s26
      %p23 = scmp.ge.s32.totalorder %s22, 6
      %s32 = sphi 0, %s34
      %s35 = sphi 0, %s32
      %s36 = sphi 0, %s35
      %s52 = sphi 0, %s36
      %s56 = sphi 0, %s56
      %s58 = sphi 0, %s56
      %s59 = sphi 0, %s58
      %s73 = sphi 0, %s59
      %s77 = sphi 0, %s77
      %s79 = sphi 0, %s77
      %s80 = sphi 0, %s79
      %s94 = sphi 0, %s80
      %s98 = sphi 0, %s98
      %s100 = sphi 0, %s98
      %s101 = sphi 0, %s100
      %s115 = sphi 0, %s101
      %s119 = sphi 0, %s119
      %s121 = sphi 0, %s119
      %s122 = sphi 0, %s121
      %s136 = sphi 0, %s122
      %s140 = sphi 0, %s140
      %s142 = sphi 0, %s140
      %s143 = sphi 0, %s142
      %s157 = sphi 0, %s143
      %s161 = sphi 0, %s161
      %s163 = sphi 0, %s161
      %s164 = sphi 0, %s163
      %s178 = sphi 0, %s164
      %s184 = sphi 0, %s186
      %s187 = sphi 0, %s184
      %s188 = sphi 0, %s187
      %s204 = sphi 0, %s188
    $region4: #{generator_forward_batched.1} parent=1 // loop_header_branch
      %25 = sbr.rel (%p23) target = $region8
    $region5: #{generator_forward_batched.1} parent=1 // loop_body
      %s27 = ssub.s32 %s22, 1
      %s28 = ssub.s32 %s22, 2
      %s29 = sadd.s32 %s22, 1
      %s30 = ssub.s32 %s22, %s29
      %p31 = scmp.eq.s32.totalorder %s30, 0
      %s33 = sadd.s32 %s32, 1
      %s34 = scalar_select %p31, %s32, %s33
      %p37 = pneg %p31
      %p38 = scmp.eq.s32.totalorder %s22, 3
      %p39 = por %p37, %p38
      %p40 = scmp.ne.s32.totalorder %s32, %s35
      %p41 = scmp.eq.s32.totalorder %s22, 0
      %p42 = por %p40, %p41
      %p43 = scmp.ne.s32.totalorder %s32, %s35
      %p44 = scmp.eq.s32.totalorder %s27, 3
      %p45 = por %p43, %p44
      %p46 = scmp.ne.s32.totalorder %s35, %s36
      %p47 = scmp.eq.s32.totalorder %s27, 0
      %p48 = por %p46, %p47
      %p49 = scmp.ne.s32.totalorder %s35, %s36
      %p50 = scmp.eq.s32.totalorder %s28, 3
      %p51 = por %p49, %p50
      %p53 = scmp.ne.s32.totalorder %s36, %s52
      %p54 = scmp.eq.s32.totalorder %s28, 0
      %p55 = por %p53, %p54
      %s57 = sadd.s32 %s56, 1
      %p60 = scmp.eq.s32.totalorder %s22, 3
      %p61 = scmp.ne.s32.totalorder %s56, %s58
      %p62 = scmp.eq.s32.totalorder %s22, 0
      %p63 = por %p61, %p62
      %p64 = scmp.ne.s32.totalorder %s56, %s58
      %p65 = scmp.eq.s32.totalorder %s27, 3
      %p66 = por %p64, %p65
      %p67 = scmp.ne.s32.totalorder %s58, %s59
      %p68 = scmp.eq.s32.totalorder %s27, 0
      %p69 = por %p67, %p68
      %p70 = scmp.ne.s32.totalorder %s58, %s59
      %p71 = scmp.eq.s32.totalorder %s28, 3
      %p72 = por %p70, %p71
      %p74 = scmp.ne.s32.totalorder %s59, %s73
      %p75 = scmp.eq.s32.totalorder %s28, 0
      %p76 = por %p74, %p75
      %s78 = sadd.s32 %s77, 1
      %p81 = scmp.eq.s32.totalorder %s22, 3
      %p82 = scmp.ne.s32.totalorder %s77, %s79
      %p83 = scmp.eq.s32.totalorder %s22, 0
      %p84 = por %p82, %p83
      %p85 = scmp.ne.s32.totalorder %s77, %s79
      %p86 = scmp.eq.s32.totalorder %s27, 3
      %p87 = por %p85, %p86
      %p88 = scmp.ne.s32.totalorder %s79, %s80
      %p89 = scmp.eq.s32.totalorder %s27, 0
      %p90 = por %p88, %p89
      %p91 = scmp.ne.s32.totalorder %s79, %s80
      %p92 = scmp.eq.s32.totalorder %s28, 3
      %p93 = por %p91, %p92
      %p95 = scmp.ne.s32.totalorder %s80, %s94
      %p96 = scmp.eq.s32.totalorder %s28, 0
      %p97 = por %p95, %p96
      %s99 = sadd.s32 %s98, 1
      %p102 = scmp.eq.s32.totalorder %s22, 3
      %p103 = scmp.ne.s32.totalorder %s98, %s100
      %p104 = scmp.eq.s32.totalorder %s22, 0
      %p105 = por %p103, %p104
      %p106 = scmp.ne.s32.totalorder %s98, %s100
      %p107 = scmp.eq.s32.totalorder %s27, 3
      %p108 = por %p106, %p107
      %p109 = scmp.ne.s32.totalorder %s100, %s101
      %p110 = scmp.eq.s32.totalorder %s27, 0
      %p111 = por %p109, %p110
      %p112 = scmp.ne.s32.totalorder %s100, %s101
      %p113 = scmp.eq.s32.totalorder %s28, 3
      %p114 = por %p112, %p113
      %p116 = scmp.ne.s32.totalorder %s101, %s115
      %p117 = scmp.eq.s32.totalorder %s28, 0
      %p118 = por %p116, %p117
      %s120 = sadd.s32 %s119, 1
      %p123 = scmp.eq.s32.totalorder %s22, 3
      %p124 = scmp.ne.s32.totalorder %s119, %s121
      %p125 = scmp.eq.s32.totalorder %s22, 0
      %p126 = por %p124, %p125
      %p127 = scmp.ne.s32.totalorder %s119, %s121
      %p128 = scmp.eq.s32.totalorder %s27, 3
      %p129 = por %p127, %p128
      %p130 = scmp.ne.s32.totalorder %s121, %s122
      %p131 = scmp.eq.s32.totalorder %s27, 0
      %p132 = por %p130, %p131
      %p133 = scmp.ne.s32.totalorder %s121, %s122
      %p134 = scmp.eq.s32.totalorder %s28, 3
      %p135 = por %p133, %p134
      %p137 = scmp.ne.s32.totalorder %s122, %s136
      %p138 = scmp.eq.s32.totalorder %s28, 0
      %p139 = por %p137, %p138
      %s141 = sadd.s32 %s140, 1
      %p144 = scmp.eq.s32.totalorder %s22, 3
      %p145 = scmp.ne.s32.totalorder %s140, %s142
      %p146 = scmp.eq.s32.totalorder %s22, 0
      %p147 = por %p145, %p146
      %p148 = scmp.ne.s32.totalorder %s140, %s142
      %p149 = scmp.eq.s32.totalorder %s27, 3
      %p150 = por %p148, %p149
      %p151 = scmp.ne.s32.totalorder %s142, %s143
      %p152 = scmp.eq.s32.totalorder %s27, 0
      %p153 = por %p151, %p152
      %p154 = scmp.ne.s32.totalorder %s142, %s143
      %p155 = scmp.eq.s32.totalorder %s28, 3
      %p156 = por %p154, %p155
      %p158 = scmp.ne.s32.totalorder %s143, %s157
      %p159 = scmp.eq.s32.totalorder %s28, 0
      %p160 = por %p158, %p159
      %s162 = sadd.s32 %s161, 1
      %p165 = scmp.eq.s32.totalorder %s22, 3
      %p166 = scmp.ne.s32.totalorder %s161, %s163
      %p167 = scmp.eq.s32.totalorder %s22, 0
      %p168 = por %p166, %p167
      %p169 = scmp.ne.s32.totalorder %s161, %s163
      %p170 = scmp.eq.s32.totalorder %s27, 3
      %p171 = por %p169, %p170
      %p172 = scmp.ne.s32.totalorder %s163, %s164
      %p173 = scmp.eq.s32.totalorder %s27, 0
      %p174 = por %p172, %p173
      %p175 = scmp.ne.s32.totalorder %s163, %s164
      %p176 = scmp.eq.s32.totalorder %s28, 3
      %p177 = por %p175, %p176
      %p179 = scmp.ne.s32.totalorder %s164, %s178
      %p180 = scmp.eq.s32.totalorder %s28, 0
      %p181 = por %p179, %p180
      %s182 = ssub.s32 %s22, %s29
      %p183 = scmp.eq.s32.totalorder %s182, 0
      %s185 = sadd.s32 %s184, 1
      %s186 = scalar_select %p183, %s184, %s185
      %p189 = pneg %p183
      %p190 = scmp.eq.s32.totalorder %s22, 3
      %p191 = por %p189, %p190
      %p192 = scmp.ne.s32.totalorder %s184, %s187
      %p193 = scmp.eq.s32.totalorder %s22, 0
      %p194 = por %p192, %p193
      %p195 = scmp.ne.s32.totalorder %s184, %s187
      %p196 = scmp.eq.s32.totalorder %s27, 3
      %p197 = por %p195, %p196
      %p198 = scmp.ne.s32.totalorder %s187, %s188
      %p199 = scmp.eq.s32.totalorder %s27, 0
      %p200 = por %p198, %p199
      %p201 = scmp.ne.s32.totalorder %s187, %s188
      %p202 = scmp.eq.s32.totalorder %s28, 3
      %p203 = por %p201, %p202
      %p205 = scmp.ne.s32.totalorder %s188, %s204
      %p206 = scmp.eq.s32.totalorder %s28, 0
      %p207 = por %p205, %p206
      %p208 = scmp.le.s32.totalorder 1, %s22
      %p209 = scmp.lt.s32.totalorder %s22, 5
      %p210 = pnand %p208, %p209
      %p211 = pneg %p210
      // Predicated region
      $region9: #{generator_forward_batched.1} parent=5 // pred_check
        _
      $region10: #{generator_forward_batched.1} parent=5 // pred_check_branch
        %213 = sbr.rel (%p210) target = $region12
      $region11: #{generator_forward_batched.1} parent=5 // pred_region
        %s214 = ssub.s32 %s22, 1
        // Predicated region
        $region13: #{generator_forward_batched.1} parent=11 // pred_check
          %p215 = pneg %p69
        $region14: #{generator_forward_batched.1} parent=11 // pred_check_branch
          %217 = sbr.rel (%p215) target = $region16
        $region15: #{generator_forward_batched.1} parent=11 // pred_region
          %219 = vsyncadd [#allocation6], 0
          %s221 = sshll.u32 %s1, 4
          %s222 = int_to_ptr.hbm [resolvable:$true] %s221
          %s223 = sshll.u32 [#allocation5], 4
          %s224 = int_to_ptr.vmem [resolvable:$true] %s223
          %226 = dma.hbm_to_vmem [thread:$0]  %s222, 704, %s224, [#allocation6]
        $region16: #{generator_forward_batched.1} parent=11 // pred_fallthru
          _
        // Predicated region
        $region17: #{generator_forward_batched.1} parent=11 // pred_check
          %p227 = pneg %p90
        $region18: #{generator_forward_batched.1} parent=11 // pred_check_branch
          %229 = sbr.rel (%p227) target = $region20
        $region19: #{generator_forward_batched.1} parent=11 // pred_region
          %231 = vsyncadd [#allocation6], 0
          %s232 = sshll.u32 %s2, 4
          %s233 = int_to_ptr.hbm [resolvable:$true] %s232
          %s234 = sshll.u32 [#allocation7], 4
          %s235 = int_to_ptr.vmem [resolvable:$true] %s234
          %240 = dma.hbm_to_vmem [thread:$0]  %s233, 512, %s235, [#allocation6], 64, 64, 4
        $region20: #{generator_forward_batched.1} parent=11 // pred_fallthru
          _
        // Predicated region
        $region21: #{generator_forward_batched.1} parent=11 // pred_check
          %p241 = pneg %p111
        $region22: #{generator_forward_batched.1} parent=11 // pred_check_branch
          %243 = sbr.rel (%p241) target = $region24
        $region23: #{generator_forward_batched.1} parent=11 // pred_region
          %245 = vsyncadd [#allocation9], 0
          %s246 = sshll.u32 %s3, 4
          %s247 = int_to_ptr.hbm [resolvable:$true] %s246
          %s248 = sshll.u32 [#allocation8], 4
          %s249 = int_to_ptr.vmem [resolvable:$true] %s248
          %254 = dma.hbm_to_vmem [thread:$0]  %s247, 2048, %s249, [#allocation9], 128, 128, 8
        $region24: #{generator_forward_batched.1} parent=11 // pred_fallthru
          _
        // Predicated region
        $region25: #{generator_forward_batched.1} parent=11 // pred_check
          %p255 = pneg %p132
        $region26: #{generator_forward_batched.1} parent=11 // pred_check_branch
          %257 = sbr.rel (%p255) target = $region28
        $region27: #{generator_forward_batched.1} parent=11 // pred_region
          %259 = vsyncadd [#allocation9], 0
          %s260 = sshll.u32 %s4, 4
          %s261 = int_to_ptr.hbm [resolvable:$true] %s260
          %s262 = sshll.u32 [#allocation10], 4
          %s263 = int_to_ptr.vmem [resolvable:$true] %s262
          %268 = dma.hbm_to_vmem [thread:$0]  %s261, 8192, %s263, [#allocation9], 256, 256, 16
        $region28: #{generator_forward_batched.1} parent=11 // pred_fallthru
          _
        // Predicated region
        $region29: #{generator_forward_batched.1} parent=11 // pred_check
          %p269 = pneg %p153
        $region30: #{generator_forward_batched.1} parent=11 // pred_check_branch
          %271 = sbr.rel (%p269) target = $region32
        $region31: #{generator_forward_batched.1} parent=11 // pred_region
          %273 = vsyncadd [#allocation12], 0
          %s274 = sshll.u32 %s5, 4
          %s275 = int_to_ptr.hbm [resolvable:$true] %s274
          %s276 = sshll.u32 [#allocation11], 4
          %s277 = int_to_ptr.vmem [resolvable:$true] %s276
          %282 = dma.hbm_to_vmem [thread:$0]  %s275, 32768, %s277, [#allocation12], 512, 512, 32
        $region32: #{generator_forward_batched.1} parent=11 // pred_fallthru
          _
        // Predicated region
        $region33: #{generator_forward_batched.1} parent=11 // pred_check
          %p283 = pneg %p174
        $region34: #{generator_forward_batched.1} parent=11 // pred_check_branch
          %285 = sbr.rel (%p283) target = $region36
        $region35: #{generator_forward_batched.1} parent=11 // pred_region
          %287 = vsyncadd [#allocation12], 0
          %s288 = sshll.u32 %s6, 4
          %s289 = int_to_ptr.hbm [resolvable:$true] %s288
          %s290 = sshll.u32 [#allocation13], 4
          %s291 = int_to_ptr.vmem [resolvable:$true] %s290
          %296 = dma.hbm_to_vmem [thread:$0]  %s289, 57344, %s291, [#allocation12], 448, 448, 28
        $region36: #{generator_forward_batched.1} parent=11 // pred_fallthru
          _
      $region12: #{generator_forward_batched.1} parent=5 // pred_fallthru
        _
      %p297 = scmp.lt.s32.totalorder %s22, 4
      // Predicated region
      $region37: #{generator_forward_batched.1} parent=5 // pred_check
        %p298 = pneg %p297
      $region38: #{generator_forward_batched.1} parent=5 // pred_check_branch
        %300 = sbr.rel (%p298) target = $region40
      $region39: #{generator_forward_batched.1} parent=5 // pred_region
        // Predicated region
        $region41: #{generator_forward_batched.1} parent=39 // pred_check
          %p301 = pneg %p42
        $region42: #{generator_forward_batched.1} parent=39 // pred_check_branch
          %303 = sbr.rel (%p301) target = $region44
        $region43: #{generator_forward_batched.1} parent=39 // pred_region
          %s304 = sand.u32 %s32, 1
          %s305 = scalar_lea.sflag [#allocation3], %s304
          %s306 = sand.u32 %s32, 1
          %s307 = smul.addr %s306, 8
          %s308 = scalar_lea.vmem [#allocation2], %s307
          %310 = vsyncadd %s305, 0
          %s311 = smul.addr %s22, 8
          %s312 = scalar_lea.hbm %s0, %s311
          %s314 = sshll.u32 %s312, 4
          %s315 = int_to_ptr.hbm [resolvable:$true] %s314
          %s316 = sshll.u32 %s308, 4
          %s317 = int_to_ptr.vmem [resolvable:$true] %s316
          %319 = dma.hbm_to_vmem [thread:$0]  %s315, 128, %s317, %s305
        $region44: #{generator_forward_batched.1} parent=39 // pred_fallthru
          _
      $region40: #{generator_forward_batched.1} parent=5 // pred_fallthru
        _
      %p320 = scmp.le.s32.totalorder 1, %s22
      %p321 = scmp.lt.s32.totalorder %s22, 5
      %p322 = pnand %p320, %p321
      %p323 = pneg %p322
      // Predicated region
      $region45: #{generator_forward_batched.1} parent=5 // pred_check
        _
      $region46: #{generator_forward_batched.1} parent=5 // pred_check_branch
        %325 = sbr.rel (%p322) target = $region48
      $region47: #{generator_forward_batched.1} parent=5 // pred_region
        %s326 = ssub.s32 %s22, 1
        %s327 = sand.u32 %s35, 1
        %s328 = scalar_lea.sflag [#allocation3], %s327
        %s329 = sand.u32 %s35, 1
        %s330 = smul.addr %s329, 8
        %s331 = scalar_lea.vmem [#allocation2], %s330
        // Predicated region
        $region49: #{generator_forward_batched.1} parent=47 // pred_check
          %p332 = pneg %p48
        $region50: #{generator_forward_batched.1} parent=47 // pred_check_branch
          %334 = sbr.rel (%p332) target = $region52
        $region51: #{generator_forward_batched.1} parent=47 // pred_region
          %336 = dma.done %s328, 128
        $region52: #{generator_forward_batched.1} parent=47 // pred_fallthru
          _
        // Predicated region
        $region53: #{generator_forward_batched.1} parent=47 // pred_check
          %p337 = pneg %p69
        $region54: #{generator_forward_batched.1} parent=47 // pred_check_branch
          %339 = sbr.rel (%p337) target = $region56
        $region55: #{generator_forward_batched.1} parent=47 // pred_region
          %341 = dma.done [#allocation6], 704
        $region56: #{generator_forward_batched.1} parent=47 // pred_fallthru
          _
        // Predicated region
        $region57: #{generator_forward_batched.1} parent=47 // pred_check
          %p342 = pneg %p90
        $region58: #{generator_forward_batched.1} parent=47 // pred_check_branch
          %344 = sbr.rel (%p342) target = $region60
        $region59: #{generator_forward_batched.1} parent=47 // pred_region
          %346 = dma.done [#allocation6], 512
        $region60: #{generator_forward_batched.1} parent=47 // pred_fallthru
          _
        // Predicated region
        $region61: #{generator_forward_batched.1} parent=47 // pred_check
          %p347 = pneg %p111
        $region62: #{generator_forward_batched.1} parent=47 // pred_check_branch
          %349 = sbr.rel (%p347) target = $region64
        $region63: #{generator_forward_batched.1} parent=47 // pred_region
          %351 = dma.done [#allocation9], 2048
        $region64: #{generator_forward_batched.1} parent=47 // pred_fallthru
          _
        // Predicated region
        $region65: #{generator_forward_batched.1} parent=47 // pred_check
          %p352 = pneg %p132
        $region66: #{generator_forward_batched.1} parent=47 // pred_check_branch
          %354 = sbr.rel (%p352) target = $region68
        $region67: #{generator_forward_batched.1} parent=47 // pred_region
          %356 = dma.done [#allocation9], 8192
        $region68: #{generator_forward_batched.1} parent=47 // pred_fallthru
          _
        // Predicated region
        $region69: #{generator_forward_batched.1} parent=47 // pred_check
          %p357 = pneg %p153
        $region70: #{generator_forward_batched.1} parent=47 // pred_check_branch
          %359 = sbr.rel (%p357) target = $region72
        $region71: #{generator_forward_batched.1} parent=47 // pred_region
          %361 = dma.done [#allocation12], 32768
        $region72: #{generator_forward_batched.1} parent=47 // pred_fallthru
          _
        // Predicated region
        $region73: #{generator_forward_batched.1} parent=47 // pred_check
          %p362 = pneg %p174
        $region74: #{generator_forward_batched.1} parent=47 // pred_check_branch
          %364 = sbr.rel (%p362) target = $region76
        $region75: #{generator_forward_batched.1} parent=47 // pred_region
          %366 = dma.done [#allocation12], 57344
        $region76: #{generator_forward_batched.1} parent=47 // pred_fallthru
          _
        %s367 = sand.u32 %s35, 1
        %s368 = scalar_lea.sflag [#allocation3], %s367
        %s369 = sand.u32 %s35, 1
        %s370 = smul.addr %s369, 8
        %s371 = scalar_lea.vmem [#allocation2], %s370
        %p372 = pneg %p48
        %p373 = pneg %p45
        %p374 = pneg %p69
        %p375 = pneg %p66
        %p376 = pneg %p90
        %p377 = pneg %p87
        %p378 = pneg %p111
        %p379 = pneg %p108
        %p380 = pneg %p132
        %p381 = pneg %p129
        %p382 = pneg %p153
        %p383 = pneg %p150
        %p384 = pneg %p174
        %p385 = pneg %p171
        %p386 = pneg %p200
        %p387 = pneg %p197
        %s388 = sand.u32 %s187, 1
        %s389 = scalar_lea.sflag [#allocation4], %s388
        %s390 = sand.u32 %s187, 1
        %s391 = smul.addr %s390, 56
        %s392 = scalar_lea.vmem [#allocation14], %s391
        %v394 = vld [vmem:[%s331] sm:$0xff]
        %v395 = vpack.c.bf16 %v394, %v394
        %v396 = vld [vmem:[#allocation7] sm:$0xf]
        %v397 = vld [vmem:[#allocation7 + $0x4] sm:$0xf]
        %v398 = vld [vmem:[#allocation7 + $0x8] sm:$0xf]
        %v399 = vld [vmem:[#allocation7 + $0xc] sm:$0xf]
        %v400 = vld [vmem:[#allocation7 + $0x10] sm:$0xf]
        %v401 = vld [vmem:[#allocation7 + $0x14] sm:$0xf]
        %v402 = vld [vmem:[#allocation7 + $0x18] sm:$0xf]
        %v403 = vld [vmem:[#allocation7 + $0x1c] sm:$0xf]
        %v412 = vunpack.c.l.b16 %v396
        %v413 = vunpack.c.l.b16 %v397
        %v414 = vunpack.c.l.b16 %v398
        %v415 = vunpack.c.l.b16 %v399
        %v416 = vunpack.c.l.b16 %v400
        %v417 = vunpack.c.l.b16 %v401
        %v418 = vunpack.c.l.b16 %v402
        %v419 = vunpack.c.l.b16 %v403
        %v420 = vpack.c.b16 %v413, %v412
        %v421 = vpack.c.b16 %v415, %v414
        %v422 = vpack.c.b16 %v417, %v416
        %v423 = vpack.c.b16 %v419, %v418
        %vm428 = vcmask 523264
        %v430 = vsel %vm428, %v395, 0
        %432 = vmatpush.bf16.msra.mxu0 0
        %433 = vmatpush.bf16.msra.mxu0 0
        %434 = vmatpush.bf16.msra.mxu0 0
        %435 = vmatpush.bf16.msra.mxu0 0
        %436 = vmatpush.bf16.msra.mxu0 %v423
        %437 = vmatpush.bf16.msra.mxu0 %v422
        %438 = vmatpush.bf16.msra.mxu0 %v421
        %439 = vmatpush.bf16.msra.mxu0 %v420
        %440 = vmatmul.bf16.gmra.mxu0 %v430
        %v441 = vpop.f32.mrf.mxu0
        %v442 = vadd.f32 0.0, %v441
        %v443 = vpop.f32.mrf.mxu0
        %444 = vdwg.mxu0
        %v445 = vld [vmem:[#allocation5] sm:$0x1]
        %v446 = vld [vmem:[#allocation5 + $0x1] sm:$0x1]
        %v447 = vrot.slane %v442, 4
        %v448 = vadd.f32 %v442, %v447
        %v449 = vrot.slane %v448, 2
        %v450 = vadd.f32 %v448, %v449
        %v451 = vrot.slane %v450, 1
        %v452 = vadd.f32 %v450, %v451
        %v453 = vmul.f32 %v442, %v442
        %v454 = vrot.slane %v453, 4
        %v455 = vadd.f32 %v453, %v454
        %v456 = vrot.slane %v455, 2
        %v457 = vadd.f32 %v455, %v456
        %v458 = vrot.slane %v457, 1
        %v459 = vadd.f32 %v457, %v458
        %v460 = vmul.f32 %v452, 0.125
        %v461 = vmul.f32 %v459, 0.125
        %v462 = vmul.f32 %v460, %v460
        %v463 = vsub.f32 %v461, %v462
        %v464 = vmax.f32 %v463, 0.0
        %v465 = vadd.f32 %v464, 1e-05
        %v466 = vrsqrt.pop %v465
        %v467 = vmul.f32 %v466, %v465
        %v468 = vmul.f32 %v467, %v466
        %v469 = vmul.f32 0.5, %v468
        %v470 = vsub.f32 1.5, %v469
        %v471 = vmul.f32 %v466, %v470
        %vm472 = vweird.f32 %v465
        %vm473 = vweird.f32 %v466
        %vm474 = vmor %vm472, %vm473
        %v475 = vsel %vm474, %v466, %v471
        %v476 = vmul.f32 %v445, %v475
        %v477 = vmul.f32 %v460, %v476
        %v478 = vsub.f32 %v446, %v477
        %v479 = vperm.slane %v476, 0
        %v480 = vmul.f32 %v442, %v479
        %v481 = vperm.slane %v478, 0
        %v482 = vadd.f32 %v480, %v481
        %v483 = vmax.f32 %v482, 0.0
        %v484 = vpack.c.bf16 %v483, %v483
        %v485 = vld [vmem:[#allocation8] sm:$0xff]
        %v486 = vld [vmem:[#allocation8 + $0x8] sm:$0xff]
        %v487 = vld [vmem:[#allocation8 + $0x10] sm:$0xff]
        %v488 = vld [vmem:[#allocation8 + $0x18] sm:$0xff]
        %v489 = vld [vmem:[#allocation8 + $0x20] sm:$0xff]
        %v490 = vld [vmem:[#allocation8 + $0x28] sm:$0xff]
        %v491 = vld [vmem:[#allocation8 + $0x30] sm:$0xff]
        %v492 = vld [vmem:[#allocation8 + $0x38] sm:$0xff]
        %v493 = vld [vmem:[#allocation8 + $0x40] sm:$0xff]
        %v494 = vld [vmem:[#allocation8 + $0x48] sm:$0xff]
        %v495 = vld [vmem:[#allocation8 + $0x50] sm:$0xff]
        %v496 = vld [vmem:[#allocation8 + $0x58] sm:$0xff]
        %v497 = vld [vmem:[#allocation8 + $0x60] sm:$0xff]
        %v498 = vld [vmem:[#allocation8 + $0x68] sm:$0xff]
        %v499 = vld [vmem:[#allocation8 + $0x70] sm:$0xff]
        %v500 = vld [vmem:[#allocation8 + $0x78] sm:$0xff]
        %v517 = vunpack.c.l.b16 %v485
        %v518 = vunpack.c.h.b16 %v485
        %v519 = vunpack.c.l.b16 %v486
        %v520 = vunpack.c.h.b16 %v486
        %v521 = vunpack.c.l.b16 %v487
        %v522 = vunpack.c.h.b16 %v487
        %v523 = vunpack.c.l.b16 %v488
        %v524 = vunpack.c.h.b16 %v488
        %v525 = vunpack.c.l.b16 %v489
        %v526 = vunpack.c.h.b16 %v489
        %v527 = vunpack.c.l.b16 %v490
        %v528 = vunpack.c.h.b16 %v490
        %v529 = vunpack.c.l.b16 %v491
        %v530 = vunpack.c.h.b16 %v491
        %v531 = vunpack.c.l.b16 %v492
        %v532 = vunpack.c.h.b16 %v492
        %v533 = vunpack.c.l.b16 %v493
        %v534 = vunpack.c.h.b16 %v493
        %v535 = vunpack.c.l.b16 %v494
        %v536 = vunpack.c.h.b16 %v494
        %v537 = vunpack.c.l.b16 %v495
        %v538 = vunpack.c.h.b16 %v495
        %v539 = vunpack.c.l.b16 %v496
        %v540 = vunpack.c.h.b16 %v496
        %v541 = vunpack.c.l.b16 %v497
        %v542 = vunpack.c.h.b16 %v497
        %v543 = vunpack.c.l.b16 %v498
        %v544 = vunpack.c.h.b16 %v498
        %v545 = vunpack.c.l.b16 %v499
        %v546 = vunpack.c.h.b16 %v499
        %v547 = vunpack.c.l.b16 %v500
        %v548 = vunpack.c.h.b16 %v500
        %v549 = vpack.c.b16 %v519, %v517
        %v550 = vpack.c.b16 %v520, %v518
        %v551 = vpack.c.b16 %v523, %v521
        %v552 = vpack.c.b16 %v524, %v522
        %v553 = vpack.c.b16 %v527, %v525
        %v554 = vpack.c.b16 %v528, %v526
        %v555 = vpack.c.b16 %v531, %v529
        %v556 = vpack.c.b16 %v532, %v530
        %v557 = vpack.c.b16 %v535, %v533
        %v558 = vpack.c.b16 %v536, %v534
        %v559 = vpack.c.b16 %v539, %v537
        %v560 = vpack.c.b16 %v540, %v538
        %v561 = vpack.c.b16 %v543, %v541
        %v562 = vpack.c.b16 %v544, %v542
        %v563 = vpack.c.b16 %v547, %v545
        %v564 = vpack.c.b16 %v548, %v546
        %581 = vmatpush.bf16.msra.mxu0 %v563
        %582 = vmatpush.bf16.msra.mxu0 %v561
        %583 = vmatpush.bf16.msra.mxu0 %v559
        %584 = vmatpush.bf16.msra.mxu0 %v557
        %585 = vmatpush.bf16.msra.mxu0 %v555
        %586 = vmatpush.bf16.msra.mxu0 %v553
        %587 = vmatpush.bf16.msra.mxu0 %v551
        %588 = vmatpush.bf16.msra.mxu0 %v549
        %589 = vmatmul.bf16.gmra.mxu0 %v484
        %v590 = vpop.f32.mrf.mxu0
        %v591 = vadd.f32 0.0, %v590
        %v592 = vpop.f32.mrf.mxu0
        %593 = vdwg.mxu0
        %594 = vmatpush.bf16.msra.mxu0 %v564
        %595 = vmatpush.bf16.msra.mxu0 %v562
        %596 = vmatpush.bf16.msra.mxu0 %v560
        %597 = vmatpush.bf16.msra.mxu0 %v558
        %598 = vmatpush.bf16.msra.mxu0 %v556
        %599 = vmatpush.bf16.msra.mxu0 %v554
        %600 = vmatpush.bf16.msra.mxu0 %v552
        %601 = vmatpush.bf16.msra.mxu0 %v550
        %602 = vmatmul.bf16.gmra.mxu0 %v484
        %v603 = vpop.f32.mrf.mxu0
        %v604 = vadd.f32 0.0, %v603
        %v605 = vpop.f32.mrf.mxu0
        %606 = vdwg.mxu0
        %s607 = scalar_lea.vmem [#allocation5], 2
        %v608 = vld [vmem:[%s607] ss:$2 sm:$0x3]
        %s609 = scalar_lea.vmem [#allocation5], 3
        %v610 = vld [vmem:[%s609] ss:$2 sm:$0x3]
        %v611 = vrot.slane %v591, 4
        %v612 = vadd.f32 %v591, %v611
        %v613 = vrot.slane %v612, 2
        %v614 = vadd.f32 %v612, %v613
        %v615 = vrot.slane %v614, 1
        %v616 = vadd.f32 %v614, %v615
        %v617 = vrot.slane %v604, 4
        %v618 = vadd.f32 %v604, %v617
        %v619 = vrot.slane %v618, 2
        %v620 = vadd.f32 %v618, %v619
        %v621 = vrot.slane %v620, 1
        %v622 = vadd.f32 %v620, %v621
        %v623 = vmul.f32 %v591, %v591
        %v624 = vmul.f32 %v604, %v604
        %v625 = vrot.slane %v623, 4
        %v626 = vadd.f32 %v623, %v625
        %v627 = vrot.slane %v626, 2
        %v628 = vadd.f32 %v626, %v627
        %v629 = vrot.slane %v628, 1
        %v630 = vadd.f32 %v628, %v629
        %v631 = vrot.slane %v624, 4
        %v632 = vadd.f32 %v624, %v631
        %v633 = vrot.slane %v632, 2
        %v634 = vadd.f32 %v632, %v633
        %v635 = vrot.slane %v634, 1
        %v636 = vadd.f32 %v634, %v635
        %v637 = vmul.f32 %v616, 0.125
        %v638 = vmul.f32 %v622, 0.125
        %v639 = vmul.f32 %v630, 0.125
        %v640 = vmul.f32 %v636, 0.125
        %v641 = vmul.f32 %v637, %v637
        %v642 = vmul.f32 %v638, %v638
        %v643 = vsub.f32 %v639, %v641
        %v644 = vsub.f32 %v640, %v642
        %v645 = vmax.f32 %v643, 0.0
        %v646 = vmax.f32 %v644, 0.0
        %v647 = vadd.f32 %v645, 1e-05
        %v648 = vadd.f32 %v646, 1e-05
        %v649 = vrsqrt.pop %v647
        %v650 = vmul.f32 %v649, %v647
        %v651 = vmul.f32 %v650, %v649
        %v652 = vmul.f32 0.5, %v651
        %v653 = vsub.f32 1.5, %v652
        %v654 = vmul.f32 %v649, %v653
        %vm655 = vweird.f32 %v647
        %vm656 = vweird.f32 %v649
        %vm657 = vmor %vm655, %vm656
        %v658 = vsel %vm657, %v649, %v654
        %v659 = vrsqrt.pop %v648
        %v660 = vmul.f32 %v659, %v648
        %v661 = vmul.f32 %v660, %v659
        %v662 = vmul.f32 0.5, %v661
        %v663 = vsub.f32 1.5, %v662
        %v664 = vmul.f32 %v659, %v663
        %vm665 = vweird.f32 %v648
        %vm666 = vweird.f32 %v659
        %vm667 = vmor %vm665, %vm666
        %v668 = vsel %vm667, %v659, %v664
        %v671 = vrot.slane %v668, 7
        %vm672 = vcmask 1040384
        %v673 = vsel %vm672, %v658, %v671
        %v675 = vmul.f32 %v608, %v673
        %v677 = vperm.slane %v675, 0
        %v678 = vperm.slane %v675, 1
        %v681 = vmul.f32 %v637, %v677
        %v682 = vmul.f32 %v638, %v678
        %v685 = vrot.slane %v682, 7
        %v686 = vsel %vm672, %v681, %v685
        %v688 = vsub.f32 %v610, %v686
        %v689 = vmul.f32 %v591, %v677
        %v690 = vmul.f32 %v604, %v678
        %v692 = vperm.slane %v688, 0
        %v693 = vperm.slane %v688, 1
        %v696 = vadd.f32 %v689, %v692
        %v697 = vadd.f32 %v690, %v693
        %v698 = vmax.f32 %v696, 0.0
        %v699 = vmax.f32 %v697, 0.0
        %v700 = vpack.c.bf16 %v698, %v698
        %v701 = vpack.c.bf16 %v699, %v699
        %v702 = vld [vmem:[#allocation10] sm:$0xff]
        %v703 = vld [vmem:[#allocation10 + $0x8] sm:$0xff]
        %v704 = vld [vmem:[#allocation10 + $0x10] sm:$0xff]
        %v705 = vld [vmem:[#allocation10 + $0x18] sm:$0xff]
        %v706 = vld [vmem:[#allocation10 + $0x20] sm:$0xff]
        %v707 = vld [vmem:[#allocation10 + $0x28] sm:$0xff]
        %v708 = vld [vmem:[#allocation10 + $0x30] sm:$0xff]
        %v709 = vld [vmem:[#allocation10 + $0x38] sm:$0xff]
        %v710 = vld [vmem:[#allocation10 + $0x40] sm:$0xff]
        %v711 = vld [vmem:[#allocation10 + $0x48] sm:$0xff]
        %v712 = vld [vmem:[#allocation10 + $0x50] sm:$0xff]
        %v713 = vld [vmem:[#allocation10 + $0x58] sm:$0xff]
        %v714 = vld [vmem:[#allocation10 + $0x60] sm:$0xff]
        %v715 = vld [vmem:[#allocation10 + $0x68] sm:$0xff]
        %v716 = vld [vmem:[#allocation10 + $0x70] sm:$0xff]
        %v717 = vld [vmem:[#allocation10 + $0x78] sm:$0xff]
        %v718 = vld [vmem:[#allocation10 + $0x80] sm:$0xff]
        %v719 = vld [vmem:[#allocation10 + $0x88] sm:$0xff]
        %v720 = vld [vmem:[#allocation10 + $0x90] sm:$0xff]
        %v721 = vld [vmem:[#allocation10 + $0x98] sm:$0xff]
        %v722 = vld [vmem:[#allocation10 + $0xa0] sm:$0xff]
        %v723 = vld [vmem:[#allocation10 + $0xa8] sm:$0xff]
        %v724 = vld [vmem:[#allocation10 + $0xb0] sm:$0xff]
        %v725 = vld [vmem:[#allocation10 + $0xb8] sm:$0xff]
        %v726 = vld [vmem:[#allocation10 + $0xc0] sm:$0xff]
        %v727 = vld [vmem:[#allocation10 + $0xc8] sm:$0xff]
        %v728 = vld [vmem:[#allocation10 + $0xd0] sm:$0xff]
        %v729 = vld [vmem:[#allocation10 + $0xd8] sm:$0xff]
        %v730 = vld [vmem:[#allocation10 + $0xe0] sm:$0xff]
        %v731 = vld [vmem:[#allocation10 + $0xe8] sm:$0xff]
        %v732 = vld [vmem:[#allocation10 + $0xf0] sm:$0xff]
        %v733 = vld [vmem:[#allocation10 + $0xf8] sm:$0xff]
        %v734 = vld [vmem:[#allocation10 + $0x100] sm:$0xff]
        %v735 = vld [vmem:[#allocation10 + $0x108] sm:$0xff]
        %v736 = vld [vmem:[#allocation10 + $0x110] sm:$0xff]
        %v737 = vld [vmem:[#allocation10 + $0x118] sm:$0xff]
        %v738 = vld [vmem:[#allocation10 + $0x120] sm:$0xff]
        %v739 = vld [vmem:[#allocation10 + $0x128] sm:$0xff]
        %v740 = vld [vmem:[#allocation10 + $0x130] sm:$0xff]
        %v741 = vld [vmem:[#allocation10 + $0x138] sm:$0xff]
        %v742 = vld [vmem:[#allocation10 + $0x140] sm:$0xff]
        %v743 = vld [vmem:[#allocation10 + $0x148] sm:$0xff]
        %v744 = vld [vmem:[#allocation10 + $0x150] sm:$0xff]
        %v745 = vld [vmem:[#allocation10 + $0x158] sm:$0xff]
        %v746 = vld [vmem:[#allocation10 + $0x160] sm:$0xff]
        %v747 = vld [vmem:[#allocation10 + $0x168] sm:$0xff]
        %v748 = vld [vmem:[#allocation10 + $0x170] sm:$0xff]
        %v749 = vld [vmem:[#allocation10 + $0x178] sm:$0xff]
        %v750 = vld [vmem:[#allocation10 + $0x180] sm:$0xff]
        %v751 = vld [vmem:[#allocation10 + $0x188] sm:$0xff]
        %v752 = vld [vmem:[#allocation10 + $0x190] sm:$0xff]
        %v753 = vld [vmem:[#allocation10 + $0x198] sm:$0xff]
        %v754 = vld [vmem:[#allocation10 + $0x1a0] sm:$0xff]
        %v755 = vld [vmem:[#allocation10 + $0x1a8] sm:$0xff]
        %v756 = vld [vmem:[#allocation10 + $0x1b0] sm:$0xff]
        %v757 = vld [vmem:[#allocation10 + $0x1b8] sm:$0xff]
        %v758 = vld [vmem:[#allocation10 + $0x1c0] sm:$0xff]
        %v759 = vld [vmem:[#allocation10 + $0x1c8] sm:$0xff]
        %v760 = vld [vmem:[#allocation10 + $0x1d0] sm:$0xff]
        %v761 = vld [vmem:[#allocation10 + $0x1d8] sm:$0xff]
        %v762 = vld [vmem:[#allocation10 + $0x1e0] sm:$0xff]
        %v763 = vld [vmem:[#allocation10 + $0x1e8] sm:$0xff]
        %v764 = vld [vmem:[#allocation10 + $0x1f0] sm:$0xff]
        %v765 = vld [vmem:[#allocation10 + $0x1f8] sm:$0xff]
        %v830 = vunpack.c.l.b16 %v702
        %v831 = vunpack.c.h.b16 %v702
        %v832 = vunpack.c.l.b16 %v703
        %v833 = vunpack.c.h.b16 %v703
        %v834 = vunpack.c.l.b16 %v704
        %v835 = vunpack.c.h.b16 %v704
        %v836 = vunpack.c.l.b16 %v705
        %v837 = vunpack.c.h.b16 %v705
        %v838 = vunpack.c.l.b16 %v706
        %v839 = vunpack.c.h.b16 %v706
        %v840 = vunpack.c.l.b16 %v707
        %v841 = vunpack.c.h.b16 %v707
        %v842 = vunpack.c.l.b16 %v708
        %v843 = vunpack.c.h.b16 %v708
        %v844 = vunpack.c.l.b16 %v709
        %v845 = vunpack.c.h.b16 %v709
        %v846 = vunpack.c.l.b16 %v710
        %v847 = vunpack.c.h.b16 %v710
        %v848 = vunpack.c.l.b16 %v711
        %v849 = vunpack.c.h.b16 %v711
        %v850 = vunpack.c.l.b16 %v712
        %v851 = vunpack.c.h.b16 %v712
        %v852 = vunpack.c.l.b16 %v713
        %v853 = vunpack.c.h.b16 %v713
        %v854 = vunpack.c.l.b16 %v714
        %v855 = vunpack.c.h.b16 %v714
        %v856 = vunpack.c.l.b16 %v715
        %v857 = vunpack.c.h.b16 %v715
        %v858 = vunpack.c.l.b16 %v716
        %v859 = vunpack.c.h.b16 %v716
        %v860 = vunpack.c.l.b16 %v717
        %v861 = vunpack.c.h.b16 %v717
        %v862 = vunpack.c.l.b16 %v718
        %v863 = vunpack.c.h.b16 %v718
        %v864 = vunpack.c.l.b16 %v719
        %v865 = vunpack.c.h.b16 %v719
        %v866 = vunpack.c.l.b16 %v720
        %v867 = vunpack.c.h.b16 %v720
        %v868 = vunpack.c.l.b16 %v721
        %v869 = vunpack.c.h.b16 %v721
        %v870 = vunpack.c.l.b16 %v722
        %v871 = vunpack.c.h.b16 %v722
        %v872 = vunpack.c.l.b16 %v723
        %v873 = vunpack.c.h.b16 %v723
        %v874 = vunpack.c.l.b16 %v724
        %v875 = vunpack.c.h.b16 %v724
        %v876 = vunpack.c.l.b16 %v725
        %v877 = vunpack.c.h.b16 %v725
        %v878 = vunpack.c.l.b16 %v726
        %v879 = vunpack.c.h.b16 %v726
        %v880 = vunpack.c.l.b16 %v727
        %v881 = vunpack.c.h.b16 %v727
        %v882 = vunpack.c.l.b16 %v728
        %v883 = vunpack.c.h.b16 %v728
        %v884 = vunpack.c.l.b16 %v729
        %v885 = vunpack.c.h.b16 %v729
        %v886 = vunpack.c.l.b16 %v730
        %v887 = vunpack.c.h.b16 %v730
        %v888 = vunpack.c.l.b16 %v731
        %v889 = vunpack.c.h.b16 %v731
        %v890 = vunpack.c.l.b16 %v732
        %v891 = vunpack.c.h.b16 %v732
        %v892 = vunpack.c.l.b16 %v733
        %v893 = vunpack.c.h.b16 %v733
        %v894 = vunpack.c.l.b16 %v734
        %v895 = vunpack.c.h.b16 %v734
        %v896 = vunpack.c.l.b16 %v735
        %v897 = vunpack.c.h.b16 %v735
        %v898 = vunpack.c.l.b16 %v736
        %v899 = vunpack.c.h.b16 %v736
        %v900 = vunpack.c.l.b16 %v737
        %v901 = vunpack.c.h.b16 %v737
        %v902 = vunpack.c.l.b16 %v738
        %v903 = vunpack.c.h.b16 %v738
        %v904 = vunpack.c.l.b16 %v739
        %v905 = vunpack.c.h.b16 %v739
        %v906 = vunpack.c.l.b16 %v740
        %v907 = vunpack.c.h.b16 %v740
        %v908 = vunpack.c.l.b16 %v741
        %v909 = vunpack.c.h.b16 %v741
        %v910 = vunpack.c.l.b16 %v742
        %v911 = vunpack.c.h.b16 %v742
        %v912 = vunpack.c.l.b16 %v743
        %v913 = vunpack.c.h.b16 %v743
        %v914 = vunpack.c.l.b16 %v744
        %v915 = vunpack.c.h.b16 %v744
        %v916 = vunpack.c.l.b16 %v745
        %v917 = vunpack.c.h.b16 %v745
        %v918 = vunpack.c.l.b16 %v746
        %v919 = vunpack.c.h.b16 %v746
        %v920 = vunpack.c.l.b16 %v747
        %v921 = vunpack.c.h.b16 %v747
        %v922 = vunpack.c.l.b16 %v748
        %v923 = vunpack.c.h.b16 %v748
        %v924 = vunpack.c.l.b16 %v749
        %v925 = vunpack.c.h.b16 %v749
        %v926 = vunpack.c.l.b16 %v750
        %v927 = vunpack.c.h.b16 %v750
        %v928 = vunpack.c.l.b16 %v751
        %v929 = vunpack.c.h.b16 %v751
        %v930 = vunpack.c.l.b16 %v752
        %v931 = vunpack.c.h.b16 %v752
        %v932 = vunpack.c.l.b16 %v753
        %v933 = vunpack.c.h.b16 %v753
        %v934 = vunpack.c.l.b16 %v754
        %v935 = vunpack.c.h.b16 %v754
        %v936 = vunpack.c.l.b16 %v755
        %v937 = vunpack.c.h.b16 %v755
        %v938 = vunpack.c.l.b16 %v756
        %v939 = vunpack.c.h.b16 %v756
        %v940 = vunpack.c.l.b16 %v757
        %v941 = vunpack.c.h.b16 %v757
        %v942 = vunpack.c.l.b16 %v758
        %v943 = vunpack.c.h.b16 %v758
        %v944 = vunpack.c.l.b16 %v759
        %v945 = vunpack.c.h.b16 %v759
        %v946 = vunpack.c.l.b16 %v760
        %v947 = vunpack.c.h.b16 %v760
        %v948 = vunpack.c.l.b16 %v761
        %v949 = vunpack.c.h.b16 %v761
        %v950 = vunpack.c.l.b16 %v762
        %v951 = vunpack.c.h.b16 %v762
        %v952 = vunpack.c.l.b16 %v763
        %v953 = vunpack.c.h.b16 %v763
        %v954 = vunpack.c.l.b16 %v764
        %v955 = vunpack.c.h.b16 %v764
        %v956 = vunpack.c.l.b16 %v765
        %v957 = vunpack.c.h.b16 %v765
        %v958 = vpack.c.b16 %v834, %v830
        %v959 = vpack.c.b16 %v835, %v831
        %v960 = vpack.c.b16 %v836, %v832
        %v961 = vpack.c.b16 %v837, %v833
        %v962 = vpack.c.b16 %v842, %v838
        %v963 = vpack.c.b16 %v843, %v839
        %v964 = vpack.c.b16 %v844, %v840
        %v965 = vpack.c.b16 %v845, %v841
        %v966 = vpack.c.b16 %v850, %v846
        %v967 = vpack.c.b16 %v851, %v847
        %v968 = vpack.c.b16 %v852, %v848
        %v969 = vpack.c.b16 %v853, %v849
        %v970 = vpack.c.b16 %v858, %v854
        %v971 = vpack.c.b16 %v859, %v855
        %v972 = vpack.c.b16 %v860, %v856
        %v973 = vpack.c.b16 %v861, %v857
        %v974 = vpack.c.b16 %v866, %v862
        %v975 = vpack.c.b16 %v867, %v863
        %v976 = vpack.c.b16 %v868, %v864
        %v977 = vpack.c.b16 %v869, %v865
        %v978 = vpack.c.b16 %v874, %v870
        %v979 = vpack.c.b16 %v875, %v871
        %v980 = vpack.c.b16 %v876, %v872
        %v981 = vpack.c.b16 %v877, %v873
        %v982 = vpack.c.b16 %v882, %v878
        %v983 = vpack.c.b16 %v883, %v879
        %v984 = vpack.c.b16 %v884, %v880
        %v985 = vpack.c.b16 %v885, %v881
        %v986 = vpack.c.b16 %v890, %v886
        %v987 = vpack.c.b16 %v891, %v887
        %v988 = vpack.c.b16 %v892, %v888
        %v989 = vpack.c.b16 %v893, %v889
        %v990 = vpack.c.b16 %v898, %v894
        %v991 = vpack.c.b16 %v899, %v895
        %v992 = vpack.c.b16 %v900, %v896
        %v993 = vpack.c.b16 %v901, %v897
        %v994 = vpack.c.b16 %v906, %v902
        %v995 = vpack.c.b16 %v907, %v903
        %v996 = vpack.c.b16 %v908, %v904
        %v997 = vpack.c.b16 %v909, %v905
        %v998 = vpack.c.b16 %v914, %v910
        %v999 = vpack.c.b16 %v915, %v911
        %v1000 = vpack.c.b16 %v916, %v912
        %v1001 = vpack.c.b16 %v917, %v913
        %v1002 = vpack.c.b16 %v922, %v918
        %v1003 = vpack.c.b16 %v923, %v919
        %v1004 = vpack.c.b16 %v924, %v920
        %v1005 = vpack.c.b16 %v925, %v921
        %v1006 = vpack.c.b16 %v930, %v926
        %v1007 = vpack.c.b16 %v931, %v927
        %v1008 = vpack.c.b16 %v932, %v928
        %v1009 = vpack.c.b16 %v933, %v929
        %v1010 = vpack.c.b16 %v938, %v934
        %v1011 = vpack.c.b16 %v939, %v935
        %v1012 = vpack.c.b16 %v940, %v936
        %v1013 = vpack.c.b16 %v941, %v937
        %v1014 = vpack.c.b16 %v946, %v942
        %v1015 = vpack.c.b16 %v947, %v943
        %v1016 = vpack.c.b16 %v948, %v944
        %v1017 = vpack.c.b16 %v949, %v945
        %v1018 = vpack.c.b16 %v954, %v950
        %v1019 = vpack.c.b16 %v955, %v951
        %v1020 = vpack.c.b16 %v956, %v952
        %v1021 = vpack.c.b16 %v957, %v953
        %1086 = vmatpush.bf16.msra.mxu0 %v986
        %1087 = vmatpush.bf16.msra.mxu0 %v982
        %1088 = vmatpush.bf16.msra.mxu0 %v978
        %1089 = vmatpush.bf16.msra.mxu0 %v974
        %1090 = vmatpush.bf16.msra.mxu0 %v970
        %1091 = vmatpush.bf16.msra.mxu0 %v966
        %1092 = vmatpush.bf16.msra.mxu0 %v962
        %1093 = vmatpush.bf16.msra.mxu0 %v958
        %1094 = vmatmul.bf16.gmra.mxu0 %v700
        %v1095 = vpop.f32.mrf.mxu0
        %v1096 = vadd.f32 0.0, %v1095
        %v1097 = vpop.f32.mrf.mxu0
        %1098 = vdwg.mxu0
        %1099 = vmatpush.bf16.msra.mxu0 %v1018
        %1100 = vmatpush.bf16.msra.mxu0 %v1014
        %1101 = vmatpush.bf16.msra.mxu0 %v1010
        %1102 = vmatpush.bf16.msra.mxu0 %v1006
        %1103 = vmatpush.bf16.msra.mxu0 %v1002
        %1104 = vmatpush.bf16.msra.mxu0 %v998
        %1105 = vmatpush.bf16.msra.mxu0 %v994
        %1106 = vmatpush.bf16.msra.mxu0 %v990
        %1107 = vmatmul.bf16.gmra.mxu0 %v701
        %v1108 = vpop.f32.mrf.mxu0
        %v1109 = vadd.f32 %v1096, %v1108
        %v1110 = vpop.f32.mrf.mxu0
        %1111 = vdwg.mxu0
        %1112 = vmatpush.bf16.msra.mxu0 %v987
        %1113 = vmatpush.bf16.msra.mxu0 %v983
        %1114 = vmatpush.bf16.msra.mxu0 %v979
        %1115 = vmatpush.bf16.msra.mxu0 %v975
        %1116 = vmatpush.bf16.msra.mxu0 %v971
        %1117 = vmatpush.bf16.msra.mxu0 %v967
        %1118 = vmatpush.bf16.msra.mxu0 %v963
        %1119 = vmatpush.bf16.msra.mxu0 %v959
        %1120 = vmatmul.bf16.gmra.mxu0 %v700
        %v1121 = vpop.f32.mrf.mxu0
        %v1122 = vadd.f32 0.0, %v1121
        %v1123 = vpop.f32.mrf.mxu0
        %1124 = vdwg.mxu0
        %1125 = vmatpush.bf16.msra.mxu0 %v1019
        %1126 = vmatpush.bf16.msra.mxu0 %v1015
        %1127 = vmatpush.bf16.msra.mxu0 %v1011
        %1128 = vmatpush.bf16.msra.mxu0 %v1007
        %1129 = vmatpush.bf16.msra.mxu0 %v1003
        %1130 = vmatpush.bf16.msra.mxu0 %v999
        %1131 = vmatpush.bf16.msra.mxu0 %v995
        %1132 = vmatpush.bf16.msra.mxu0 %v991
        %1133 = vmatmul.bf16.gmra.mxu0 %v701
        %v1134 = vpop.f32.mrf.mxu0
        %v1135 = vadd.f32 %v1122, %v1134
        %v1136 = vpop.f32.mrf.mxu0
        %1137 = vdwg.mxu0
        %1138 = vmatpush.bf16.msra.mxu0 %v988
        %1139 = vmatpush.bf16.msra.mxu0 %v984
        %1140 = vmatpush.bf16.msra.mxu0 %v980
        %1141 = vmatpush.bf16.msra.mxu0 %v976
        %1142 = vmatpush.bf16.msra.mxu0 %v972
        %1143 = vmatpush.bf16.msra.mxu0 %v968
        %1144 = vmatpush.bf16.msra.mxu0 %v964
        %1145 = vmatpush.bf16.msra.mxu0 %v960
        %1146 = vmatmul.bf16.gmra.mxu0 %v700
        %v1147 = vpop.f32.mrf.mxu0
        %v1148 = vadd.f32 0.0, %v1147
        %v1149 = vpop.f32.mrf.mxu0
        %1150 = vdwg.mxu0
        %1151 = vmatpush.bf16.msra.mxu0 %v1020
        %1152 = vmatpush.bf16.msra.mxu0 %v1016
        %1153 = vmatpush.bf16.msra.mxu0 %v1012
        %1154 = vmatpush.bf16.msra.mxu0 %v1008
        %1155 = vmatpush.bf16.msra.mxu0 %v1004
        %1156 = vmatpush.bf16.msra.mxu0 %v1000
        %1157 = vmatpush.bf16.msra.mxu0 %v996
        %1158 = vmatpush.bf16.msra.mxu0 %v992
        %1159 = vmatmul.bf16.gmra.mxu0 %v701
        %v1160 = vpop.f32.mrf.mxu0
        %v1161 = vadd.f32 %v1148, %v1160
        %v1162 = vpop.f32.mrf.mxu0
        %1163 = vdwg.mxu0
        %1164 = vmatpush.bf16.msra.mxu0 %v989
        %1165 = vmatpush.bf16.msra.mxu0 %v985
        %1166 = vmatpush.bf16.msra.mxu0 %v981
        %1167 = vmatpush.bf16.msra.mxu0 %v977
        %1168 = vmatpush.bf16.msra.mxu0 %v973
        %1169 = vmatpush.bf16.msra.mxu0 %v969
        %1170 = vmatpush.bf16.msra.mxu0 %v965
        %1171 = vmatpush.bf16.msra.mxu0 %v961
        %1172 = vmatmul.bf16.gmra.mxu0 %v700
        %v1173 = vpop.f32.mrf.mxu0
        %v1174 = vadd.f32 0.0, %v1173
        %v1175 = vpop.f32.mrf.mxu0
        %1176 = vdwg.mxu0
        %1177 = vmatpush.bf16.msra.mxu0 %v1021
        %1178 = vmatpush.bf16.msra.mxu0 %v1017
        %1179 = vmatpush.bf16.msra.mxu0 %v1013
        %1180 = vmatpush.bf16.msra.mxu0 %v1009
        %1181 = vmatpush.bf16.msra.mxu0 %v1005
        %1182 = vmatpush.bf16.msra.mxu0 %v1001
        %1183 = vmatpush.bf16.msra.mxu0 %v997
        %1184 = vmatpush.bf16.msra.mxu0 %v993
        %1185 = vmatmul.bf16.gmra.mxu0 %v701
        %v1186 = vpop.f32.mrf.mxu0
        %v1187 = vadd.f32 %v1174, %v1186
        %v1188 = vpop.f32.mrf.mxu0
        %1189 = vdwg.mxu0
        %s1190 = scalar_lea.vmem [#allocation5], 6
        %v1191 = vld [vmem:[%s1190] ss:$2 sm:$0xf]
        %s1192 = scalar_lea.vmem [#allocation5], 7
        %v1193 = vld [vmem:[%s1192] ss:$2 sm:$0xf]
        %v1194 = vrot.slane %v1109, 4
        %v1195 = vadd.f32 %v1109, %v1194
        %v1196 = vrot.slane %v1195, 2
        %v1197 = vadd.f32 %v1195, %v1196
        %v1198 = vrot.slane %v1197, 1
        %v1199 = vadd.f32 %v1197, %v1198
        %v1200 = vrot.slane %v1135, 4
        %v1201 = vadd.f32 %v1135, %v1200
        %v1202 = vrot.slane %v1201, 2
        %v1203 = vadd.f32 %v1201, %v1202
        %v1204 = vrot.slane %v1203, 1
        %v1205 = vadd.f32 %v1203, %v1204
        %v1206 = vrot.slane %v1161, 4
        %v1207 = vadd.f32 %v1161, %v1206
        %v1208 = vrot.slane %v1207, 2
        %v1209 = vadd.f32 %v1207, %v1208
        %v1210 = vrot.slane %v1209, 1
        %v1211 = vadd.f32 %v1209, %v1210
        %v1212 = vrot.slane %v1187, 4
        %v1213 = vadd.f32 %v1187, %v1212
        %v1214 = vrot.slane %v1213, 2
        %v1215 = vadd.f32 %v1213, %v1214
        %v1216 = vrot.slane %v1215, 1
        %v1217 = vadd.f32 %v1215, %v1216
        %v1218 = vmul.f32 %v1109, %v1109
        %v1219 = vmul.f32 %v1135, %v1135
        %v1220 = vmul.f32 %v1161, %v1161
        %v1221 = vmul.f32 %v1187, %v1187
        %v1222 = vrot.slane %v1218, 4
        %v1223 = vadd.f32 %v1218, %v1222
        %v1224 = vrot.slane %v1223, 2
        %v1225 = vadd.f32 %v1223, %v1224
        %v1226 = vrot.slane %v1225, 1
        %v1227 = vadd.f32 %v1225, %v1226
        %v1228 = vrot.slane %v1219, 4
        %v1229 = vadd.f32 %v1219, %v1228
        %v1230 = vrot.slane %v1229, 2
        %v1231 = vadd.f32 %v1229, %v1230
        %v1232 = vrot.slane %v1231, 1
        %v1233 = vadd.f32 %v1231, %v1232
        %v1234 = vrot.slane %v1220, 4
        %v1235 = vadd.f32 %v1220, %v1234
        %v1236 = vrot.slane %v1235, 2
        %v1237 = vadd.f32 %v1235, %v1236
        %v1238 = vrot.slane %v1237, 1
        %v1239 = vadd.f32 %v1237, %v1238
        %v1240 = vrot.slane %v1221, 4
        %v1241 = vadd.f32 %v1221, %v1240
        %v1242 = vrot.slane %v1241, 2
        %v1243 = vadd.f32 %v1241, %v1242
        %v1244 = vrot.slane %v1243, 1
        %v1245 = vadd.f32 %v1243, %v1244
        %v1246 = vmul.f32 %v1199, 0.125
        %v1247 = vmul.f32 %v1205, 0.125
        %v1248 = vmul.f32 %v1211, 0.125
        %v1249 = vmul.f32 %v1217, 0.125
        %v1250 = vmul.f32 %v1227, 0.125
        %v1251 = vmul.f32 %v1233, 0.125
        %v1252 = vmul.f32 %v1239, 0.125
        %v1253 = vmul.f32 %v1245, 0.125
        %v1254 = vmul.f32 %v1246, %v1246
        %v1255 = vmul.f32 %v1247, %v1247
        %v1256 = vmul.f32 %v1248, %v1248
        %v1257 = vmul.f32 %v1249, %v1249
        %v1258 = vsub.f32 %v1250, %v1254
        %v1259 = vsub.f32 %v1251, %v1255
        %v1260 = vsub.f32 %v1252, %v1256
        %v1261 = vsub.f32 %v1253, %v1257
        %v1262 = vmax.f32 %v1258, 0.0
        %v1263 = vmax.f32 %v1259, 0.0
        %v1264 = vmax.f32 %v1260, 0.0
        %v1265 = vmax.f32 %v1261, 0.0
        %v1266 = vadd.f32 %v1262, 1e-05
        %v1267 = vadd.f32 %v1263, 1e-05
        %v1268 = vadd.f32 %v1264, 1e-05
        %v1269 = vadd.f32 %v1265, 1e-05
        %v1270 = vrsqrt.pop %v1266
        %v1271 = vmul.f32 %v1270, %v1266
        %v1272 = vmul.f32 %v1271, %v1270
        %v1273 = vmul.f32 0.5, %v1272
        %v1274 = vsub.f32 1.5, %v1273
        %v1275 = vmul.f32 %v1270, %v1274
        %vm1276 = vweird.f32 %v1266
        %vm1277 = vweird.f32 %v1270
        %vm1278 = vmor %vm1276, %vm1277
        %v1279 = vsel %vm1278, %v1270, %v1275
        %v1280 = vrsqrt.pop %v1267
        %v1281 = vmul.f32 %v1280, %v1267
        %v1282 = vmul.f32 %v1281, %v1280
        %v1283 = vmul.f32 0.5, %v1282
        %v1284 = vsub.f32 1.5, %v1283
        %v1285 = vmul.f32 %v1280, %v1284
        %vm1286 = vweird.f32 %v1267
        %vm1287 = vweird.f32 %v1280
        %vm1288 = vmor %vm1286, %vm1287
        %v1289 = vsel %vm1288, %v1280, %v1285
        %v1290 = vrsqrt.pop %v1268
        %v1291 = vmul.f32 %v1290, %v1268
        %v1292 = vmul.f32 %v1291, %v1290
        %v1293 = vmul.f32 0.5, %v1292
        %v1294 = vsub.f32 1.5, %v1293
        %v1295 = vmul.f32 %v1290, %v1294
        %vm1296 = vweird.f32 %v1268
        %vm1297 = vweird.f32 %v1290
        %vm1298 = vmor %vm1296, %vm1297
        %v1299 = vsel %vm1298, %v1290, %v1295
        %v1300 = vrsqrt.pop %v1269
        %v1301 = vmul.f32 %v1300, %v1269
        %v1302 = vmul.f32 %v1301, %v1300
        %v1303 = vmul.f32 0.5, %v1302
        %v1304 = vsub.f32 1.5, %v1303
        %v1305 = vmul.f32 %v1300, %v1304
        %vm1306 = vweird.f32 %v1269
        %vm1307 = vweird.f32 %v1300
        %vm1308 = vmor %vm1306, %vm1307
        %v1309 = vsel %vm1308, %v1300, %v1305
        %v1314 = vrot.slane %v1289, 7
        %v1315 = vrot.slane %v1299, 6
        %v1316 = vrot.slane %v1309, 5
        %v1317 = vsel %vm672, %v1279, %v1314
        %vm1318 = vcmask 1042434
        %v1319 = vsel %vm1318, %v1315, %v1316
        %vm1320 = vcmask 1041408
        %v1321 = vsel %vm1320, %v1317, %v1319
        %v1323 = vmul.f32 %v1191, %v1321
        %v1325 = vperm.slane %v1323, 0
        %v1326 = vperm.slane %v1323, 1
        %v1327 = vperm.slane %v1323, 2
        %v1328 = vperm.slane %v1323, 3
        %v1333 = vmul.f32 %v1246, %v1325
        %v1334 = vmul.f32 %v1247, %v1326
        %v1335 = vmul.f32 %v1248, %v1327
        %v1336 = vmul.f32 %v1249, %v1328
        %v1341 = vrot.slane %v1334, 7
        %v1342 = vrot.slane %v1335, 6
        %v1343 = vrot.slane %v1336, 5
        %v1344 = vsel %vm672, %v1333, %v1341
        %v1345 = vsel %vm1318, %v1342, %v1343
        %v1346 = vsel %vm1320, %v1344, %v1345
        %v1348 = vsub.f32 %v1193, %v1346
        %v1349 = vmul.f32 %v1109, %v1325
        %v1350 = vmul.f32 %v1135, %v1326
        %v1351 = vmul.f32 %v1161, %v1327
        %v1352 = vmul.f32 %v1187, %v1328
        %v1354 = vperm.slane %v1348, 0
        %v1355 = vperm.slane %v1348, 1
        %v1356 = vperm.slane %v1348, 2
        %v1357 = vperm.slane %v1348, 3
        %v1362 = vadd.f32 %v1349, %v1354
        %v1363 = vadd.f32 %v1350, %v1355
        %v1364 = vadd.f32 %v1351, %v1356
        %v1365 = vadd.f32 %v1352, %v1357
        %v1366 = vmax.f32 %v1362, 0.0
        %v1367 = vmax.f32 %v1363, 0.0
        %v1368 = vmax.f32 %v1364, 0.0
        %v1369 = vmax.f32 %v1365, 0.0
        %v1370 = vpack.c.bf16 %v1366, %v1366
        %v1371 = vpack.c.bf16 %v1367, %v1367
        %v1372 = vpack.c.bf16 %v1368, %v1368
        %v1373 = vpack.c.bf16 %v1369, %v1369
        %v1374 = vld [vmem:[#allocation11] sm:$0xff]
        %v1375 = vld [vmem:[#allocation11 + $0x8] sm:$0xff]
        %v1376 = vld [vmem:[#allocation11 + $0x10] sm:$0xff]
        %v1377 = vld [vmem:[#allocation11 + $0x18] sm:$0xff]
        %v1378 = vld [vmem:[#allocation11 + $0x20] sm:$0xff]
        %v1379 = vld [vmem:[#allocation11 + $0x28] sm:$0xff]
        %v1380 = vld [vmem:[#allocation11 + $0x30] sm:$0xff]
        %v1381 = vld [vmem:[#allocation11 + $0x38] sm:$0xff]
        %v1382 = vld [vmem:[#allocation11 + $0x40] sm:$0xff]
        %v1383 = vld [vmem:[#allocation11 + $0x48] sm:$0xff]
        %v1384 = vld [vmem:[#allocation11 + $0x50] sm:$0xff]
        %v1385 = vld [vmem:[#allocation11 + $0x58] sm:$0xff]
        %v1386 = vld [vmem:[#allocation11 + $0x60] sm:$0xff]
        %v1387 = vld [vmem:[#allocation11 + $0x68] sm:$0xff]
        %v1388 = vld [vmem:[#allocation11 + $0x70] sm:$0xff]
        %v1389 = vld [vmem:[#allocation11 + $0x78] sm:$0xff]
        %v1390 = vld [vmem:[#allocation11 + $0x80] sm:$0xff]
        %v1391 = vld [vmem:[#allocation11 + $0x88] sm:$0xff]
        %v1392 = vld [vmem:[#allocation11 + $0x90] sm:$0xff]
        %v1393 = vld [vmem:[#allocation11 + $0x98] sm:$0xff]
        %v1394 = vld [vmem:[#allocation11 + $0xa0] sm:$0xff]
        %v1395 = vld [vmem:[#allocation11 + $0xa8] sm:$0xff]
        %v1396 = vld [vmem:[#allocation11 + $0xb0] sm:$0xff]
        %v1397 = vld [vmem:[#allocation11 + $0xb8] sm:$0xff]
        %v1398 = vld [vmem:[#allocation11 + $0xc0] sm:$0xff]
        %v1399 = vld [vmem:[#allocation11 + $0xc8] sm:$0xff]
        %v1400 = vld [vmem:[#allocation11 + $0xd0] sm:$0xff]
        %v1401 = vld [vmem:[#allocation11 + $0xd8] sm:$0xff]
        %v1402 = vld [vmem:[#allocation11 + $0xe0] sm:$0xff]
        %v1403 = vld [vmem:[#allocation11 + $0xe8] sm:$0xff]
        %v1404 = vld [vmem:[#allocation11 + $0xf0] sm:$0xff]
        %v1405 = vld [vmem:[#allocation11 + $0xf8] sm:$0xff]
        %v1406 = vld [vmem:[#allocation11 + $0x100] sm:$0xff]
        %v1407 = vld [vmem:[#allocation11 + $0x108] sm:$0xff]
        %v1408 = vld [vmem:[#allocation11 + $0x110] sm:$0xff]
        %v1409 = vld [vmem:[#allocation11 + $0x118] sm:$0xff]
        %v1410 = vld [vmem:[#allocation11 + $0x120] sm:$0xff]
        %v1411 = vld [vmem:[#allocation11 + $0x128] sm:$0xff]
        %v1412 = vld [vmem:[#allocation11 + $0x130] sm:$0xff]
        %v1413 = vld [vmem:[#allocation11 + $0x138] sm:$0xff]
        %v1414 = vld [vmem:[#allocation11 + $0x140] sm:$0xff]
        %v1415 = vld [vmem:[#allocation11 + $0x148] sm:$0xff]
        %v1416 = vld [vmem:[#allocation11 + $0x150] sm:$0xff]
        %v1417 = vld [vmem:[#allocation11 + $0x158] sm:$0xff]
        %v1418 = vld [vmem:[#allocation11 + $0x160] sm:$0xff]
        %v1419 = vld [vmem:[#allocation11 + $0x168] sm:$0xff]
        %v1420 = vld [vmem:[#allocation11 + $0x170] sm:$0xff]
        %v1421 = vld [vmem:[#allocation11 + $0x178] sm:$0xff]
        %v1422 = vld [vmem:[#allocation11 + $0x180] sm:$0xff]
        %v1423 = vld [vmem:[#allocation11 + $0x188] sm:$0xff]
        %v1424 = vld [vmem:[#allocation11 + $0x190] sm:$0xff]
        %v1425 = vld [vmem:[#allocation11 + $0x198] sm:$0xff]
        %v1426 = vld [vmem:[#allocation11 + $0x1a0] sm:$0xff]
        %v1427 = vld [vmem:[#allocation11 + $0x1a8] sm:$0xff]
        %v1428 = vld [vmem:[#allocation11 + $0x1b0] sm:$0xff]
        %v1429 = vld [vmem:[#allocation11 + $0x1b8] sm:$0xff]
        %v1430 = vld [vmem:[#allocation11 + $0x1c0] sm:$0xff]
        %v1431 = vld [vmem:[#allocation11 + $0x1c8] sm:$0xff]
        %v1432 = vld [vmem:[#allocation11 + $0x1d0] sm:$0xff]
        %v1433 = vld [vmem:[#allocation11 + $0x1d8] sm:$0xff]
        %v1434 = vld [vmem:[#allocation11 + $0x1e0] sm:$0xff]
        %v1435 = vld [vmem:[#allocation11 + $0x1e8] sm:$0xff]
        %v1436 = vld [vmem:[#allocation11 + $0x1f0] sm:$0xff]
        %v1437 = vld [vmem:[#allocation11 + $0x1f8] sm:$0xff]
        %v1438 = vld [vmem:[#allocation11 + $0x200] sm:$0xff]
        %v1439 = vld [vmem:[#allocation11 + $0x208] sm:$0xff]
        %v1440 = vld [vmem:[#allocation11 + $0x210] sm:$0xff]
        %v1441 = vld [vmem:[#allocation11 + $0x218] sm:$0xff]
        %v1442 = vld [vmem:[#allocation11 + $0x220] sm:$0xff]
        %v1443 = vld [vmem:[#allocation11 + $0x228] sm:$0xff]
        %v1444 = vld [vmem:[#allocation11 + $0x230] sm:$0xff]
        %v1445 = vld [vmem:[#allocation11 + $0x238] sm:$0xff]
        %v1446 = vld [vmem:[#allocation11 + $0x240] sm:$0xff]
        %v1447 = vld [vmem:[#allocation11 + $0x248] sm:$0xff]
        %v1448 = vld [vmem:[#allocation11 + $0x250] sm:$0xff]
        %v1449 = vld [vmem:[#allocation11 + $0x258] sm:$0xff]
        %v1450 = vld [vmem:[#allocation11 + $0x260] sm:$0xff]
        %v1451 = vld [vmem:[#allocation11 + $0x268] sm:$0xff]
        %v1452 = vld [vmem:[#allocation11 + $0x270] sm:$0xff]
        %v1453 = vld [vmem:[#allocation11 + $0x278] sm:$0xff]
        %v1454 = vld [vmem:[#allocation11 + $0x280] sm:$0xff]
        %v1455 = vld [vmem:[#allocation11 + $0x288] sm:$0xff]
        %v1456 = vld [vmem:[#allocation11 + $0x290] sm:$0xff]
        %v1457 = vld [vmem:[#allocation11 + $0x298] sm:$0xff]
        %v1458 = vld [vmem:[#allocation11 + $0x2a0] sm:$0xff]
        %v1459 = vld [vmem:[#allocation11 + $0x2a8] sm:$0xff]
        %v1460 = vld [vmem:[#allocation11 + $0x2b0] sm:$0xff]
        %v1461 = vld [vmem:[#allocation11 + $0x2b8] sm:$0xff]
        %v1462 = vld [vmem:[#allocation11 + $0x2c0] sm:$0xff]
        %v1463 = vld [vmem:[#allocation11 + $0x2c8] sm:$0xff]
        %v1464 = vld [vmem:[#allocation11 + $0x2d0] sm:$0xff]
        %v1465 = vld [vmem:[#allocation11 + $0x2d8] sm:$0xff]
        %v1466 = vld [vmem:[#allocation11 + $0x2e0] sm:$0xff]
        %v1467 = vld [vmem:[#allocation11 + $0x2e8] sm:$0xff]
        %v1468 = vld [vmem:[#allocation11 + $0x2f0] sm:$0xff]
        %v1469 = vld [vmem:[#allocation11 + $0x2f8] sm:$0xff]
        %v1470 = vld [vmem:[#allocation11 + $0x300] sm:$0xff]
        %v1471 = vld [vmem:[#allocation11 + $0x308] sm:$0xff]
        %v1472 = vld [vmem:[#allocation11 + $0x310] sm:$0xff]
        %v1473 = vld [vmem:[#allocation11 + $0x318] sm:$0xff]
        %v1474 = vld [vmem:[#allocation11 + $0x320] sm:$0xff]
        %v1475 = vld [vmem:[#allocation11 + $0x328] sm:$0xff]
        %v1476 = vld [vmem:[#allocation11 + $0x330] sm:$0xff]
        %v1477 = vld [vmem:[#allocation11 + $0x338] sm:$0xff]
        %v1478 = vld [vmem:[#allocation11 + $0x340] sm:$0xff]
        %v1479 = vld [vmem:[#allocation11 + $0x348] sm:$0xff]
        %v1480 = vld [vmem:[#allocation11 + $0x350] sm:$0xff]
        %v1481 = vld [vmem:[#allocation11 + $0x358] sm:$0xff]
        %v1482 = vld [vmem:[#allocation11 + $0x360] sm:$0xff]
        %v1483 = vld [vmem:[#allocation11 + $0x368] sm:$0xff]
        %v1484 = vld [vmem:[#allocation11 + $0x370] sm:$0xff]
        %v1485 = vld [vmem:[#allocation11 + $0x378] sm:$0xff]
        %v1486 = vld [vmem:[#allocation11 + $0x380] sm:$0xff]
        %v1487 = vld [vmem:[#allocation11 + $0x388] sm:$0xff]
        %v1488 = vld [vmem:[#allocation11 + $0x390] sm:$0xff]
        %v1489 = vld [vmem:[#allocation11 + $0x398] sm:$0xff]
        %v1490 = vld [vmem:[#allocation11 + $0x3a0] sm:$0xff]
        %v1491 = vld [vmem:[#allocation11 + $0x3a8] sm:$0xff]
        %v1492 = vld [vmem:[#allocation11 + $0x3b0] sm:$0xff]
        %v1493 = vld [vmem:[#allocation11 + $0x3b8] sm:$0xff]
        %v1494 = vld [vmem:[#allocation11 + $0x3c0] sm:$0xff]
        %v1495 = vld [vmem:[#allocation11 + $0x3c8] sm:$0xff]
        %v1496 = vld [vmem:[#allocation11 + $0x3d0] sm:$0xff]
        %v1497 = vld [vmem:[#allocation11 + $0x3d8] sm:$0xff]
        %v1498 = vld [vmem:[#allocation11 + $0x3e0] sm:$0xff]
        %v1499 = vld [vmem:[#allocation11 + $0x3e8] sm:$0xff]
        %v1500 = vld [vmem:[#allocation11 + $0x3f0] sm:$0xff]
        %v1501 = vld [vmem:[#allocation11 + $0x3f8] sm:$0xff]
        %v1502 = vld [vmem:[#allocation11 + $0x400] sm:$0xff]
        %v1503 = vld [vmem:[#allocation11 + $0x408] sm:$0xff]
        %v1504 = vld [vmem:[#allocation11 + $0x410] sm:$0xff]
        %v1505 = vld [vmem:[#allocation11 + $0x418] sm:$0xff]
        %v1506 = vld [vmem:[#allocation11 + $0x420] sm:$0xff]
        %v1507 = vld [vmem:[#allocation11 + $0x428] sm:$0xff]
        %v1508 = vld [vmem:[#allocation11 + $0x430] sm:$0xff]
        %v1509 = vld [vmem:[#allocation11 + $0x438] sm:$0xff]
        %v1510 = vld [vmem:[#allocation11 + $0x440] sm:$0xff]
        %v1511 = vld [vmem:[#allocation11 + $0x448] sm:$0xff]
        %v1512 = vld [vmem:[#allocation11 + $0x450] sm:$0xff]
        %v1513 = vld [vmem:[#allocation11 + $0x458] sm:$0xff]
        %v1514 = vld [vmem:[#allocation11 + $0x460] sm:$0xff]
        %v1515 = vld [vmem:[#allocation11 + $0x468] sm:$0xff]
        %v1516 = vld [vmem:[#allocation11 + $0x470] sm:$0xff]
        %v1517 = vld [vmem:[#allocation11 + $0x478] sm:$0xff]
        %v1518 = vld [vmem:[#allocation11 + $0x480] sm:$0xff]
        %v1519 = vld [vmem:[#allocation11 + $0x488] sm:$0xff]
        %v1520 = vld [vmem:[#allocation11 + $0x490] sm:$0xff]
        %v1521 = vld [vmem:[#allocation11 + $0x498] sm:$0xff]
        %v1522 = vld [vmem:[#allocation11 + $0x4a0] sm:$0xff]
        %v1523 = vld [vmem:[#allocation11 + $0x4a8] sm:$0xff]
        %v1524 = vld [vmem:[#allocation11 + $0x4b0] sm:$0xff]
        %v1525 = vld [vmem:[#allocation11 + $0x4b8] sm:$0xff]
        %v1526 = vld [vmem:[#allocation11 + $0x4c0] sm:$0xff]
        %v1527 = vld [vmem:[#allocation11 + $0x4c8] sm:$0xff]
        %v1528 = vld [vmem:[#allocation11 + $0x4d0] sm:$0xff]
        %v1529 = vld [vmem:[#allocation11 + $0x4d8] sm:$0xff]
        %v1530 = vld [vmem:[#allocation11 + $0x4e0] sm:$0xff]
        %v1531 = vld [vmem:[#allocation11 + $0x4e8] sm:$0xff]
        %v1532 = vld [vmem:[#allocation11 + $0x4f0] sm:$0xff]
        %v1533 = vld [vmem:[#allocation11 + $0x4f8] sm:$0xff]
        %v1534 = vld [vmem:[#allocation11 + $0x500] sm:$0xff]
        %v1535 = vld [vmem:[#allocation11 + $0x508] sm:$0xff]
        %v1536 = vld [vmem:[#allocation11 + $0x510] sm:$0xff]
        %v1537 = vld [vmem:[#allocation11 + $0x518] sm:$0xff]
        %v1538 = vld [vmem:[#allocation11 + $0x520] sm:$0xff]
        %v1539 = vld [vmem:[#allocation11 + $0x528] sm:$0xff]
        %v1540 = vld [vmem:[#allocation11 + $0x530] sm:$0xff]
        %v1541 = vld [vmem:[#allocation11 + $0x538] sm:$0xff]
        %v1542 = vld [vmem:[#allocation11 + $0x540] sm:$0xff]
        %v1543 = vld [vmem:[#allocation11 + $0x548] sm:$0xff]
        %v1544 = vld [vmem:[#allocation11 + $0x550] sm:$0xff]
        %v1545 = vld [vmem:[#allocation11 + $0x558] sm:$0xff]
        %v1546 = vld [vmem:[#allocation11 + $0x560] sm:$0xff]
        %v1547 = vld [vmem:[#allocation11 + $0x568] sm:$0xff]
        %v1548 = vld [vmem:[#allocation11 + $0x570] sm:$0xff]
        %v1549 = vld [vmem:[#allocation11 + $0x578] sm:$0xff]
        %v1550 = vld [vmem:[#allocation11 + $0x580] sm:$0xff]
        %v1551 = vld [vmem:[#allocation11 + $0x588] sm:$0xff]
        %v1552 = vld [vmem:[#allocation11 + $0x590] sm:$0xff]
        %v1553 = vld [vmem:[#allocation11 + $0x598] sm:$0xff]
        %v1554 = vld [vmem:[#allocation11 + $0x5a0] sm:$0xff]
        %v1555 = vld [vmem:[#allocation11 + $0x5a8] sm:$0xff]
        %v1556 = vld [vmem:[#allocation11 + $0x5b0] sm:$0xff]
        %v1557 = vld [vmem:[#allocation11 + $0x5b8] sm:$0xff]
        %v1558 = vld [vmem:[#allocation11 + $0x5c0] sm:$0xff]
        %v1559 = vld [vmem:[#allocation11 + $0x5c8] sm:$0xff]
        %v1560 = vld [vmem:[#allocation11 + $0x5d0] sm:$0xff]
        %v1561 = vld [vmem:[#allocation11 + $0x5d8] sm:$0xff]
        %v1562 = vld [vmem:[#allocation11 + $0x5e0] sm:$0xff]
        %v1563 = vld [vmem:[#allocation11 + $0x5e8] sm:$0xff]
        %v1564 = vld [vmem:[#allocation11 + $0x5f0] sm:$0xff]
        %v1565 = vld [vmem:[#allocation11 + $0x5f8] sm:$0xff]
        %v1566 = vld [vmem:[#allocation11 + $0x600] sm:$0xff]
        %v1567 = vld [vmem:[#allocation11 + $0x608] sm:$0xff]
        %v1568 = vld [vmem:[#allocation11 + $0x610] sm:$0xff]
        %v1569 = vld [vmem:[#allocation11 + $0x618] sm:$0xff]
        %v1570 = vld [vmem:[#allocation11 + $0x620] sm:$0xff]
        %v1571 = vld [vmem:[#allocation11 + $0x628] sm:$0xff]
        %v1572 = vld [vmem:[#allocation11 + $0x630] sm:$0xff]
        %v1573 = vld [vmem:[#allocation11 + $0x638] sm:$0xff]
        %v1574 = vld [vmem:[#allocation11 + $0x640] sm:$0xff]
        %v1575 = vld [vmem:[#allocation11 + $0x648] sm:$0xff]
        %v1576 = vld [vmem:[#allocation11 + $0x650] sm:$0xff]
        %v1577 = vld [vmem:[#allocation11 + $0x658] sm:$0xff]
        %v1578 = vld [vmem:[#allocation11 + $0x660] sm:$0xff]
        %v1579 = vld [vmem:[#allocation11 + $0x668] sm:$0xff]
        %v1580 = vld [vmem:[#allocation11 + $0x670] sm:$0xff]
        %v1581 = vld [vmem:[#allocation11 + $0x678] sm:$0xff]
        %v1582 = vld [vmem:[#allocation11 + $0x680] sm:$0xff]
        %v1583 = vld [vmem:[#allocation11 + $0x688] sm:$0xff]
        %v1584 = vld [vmem:[#allocation11 + $0x690] sm:$0xff]
        %v1585 = vld [vmem:[#allocation11 + $0x698] sm:$0xff]
        %v1586 = vld [vmem:[#allocation11 + $0x6a0] sm:$0xff]
        %v1587 = vld [vmem:[#allocation11 + $0x6a8] sm:$0xff]
        %v1588 = vld [vmem:[#allocation11 + $0x6b0] sm:$0xff]
        %v1589 = vld [vmem:[#allocation11 + $0x6b8] sm:$0xff]
        %v1590 = vld [vmem:[#allocation11 + $0x6c0] sm:$0xff]
        %v1591 = vld [vmem:[#allocation11 + $0x6c8] sm:$0xff]
        %v1592 = vld [vmem:[#allocation11 + $0x6d0] sm:$0xff]
        %v1593 = vld [vmem:[#allocation11 + $0x6d8] sm:$0xff]
        %v1594 = vld [vmem:[#allocation11 + $0x6e0] sm:$0xff]
        %v1595 = vld [vmem:[#allocation11 + $0x6e8] sm:$0xff]
        %v1596 = vld [vmem:[#allocation11 + $0x6f0] sm:$0xff]
        %v1597 = vld [vmem:[#allocation11 + $0x6f8] sm:$0xff]
        %v1598 = vld [vmem:[#allocation11 + $0x700] sm:$0xff]
        %v1599 = vld [vmem:[#allocation11 + $0x708] sm:$0xff]
        %v1600 = vld [vmem:[#allocation11 + $0x710] sm:$0xff]
        %v1601 = vld [vmem:[#allocation11 + $0x718] sm:$0xff]
        %v1602 = vld [vmem:[#allocation11 + $0x720] sm:$0xff]
        %v1603 = vld [vmem:[#allocation11 + $0x728] sm:$0xff]
        %v1604 = vld [vmem:[#allocation11 + $0x730] sm:$0xff]
        %v1605 = vld [vmem:[#allocation11 + $0x738] sm:$0xff]
        %v1606 = vld [vmem:[#allocation11 + $0x740] sm:$0xff]
        %v1607 = vld [vmem:[#allocation11 + $0x748] sm:$0xff]
        %v1608 = vld [vmem:[#allocation11 + $0x750] sm:$0xff]
        %v1609 = vld [vmem:[#allocation11 + $0x758] sm:$0xff]
        %v1610 = vld [vmem:[#allocation11 + $0x760] sm:$0xff]
        %v1611 = vld [vmem:[#allocation11 + $0x768] sm:$0xff]
        %v1612 = vld [vmem:[#allocation11 + $0x770] sm:$0xff]
        %v1613 = vld [vmem:[#allocation11 + $0x778] sm:$0xff]
        %v1614 = vld [vmem:[#allocation11 + $0x780] sm:$0xff]
        %v1615 = vld [vmem:[#allocation11 + $0x788] sm:$0xff]
        %v1616 = vld [vmem:[#allocation11 + $0x790] sm:$0xff]
        %v1617 = vld [vmem:[#allocation11 + $0x798] sm:$0xff]
        %v1618 = vld [vmem:[#allocation11 + $0x7a0] sm:$0xff]
        %v1619 = vld [vmem:[#allocation11 + $0x7a8] sm:$0xff]
        %v1620 = vld [vmem:[#allocation11 + $0x7b0] sm:$0xff]
        %v1621 = vld [vmem:[#allocation11 + $0x7b8] sm:$0xff]
        %v1622 = vld [vmem:[#allocation11 + $0x7c0] sm:$0xff]
        %v1623 = vld [vmem:[#allocation11 + $0x7c8] sm:$0xff]
        %v1624 = vld [vmem:[#allocation11 + $0x7d0] sm:$0xff]
        %v1625 = vld [vmem:[#allocation11 + $0x7d8] sm:$0xff]
        %v1626 = vld [vmem:[#allocation11 + $0x7e0] sm:$0xff]
        %v1627 = vld [vmem:[#allocation11 + $0x7e8] sm:$0xff]
        %v1628 = vld [vmem:[#allocation11 + $0x7f0] sm:$0xff]
        %v1629 = vld [vmem:[#allocation11 + $0x7f8] sm:$0xff]
        %v1886 = vunpack.c.l.b16 %v1374
        %v1887 = vunpack.c.h.b16 %v1374
        %v1888 = vunpack.c.l.b16 %v1375
        %v1889 = vunpack.c.h.b16 %v1375
        %v1890 = vunpack.c.l.b16 %v1376
        %v1891 = vunpack.c.h.b16 %v1376
        %v1892 = vunpack.c.l.b16 %v1377
        %v1893 = vunpack.c.h.b16 %v1377
        %v1894 = vunpack.c.l.b16 %v1378
        %v1895 = vunpack.c.h.b16 %v1378
        %v1896 = vunpack.c.l.b16 %v1379
        %v1897 = vunpack.c.h.b16 %v1379
        %v1898 = vunpack.c.l.b16 %v1380
        %v1899 = vunpack.c.h.b16 %v1380
        %v1900 = vunpack.c.l.b16 %v1381
        %v1901 = vunpack.c.h.b16 %v1381
        %v1902 = vunpack.c.l.b16 %v1382
        %v1903 = vunpack.c.h.b16 %v1382
        %v1904 = vunpack.c.l.b16 %v1383
        %v1905 = vunpack.c.h.b16 %v1383
        %v1906 = vunpack.c.l.b16 %v1384
        %v1907 = vunpack.c.h.b16 %v1384
        %v1908 = vunpack.c.l.b16 %v1385
        %v1909 = vunpack.c.h.b16 %v1385
        %v1910 = vunpack.c.l.b16 %v1386
        %v1911 = vunpack.c.h.b16 %v1386
        %v1912 = vunpack.c.l.b16 %v1387
        %v1913 = vunpack.c.h.b16 %v1387
        %v1914 = vunpack.c.l.b16 %v1388
        %v1915 = vunpack.c.h.b16 %v1388
        %v1916 = vunpack.c.l.b16 %v1389
        %v1917 = vunpack.c.h.b16 %v1389
        %v1918 = vunpack.c.l.b16 %v1390
        %v1919 = vunpack.c.h.b16 %v1390
        %v1920 = vunpack.c.l.b16 %v1391
        %v1921 = vunpack.c.h.b16 %v1391
        %v1922 = vunpack.c.l.b16 %v1392
        %v1923 = vunpack.c.h.b16 %v1392
        %v1924 = vunpack.c.l.b16 %v1393
        %v1925 = vunpack.c.h.b16 %v1393
        %v1926 = vunpack.c.l.b16 %v1394
        %v1927 = vunpack.c.h.b16 %v1394
        %v1928 = vunpack.c.l.b16 %v1395
        %v1929 = vunpack.c.h.b16 %v1395
        %v1930 = vunpack.c.l.b16 %v1396
        %v1931 = vunpack.c.h.b16 %v1396
        %v1932 = vunpack.c.l.b16 %v1397
        %v1933 = vunpack.c.h.b16 %v1397
        %v1934 = vunpack.c.l.b16 %v1398
        %v1935 = vunpack.c.h.b16 %v1398
        %v1936 = vunpack.c.l.b16 %v1399
        %v1937 = vunpack.c.h.b16 %v1399
        %v1938 = vunpack.c.l.b16 %v1400
        %v1939 = vunpack.c.h.b16 %v1400
        %v1940 = vunpack.c.l.b16 %v1401
        %v1941 = vunpack.c.h.b16 %v1401
        %v1942 = vunpack.c.l.b16 %v1402
        %v1943 = vunpack.c.h.b16 %v1402
        %v1944 = vunpack.c.l.b16 %v1403
        %v1945 = vunpack.c.h.b16 %v1403
        %v1946 = vunpack.c.l.b16 %v1404
        %v1947 = vunpack.c.h.b16 %v1404
        %v1948 = vunpack.c.l.b16 %v1405
        %v1949 = vunpack.c.h.b16 %v1405
        %v1950 = vunpack.c.l.b16 %v1406
        %v1951 = vunpack.c.h.b16 %v1406
        %v1952 = vunpack.c.l.b16 %v1407
        %v1953 = vunpack.c.h.b16 %v1407
        %v1954 = vunpack.c.l.b16 %v1408
        %v1955 = vunpack.c.h.b16 %v1408
        %v1956 = vunpack.c.l.b16 %v1409
        %v1957 = vunpack.c.h.b16 %v1409
        %v1958 = vunpack.c.l.b16 %v1410
        %v1959 = vunpack.c.h.b16 %v1410
        %v1960 = vunpack.c.l.b16 %v1411
        %v1961 = vunpack.c.h.b16 %v1411
        %v1962 = vunpack.c.l.b16 %v1412
        %v1963 = vunpack.c.h.b16 %v1412
        %v1964 = vunpack.c.l.b16 %v1413
        %v1965 = vunpack.c.h.b16 %v1413
        %v1966 = vunpack.c.l.b16 %v1414
        %v1967 = vunpack.c.h.b16 %v1414
        %v1968 = vunpack.c.l.b16 %v1415
        %v1969 = vunpack.c.h.b16 %v1415
        %v1970 = vunpack.c.l.b16 %v1416
        %v1971 = vunpack.c.h.b16 %v1416
        %v1972 = vunpack.c.l.b16 %v1417
        %v1973 = vunpack.c.h.b16 %v1417
        %v1974 = vunpack.c.l.b16 %v1418
        %v1975 = vunpack.c.h.b16 %v1418
        %v1976 = vunpack.c.l.b16 %v1419
        %v1977 = vunpack.c.h.b16 %v1419
        %v1978 = vunpack.c.l.b16 %v1420
        %v1979 = vunpack.c.h.b16 %v1420
        %v1980 = vunpack.c.l.b16 %v1421
        %v1981 = vunpack.c.h.b16 %v1421
        %v1982 = vunpack.c.l.b16 %v1422
        %v1983 = vunpack.c.h.b16 %v1422
        %v1984 = vunpack.c.l.b16 %v1423
        %v1985 = vunpack.c.h.b16 %v1423
        %v1986 = vunpack.c.l.b16 %v1424
        %v1987 = vunpack.c.h.b16 %v1424
        %v1988 = vunpack.c.l.b16 %v1425
        %v1989 = vunpack.c.h.b16 %v1425
        %v1990 = vunpack.c.l.b16 %v1426
        %v1991 = vunpack.c.h.b16 %v1426
        %v1992 = vunpack.c.l.b16 %v1427
        %v1993 = vunpack.c.h.b16 %v1427
        %v1994 = vunpack.c.l.b16 %v1428
        %v1995 = vunpack.c.h.b16 %v1428
        %v1996 = vunpack.c.l.b16 %v1429
        %v1997 = vunpack.c.h.b16 %v1429
        %v1998 = vunpack.c.l.b16 %v1430
        %v1999 = vunpack.c.h.b16 %v1430
        %v2000 = vunpack.c.l.b16 %v1431
        %v2001 = vunpack.c.h.b16 %v1431
        %v2002 = vunpack.c.l.b16 %v1432
        %v2003 = vunpack.c.h.b16 %v1432
        %v2004 = vunpack.c.l.b16 %v1433
        %v2005 = vunpack.c.h.b16 %v1433
        %v2006 = vunpack.c.l.b16 %v1434
        %v2007 = vunpack.c.h.b16 %v1434
        %v2008 = vunpack.c.l.b16 %v1435
        %v2009 = vunpack.c.h.b16 %v1435
        %v2010 = vunpack.c.l.b16 %v1436
        %v2011 = vunpack.c.h.b16 %v1436
        %v2012 = vunpack.c.l.b16 %v1437
        %v2013 = vunpack.c.h.b16 %v1437
        %v2014 = vunpack.c.l.b16 %v1438
        %v2015 = vunpack.c.h.b16 %v1438
        %v2016 = vunpack.c.l.b16 %v1439
        %v2017 = vunpack.c.h.b16 %v1439
        %v2018 = vunpack.c.l.b16 %v1440
        %v2019 = vunpack.c.h.b16 %v1440
        %v2020 = vunpack.c.l.b16 %v1441
        %v2021 = vunpack.c.h.b16 %v1441
        %v2022 = vunpack.c.l.b16 %v1442
        %v2023 = vunpack.c.h.b16 %v1442
        %v2024 = vunpack.c.l.b16 %v1443
        %v2025 = vunpack.c.h.b16 %v1443
        %v2026 = vunpack.c.l.b16 %v1444
        %v2027 = vunpack.c.h.b16 %v1444
        %v2028 = vunpack.c.l.b16 %v1445
        %v2029 = vunpack.c.h.b16 %v1445
        %v2030 = vunpack.c.l.b16 %v1446
        %v2031 = vunpack.c.h.b16 %v1446
        %v2032 = vunpack.c.l.b16 %v1447
        %v2033 = vunpack.c.h.b16 %v1447
        %v2034 = vunpack.c.l.b16 %v1448
        %v2035 = vunpack.c.h.b16 %v1448
        %v2036 = vunpack.c.l.b16 %v1449
        %v2037 = vunpack.c.h.b16 %v1449
        %v2038 = vunpack.c.l.b16 %v1450
        %v2039 = vunpack.c.h.b16 %v1450
        %v2040 = vunpack.c.l.b16 %v1451
        %v2041 = vunpack.c.h.b16 %v1451
        %v2042 = vunpack.c.l.b16 %v1452
        %v2043 = vunpack.c.h.b16 %v1452
        %v2044 = vunpack.c.l.b16 %v1453
        %v2045 = vunpack.c.h.b16 %v1453
        %v2046 = vunpack.c.l.b16 %v1454
        %v2047 = vunpack.c.h.b16 %v1454
        %v2048 = vunpack.c.l.b16 %v1455
        %v2049 = vunpack.c.h.b16 %v1455
        %v2050 = vunpack.c.l.b16 %v1456
        %v2051 = vunpack.c.h.b16 %v1456
        %v2052 = vunpack.c.l.b16 %v1457
        %v2053 = vunpack.c.h.b16 %v1457
        %v2054 = vunpack.c.l.b16 %v1458
        %v2055 = vunpack.c.h.b16 %v1458
        %v2056 = vunpack.c.l.b16 %v1459
        %v2057 = vunpack.c.h.b16 %v1459
        %v2058 = vunpack.c.l.b16 %v1460
        %v2059 = vunpack.c.h.b16 %v1460
        %v2060 = vunpack.c.l.b16 %v1461
        %v2061 = vunpack.c.h.b16 %v1461
        %v2062 = vunpack.c.l.b16 %v1462
        %v2063 = vunpack.c.h.b16 %v1462
        %v2064 = vunpack.c.l.b16 %v1463
        %v2065 = vunpack.c.h.b16 %v1463
        %v2066 = vunpack.c.l.b16 %v1464
        %v2067 = vunpack.c.h.b16 %v1464
        %v2068 = vunpack.c.l.b16 %v1465
        %v2069 = vunpack.c.h.b16 %v1465
        %v2070 = vunpack.c.l.b16 %v1466
        %v2071 = vunpack.c.h.b16 %v1466
        %v2072 = vunpack.c.l.b16 %v1467
        %v2073 = vunpack.c.h.b16 %v1467
        %v2074 = vunpack.c.l.b16 %v1468
        %v2075 = vunpack.c.h.b16 %v1468
        %v2076 = vunpack.c.l.b16 %v1469
        %v2077 = vunpack.c.h.b16 %v1469
        %v2078 = vunpack.c.l.b16 %v1470
        %v2079 = vunpack.c.h.b16 %v1470
        %v2080 = vunpack.c.l.b16 %v1471
        %v2081 = vunpack.c.h.b16 %v1471
        %v2082 = vunpack.c.l.b16 %v1472
        %v2083 = vunpack.c.h.b16 %v1472
        %v2084 = vunpack.c.l.b16 %v1473
        %v2085 = vunpack.c.h.b16 %v1473
        %v2086 = vunpack.c.l.b16 %v1474
        %v2087 = vunpack.c.h.b16 %v1474
        %v2088 = vunpack.c.l.b16 %v1475
        %v2089 = vunpack.c.h.b16 %v1475
        %v2090 = vunpack.c.l.b16 %v1476
        %v2091 = vunpack.c.h.b16 %v1476
        %v2092 = vunpack.c.l.b16 %v1477
        %v2093 = vunpack.c.h.b16 %v1477
        %v2094 = vunpack.c.l.b16 %v1478
        %v2095 = vunpack.c.h.b16 %v1478
        %v2096 = vunpack.c.l.b16 %v1479
        %v2097 = vunpack.c.h.b16 %v1479
        %v2098 = vunpack.c.l.b16 %v1480
        %v2099 = vunpack.c.h.b16 %v1480
        %v2100 = vunpack.c.l.b16 %v1481
        %v2101 = vunpack.c.h.b16 %v1481
        %v2102 = vunpack.c.l.b16 %v1482
        %v2103 = vunpack.c.h.b16 %v1482
        %v2104 = vunpack.c.l.b16 %v1483
        %v2105 = vunpack.c.h.b16 %v1483
        %v2106 = vunpack.c.l.b16 %v1484
        %v2107 = vunpack.c.h.b16 %v1484
        %v2108 = vunpack.c.l.b16 %v1485
        %v2109 = vunpack.c.h.b16 %v1485
        %v2110 = vunpack.c.l.b16 %v1486
        %v2111 = vunpack.c.h.b16 %v1486
        %v2112 = vunpack.c.l.b16 %v1487
        %v2113 = vunpack.c.h.b16 %v1487
        %v2114 = vunpack.c.l.b16 %v1488
        %v2115 = vunpack.c.h.b16 %v1488
        %v2116 = vunpack.c.l.b16 %v1489
        %v2117 = vunpack.c.h.b16 %v1489
        %v2118 = vunpack.c.l.b16 %v1490
        %v2119 = vunpack.c.h.b16 %v1490
        %v2120 = vunpack.c.l.b16 %v1491
        %v2121 = vunpack.c.h.b16 %v1491
        %v2122 = vunpack.c.l.b16 %v1492
        %v2123 = vunpack.c.h.b16 %v1492
        %v2124 = vunpack.c.l.b16 %v1493
        %v2125 = vunpack.c.h.b16 %v1493
        %v2126 = vunpack.c.l.b16 %v1494
        %v2127 = vunpack.c.h.b16 %v1494
        %v2128 = vunpack.c.l.b16 %v1495
        %v2129 = vunpack.c.h.b16 %v1495
        %v2130 = vunpack.c.l.b16 %v1496
        %v2131 = vunpack.c.h.b16 %v1496
        %v2132 = vunpack.c.l.b16 %v1497
        %v2133 = vunpack.c.h.b16 %v1497
        %v2134 = vunpack.c.l.b16 %v1498
        %v2135 = vunpack.c.h.b16 %v1498
        %v2136 = vunpack.c.l.b16 %v1499
        %v2137 = vunpack.c.h.b16 %v1499
        %v2138 = vunpack.c.l.b16 %v1500
        %v2139 = vunpack.c.h.b16 %v1500
        %v2140 = vunpack.c.l.b16 %v1501
        %v2141 = vunpack.c.h.b16 %v1501
        %v2142 = vunpack.c.l.b16 %v1502
        %v2143 = vunpack.c.h.b16 %v1502
        %v2144 = vunpack.c.l.b16 %v1503
        %v2145 = vunpack.c.h.b16 %v1503
        %v2146 = vunpack.c.l.b16 %v1504
        %v2147 = vunpack.c.h.b16 %v1504
        %v2148 = vunpack.c.l.b16 %v1505
        %v2149 = vunpack.c.h.b16 %v1505
        %v2150 = vunpack.c.l.b16 %v1506
        %v2151 = vunpack.c.h.b16 %v1506
        %v2152 = vunpack.c.l.b16 %v1507
        %v2153 = vunpack.c.h.b16 %v1507
        %v2154 = vunpack.c.l.b16 %v1508
        %v2155 = vunpack.c.h.b16 %v1508
        %v2156 = vunpack.c.l.b16 %v1509
        %v2157 = vunpack.c.h.b16 %v1509
        %v2158 = vunpack.c.l.b16 %v1510
        %v2159 = vunpack.c.h.b16 %v1510
        %v2160 = vunpack.c.l.b16 %v1511
        %v2161 = vunpack.c.h.b16 %v1511
        %v2162 = vunpack.c.l.b16 %v1512
        %v2163 = vunpack.c.h.b16 %v1512
        %v2164 = vunpack.c.l.b16 %v1513
        %v2165 = vunpack.c.h.b16 %v1513
        %v2166 = vunpack.c.l.b16 %v1514
        %v2167 = vunpack.c.h.b16 %v1514
        %v2168 = vunpack.c.l.b16 %v1515
        %v2169 = vunpack.c.h.b16 %v1515
        %v2170 = vunpack.c.l.b16 %v1516
        %v2171 = vunpack.c.h.b16 %v1516
        %v2172 = vunpack.c.l.b16 %v1517
        %v2173 = vunpack.c.h.b16 %v1517
        %v2174 = vunpack.c.l.b16 %v1518
        %v2175 = vunpack.c.h.b16 %v1518
        %v2176 = vunpack.c.l.b16 %v1519
        %v2177 = vunpack.c.h.b16 %v1519
        %v2178 = vunpack.c.l.b16 %v1520
        %v2179 = vunpack.c.h.b16 %v1520
        %v2180 = vunpack.c.l.b16 %v1521
        %v2181 = vunpack.c.h.b16 %v1521
        %v2182 = vunpack.c.l.b16 %v1522
        %v2183 = vunpack.c.h.b16 %v1522
        %v2184 = vunpack.c.l.b16 %v1523
        %v2185 = vunpack.c.h.b16 %v1523
        %v2186 = vunpack.c.l.b16 %v1524
        %v2187 = vunpack.c.h.b16 %v1524
        %v2188 = vunpack.c.l.b16 %v1525
        %v2189 = vunpack.c.h.b16 %v1525
        %v2190 = vunpack.c.l.b16 %v1526
        %v2191 = vunpack.c.h.b16 %v1526
        %v2192 = vunpack.c.l.b16 %v1527
        %v2193 = vunpack.c.h.b16 %v1527
        %v2194 = vunpack.c.l.b16 %v1528
        %v2195 = vunpack.c.h.b16 %v1528
        %v2196 = vunpack.c.l.b16 %v1529
        %v2197 = vunpack.c.h.b16 %v1529
        %v2198 = vunpack.c.l.b16 %v1530
        %v2199 = vunpack.c.h.b16 %v1530
        %v2200 = vunpack.c.l.b16 %v1531
        %v2201 = vunpack.c.h.b16 %v1531
        %v2202 = vunpack.c.l.b16 %v1532
        %v2203 = vunpack.c.h.b16 %v1532
        %v2204 = vunpack.c.l.b16 %v1533
        %v2205 = vunpack.c.h.b16 %v1533
        %v2206 = vunpack.c.l.b16 %v1534
        %v2207 = vunpack.c.h.b16 %v1534
        %v2208 = vunpack.c.l.b16 %v1535
        %v2209 = vunpack.c.h.b16 %v1535
        %v2210 = vunpack.c.l.b16 %v1536
        %v2211 = vunpack.c.h.b16 %v1536
        %v2212 = vunpack.c.l.b16 %v1537
        %v2213 = vunpack.c.h.b16 %v1537
        %v2214 = vunpack.c.l.b16 %v1538
        %v2215 = vunpack.c.h.b16 %v1538
        %v2216 = vunpack.c.l.b16 %v1539
        %v2217 = vunpack.c.h.b16 %v1539
        %v2218 = vunpack.c.l.b16 %v1540
        %v2219 = vunpack.c.h.b16 %v1540
        %v2220 = vunpack.c.l.b16 %v1541
        %v2221 = vunpack.c.h.b16 %v1541
        %v2222 = vunpack.c.l.b16 %v1542
        %v2223 = vunpack.c.h.b16 %v1542
        %v2224 = vunpack.c.l.b16 %v1543
        %v2225 = vunpack.c.h.b16 %v1543
        %v2226 = vunpack.c.l.b16 %v1544
        %v2227 = vunpack.c.h.b16 %v1544
        %v2228 = vunpack.c.l.b16 %v1545
        %v2229 = vunpack.c.h.b16 %v1545
        %v2230 = vunpack.c.l.b16 %v1546
        %v2231 = vunpack.c.h.b16 %v1546
        %v2232 = vunpack.c.l.b16 %v1547
        %v2233 = vunpack.c.h.b16 %v1547
        %v2234 = vunpack.c.l.b16 %v1548
        %v2235 = vunpack.c.h.b16 %v1548
        %v2236 = vunpack.c.l.b16 %v1549
        %v2237 = vunpack.c.h.b16 %v1549
        %v2238 = vunpack.c.l.b16 %v1550
        %v2239 = vunpack.c.h.b16 %v1550
        %v2240 = vunpack.c.l.b16 %v1551
        %v2241 = vunpack.c.h.b16 %v1551
        %v2242 = vunpack.c.l.b16 %v1552
        %v2243 = vunpack.c.h.b16 %v1552
        %v2244 = vunpack.c.l.b16 %v1553
        %v2245 = vunpack.c.h.b16 %v1553
        %v2246 = vunpack.c.l.b16 %v1554
        %v2247 = vunpack.c.h.b16 %v1554
        %v2248 = vunpack.c.l.b16 %v1555
        %v2249 = vunpack.c.h.b16 %v1555
        %v2250 = vunpack.c.l.b16 %v1556
        %v2251 = vunpack.c.h.b16 %v1556
        %v2252 = vunpack.c.l.b16 %v1557
        %v2253 = vunpack.c.h.b16 %v1557
        %v2254 = vunpack.c.l.b16 %v1558
        %v2255 = vunpack.c.h.b16 %v1558
        %v2256 = vunpack.c.l.b16 %v1559
        %v2257 = vunpack.c.h.b16 %v1559
        %v2258 = vunpack.c.l.b16 %v1560
        %v2259 = vunpack.c.h.b16 %v1560
        %v2260 = vunpack.c.l.b16 %v1561
        %v2261 = vunpack.c.h.b16 %v1561
        %v2262 = vunpack.c.l.b16 %v1562
        %v2263 = vunpack.c.h.b16 %v1562
        %v2264 = vunpack.c.l.b16 %v1563
        %v2265 = vunpack.c.h.b16 %v1563
        %v2266 = vunpack.c.l.b16 %v1564
        %v2267 = vunpack.c.h.b16 %v1564
        %v2268 = vunpack.c.l.b16 %v1565
        %v2269 = vunpack.c.h.b16 %v1565
        %v2270 = vunpack.c.l.b16 %v1566
        %v2271 = vunpack.c.h.b16 %v1566
        %v2272 = vunpack.c.l.b16 %v1567
        %v2273 = vunpack.c.h.b16 %v1567
        %v2274 = vunpack.c.l.b16 %v1568
        %v2275 = vunpack.c.h.b16 %v1568
        %v2276 = vunpack.c.l.b16 %v1569
        %v2277 = vunpack.c.h.b16 %v1569
        %v2278 = vunpack.c.l.b16 %v1570
        %v2279 = vunpack.c.h.b16 %v1570
        %v2280 = vunpack.c.l.b16 %v1571
        %v2281 = vunpack.c.h.b16 %v1571
        %v2282 = vunpack.c.l.b16 %v1572
        %v2283 = vunpack.c.h.b16 %v1572
        %v2284 = vunpack.c.l.b16 %v1573
        %v2285 = vunpack.c.h.b16 %v1573
        %v2286 = vunpack.c.l.b16 %v1574
        %v2287 = vunpack.c.h.b16 %v1574
        %v2288 = vunpack.c.l.b16 %v1575
        %v2289 = vunpack.c.h.b16 %v1575
        %v2290 = vunpack.c.l.b16 %v1576
        %v2291 = vunpack.c.h.b16 %v1576
        %v2292 = vunpack.c.l.b16 %v1577
        %v2293 = vunpack.c.h.b16 %v1577
        %v2294 = vunpack.c.l.b16 %v1578
        %v2295 = vunpack.c.h.b16 %v1578
        %v2296 = vunpack.c.l.b16 %v1579
        %v2297 = vunpack.c.h.b16 %v1579
        %v2298 = vunpack.c.l.b16 %v1580
        %v2299 = vunpack.c.h.b16 %v1580
        %v2300 = vunpack.c.l.b16 %v1581
        %v2301 = vunpack.c.h.b16 %v1581
        %v2302 = vunpack.c.l.b16 %v1582
        %v2303 = vunpack.c.h.b16 %v1582
        %v2304 = vunpack.c.l.b16 %v1583
        %v2305 = vunpack.c.h.b16 %v1583
        %v2306 = vunpack.c.l.b16 %v1584
        %v2307 = vunpack.c.h.b16 %v1584
        %v2308 = vunpack.c.l.b16 %v1585
        %v2309 = vunpack.c.h.b16 %v1585
        %v2310 = vunpack.c.l.b16 %v1586
        %v2311 = vunpack.c.h.b16 %v1586
        %v2312 = vunpack.c.l.b16 %v1587
        %v2313 = vunpack.c.h.b16 %v1587
        %v2314 = vunpack.c.l.b16 %v1588
        %v2315 = vunpack.c.h.b16 %v1588
        %v2316 = vunpack.c.l.b16 %v1589
        %v2317 = vunpack.c.h.b16 %v1589
        %v2318 = vunpack.c.l.b16 %v1590
        %v2319 = vunpack.c.h.b16 %v1590
        %v2320 = vunpack.c.l.b16 %v1591
        %v2321 = vunpack.c.h.b16 %v1591
        %v2322 = vunpack.c.l.b16 %v1592
        %v2323 = vunpack.c.h.b16 %v1592
        %v2324 = vunpack.c.l.b16 %v1593
        %v2325 = vunpack.c.h.b16 %v1593
        %v2326 = vunpack.c.l.b16 %v1594
        %v2327 = vunpack.c.h.b16 %v1594
        %v2328 = vunpack.c.l.b16 %v1595
        %v2329 = vunpack.c.h.b16 %v1595
        %v2330 = vunpack.c.l.b16 %v1596
        %v2331 = vunpack.c.h.b16 %v1596
        %v2332 = vunpack.c.l.b16 %v1597
        %v2333 = vunpack.c.h.b16 %v1597
        %v2334 = vunpack.c.l.b16 %v1598
        %v2335 = vunpack.c.h.b16 %v1598
        %v2336 = vunpack.c.l.b16 %v1599
        %v2337 = vunpack.c.h.b16 %v1599
        %v2338 = vunpack.c.l.b16 %v1600
        %v2339 = vunpack.c.h.b16 %v1600
        %v2340 = vunpack.c.l.b16 %v1601
        %v2341 = vunpack.c.h.b16 %v1601
        %v2342 = vunpack.c.l.b16 %v1602
        %v2343 = vunpack.c.h.b16 %v1602
        %v2344 = vunpack.c.l.b16 %v1603
        %v2345 = vunpack.c.h.b16 %v1603
        %v2346 = vunpack.c.l.b16 %v1604
        %v2347 = vunpack.c.h.b16 %v1604
        %v2348 = vunpack.c.l.b16 %v1605
        %v2349 = vunpack.c.h.b16 %v1605
        %v2350 = vunpack.c.l.b16 %v1606
        %v2351 = vunpack.c.h.b16 %v1606
        %v2352 = vunpack.c.l.b16 %v1607
        %v2353 = vunpack.c.h.b16 %v1607
        %v2354 = vunpack.c.l.b16 %v1608
        %v2355 = vunpack.c.h.b16 %v1608
        %v2356 = vunpack.c.l.b16 %v1609
        %v2357 = vunpack.c.h.b16 %v1609
        %v2358 = vunpack.c.l.b16 %v1610
        %v2359 = vunpack.c.h.b16 %v1610
        %v2360 = vunpack.c.l.b16 %v1611
        %v2361 = vunpack.c.h.b16 %v1611
        %v2362 = vunpack.c.l.b16 %v1612
        %v2363 = vunpack.c.h.b16 %v1612
        %v2364 = vunpack.c.l.b16 %v1613
        %v2365 = vunpack.c.h.b16 %v1613
        %v2366 = vunpack.c.l.b16 %v1614
        %v2367 = vunpack.c.h.b16 %v1614
        %v2368 = vunpack.c.l.b16 %v1615
        %v2369 = vunpack.c.h.b16 %v1615
        %v2370 = vunpack.c.l.b16 %v1616
        %v2371 = vunpack.c.h.b16 %v1616
        %v2372 = vunpack.c.l.b16 %v1617
        %v2373 = vunpack.c.h.b16 %v1617
        %v2374 = vunpack.c.l.b16 %v1618
        %v2375 = vunpack.c.h.b16 %v1618
        %v2376 = vunpack.c.l.b16 %v1619
        %v2377 = vunpack.c.h.b16 %v1619
        %v2378 = vunpack.c.l.b16 %v1620
        %v2379 = vunpack.c.h.b16 %v1620
        %v2380 = vunpack.c.l.b16 %v1621
        %v2381 = vunpack.c.h.b16 %v1621
        %v2382 = vunpack.c.l.b16 %v1622
        %v2383 = vunpack.c.h.b16 %v1622
        %v2384 = vunpack.c.l.b16 %v1623
        %v2385 = vunpack.c.h.b16 %v1623
        %v2386 = vunpack.c.l.b16 %v1624
        %v2387 = vunpack.c.h.b16 %v1624
        %v2388 = vunpack.c.l.b16 %v1625
        %v2389 = vunpack.c.h.b16 %v1625
        %v2390 = vunpack.c.l.b16 %v1626
        %v2391 = vunpack.c.h.b16 %v1626
        %v2392 = vunpack.c.l.b16 %v1627
        %v2393 = vunpack.c.h.b16 %v1627
        %v2394 = vunpack.c.l.b16 %v1628
        %v2395 = vunpack.c.h.b16 %v1628
        %v2396 = vunpack.c.l.b16 %v1629
        %v2397 = vunpack.c.h.b16 %v1629
        %v2398 = vpack.c.b16 %v1894, %v1886
        %v2399 = vpack.c.b16 %v1895, %v1887
        %v2400 = vpack.c.b16 %v1896, %v1888
        %v2401 = vpack.c.b16 %v1897, %v1889
        %v2402 = vpack.c.b16 %v1898, %v1890
        %v2403 = vpack.c.b16 %v1899, %v1891
        %v2404 = vpack.c.b16 %v1900, %v1892
        %v2405 = vpack.c.b16 %v1901, %v1893
        %v2406 = vpack.c.b16 %v1910, %v1902
        %v2407 = vpack.c.b16 %v1911, %v1903
        %v2408 = vpack.c.b16 %v1912, %v1904
        %v2409 = vpack.c.b16 %v1913, %v1905
        %v2410 = vpack.c.b16 %v1914, %v1906
        %v2411 = vpack.c.b16 %v1915, %v1907
        %v2412 = vpack.c.b16 %v1916, %v1908
        %v2413 = vpack.c.b16 %v1917, %v1909
        %v2414 = vpack.c.b16 %v1926, %v1918
        %v2415 = vpack.c.b16 %v1927, %v1919
        %v2416 = vpack.c.b16 %v1928, %v1920
        %v2417 = vpack.c.b16 %v1929, %v1921
        %v2418 = vpack.c.b16 %v1930, %v1922
        %v2419 = vpack.c.b16 %v1931, %v1923
        %v2420 = vpack.c.b16 %v1932, %v1924
        %v2421 = vpack.c.b16 %v1933, %v1925
        %v2422 = vpack.c.b16 %v1942, %v1934
        %v2423 = vpack.c.b16 %v1943, %v1935
        %v2424 = vpack.c.b16 %v1944, %v1936
        %v2425 = vpack.c.b16 %v1945, %v1937
        %v2426 = vpack.c.b16 %v1946, %v1938
        %v2427 = vpack.c.b16 %v1947, %v1939
        %v2428 = vpack.c.b16 %v1948, %v1940
        %v2429 = vpack.c.b16 %v1949, %v1941
        %v2430 = vpack.c.b16 %v1958, %v1950
        %v2431 = vpack.c.b16 %v1959, %v1951
        %v2432 = vpack.c.b16 %v1960, %v1952
        %v2433 = vpack.c.b16 %v1961, %v1953
        %v2434 = vpack.c.b16 %v1962, %v1954
        %v2435 = vpack.c.b16 %v1963, %v1955
        %v2436 = vpack.c.b16 %v1964, %v1956
        %v2437 = vpack.c.b16 %v1965, %v1957
        %v2438 = vpack.c.b16 %v1974, %v1966
        %v2439 = vpack.c.b16 %v1975, %v1967
        %v2440 = vpack.c.b16 %v1976, %v1968
        %v2441 = vpack.c.b16 %v1977, %v1969
        %v2442 = vpack.c.b16 %v1978, %v1970
        %v2443 = vpack.c.b16 %v1979, %v1971
        %v2444 = vpack.c.b16 %v1980, %v1972
        %v2445 = vpack.c.b16 %v1981, %v1973
        %v2446 = vpack.c.b16 %v1990, %v1982
        %v2447 = vpack.c.b16 %v1991, %v1983
        %v2448 = vpack.c.b16 %v1992, %v1984
        %v2449 = vpack.c.b16 %v1993, %v1985
        %v2450 = vpack.c.b16 %v1994, %v1986
        %v2451 = vpack.c.b16 %v1995, %v1987
        %v2452 = vpack.c.b16 %v1996, %v1988
        %v2453 = vpack.c.b16 %v1997, %v1989
        %v2454 = vpack.c.b16 %v2006, %v1998
        %v2455 = vpack.c.b16 %v2007, %v1999
        %v2456 = vpack.c.b16 %v2008, %v2000
        %v2457 = vpack.c.b16 %v2009, %v2001
        %v2458 = vpack.c.b16 %v2010, %v2002
        %v2459 = vpack.c.b16 %v2011, %v2003
        %v2460 = vpack.c.b16 %v2012, %v2004
        %v2461 = vpack.c.b16 %v2013, %v2005
        %v2462 = vpack.c.b16 %v2022, %v2014
        %v2463 = vpack.c.b16 %v2023, %v2015
        %v2464 = vpack.c.b16 %v2024, %v2016
        %v2465 = vpack.c.b16 %v2025, %v2017
        %v2466 = vpack.c.b16 %v2026, %v2018
        %v2467 = vpack.c.b16 %v2027, %v2019
        %v2468 = vpack.c.b16 %v2028, %v2020
        %v2469 = vpack.c.b16 %v2029, %v2021
        %v2470 = vpack.c.b16 %v2038, %v2030
        %v2471 = vpack.c.b16 %v2039, %v2031
        %v2472 = vpack.c.b16 %v2040, %v2032
        %v2473 = vpack.c.b16 %v2041, %v2033
        %v2474 = vpack.c.b16 %v2042, %v2034
        %v2475 = vpack.c.b16 %v2043, %v2035
        %v2476 = vpack.c.b16 %v2044, %v2036
        %v2477 = vpack.c.b16 %v2045, %v2037
        %v2478 = vpack.c.b16 %v2054, %v2046
        %v2479 = vpack.c.b16 %v2055, %v2047
        %v2480 = vpack.c.b16 %v2056, %v2048
        %v2481 = vpack.c.b16 %v2057, %v2049
        %v2482 = vpack.c.b16 %v2058, %v2050
        %v2483 = vpack.c.b16 %v2059, %v2051
        %v2484 = vpack.c.b16 %v2060, %v2052
        %v2485 = vpack.c.b16 %v2061, %v2053
        %v2486 = vpack.c.b16 %v2070, %v2062
        %v2487 = vpack.c.b16 %v2071, %v2063
        %v2488 = vpack.c.b16 %v2072, %v2064
        %v2489 = vpack.c.b16 %v2073, %v2065
        %v2490 = vpack.c.b16 %v2074, %v2066
        %v2491 = vpack.c.b16 %v2075, %v2067
        %v2492 = vpack.c.b16 %v2076, %v2068
        %v2493 = vpack.c.b16 %v2077, %v2069
        %v2494 = vpack.c.b16 %v2086, %v2078
        %v2495 = vpack.c.b16 %v2087, %v2079
        %v2496 = vpack.c.b16 %v2088, %v2080
        %v2497 = vpack.c.b16 %v2089, %v2081
        %v2498 = vpack.c.b16 %v2090, %v2082
        %v2499 = vpack.c.b16 %v2091, %v2083
        %v2500 = vpack.c.b16 %v2092, %v2084
        %v2501 = vpack.c.b16 %v2093, %v2085
        %v2502 = vpack.c.b16 %v2102, %v2094
        %v2503 = vpack.c.b16 %v2103, %v2095
        %v2504 = vpack.c.b16 %v2104, %v2096
        %v2505 = vpack.c.b16 %v2105, %v2097
        %v2506 = vpack.c.b16 %v2106, %v2098
        %v2507 = vpack.c.b16 %v2107, %v2099
        %v2508 = vpack.c.b16 %v2108, %v2100
        %v2509 = vpack.c.b16 %v2109, %v2101
        %v2510 = vpack.c.b16 %v2118, %v2110
        %v2511 = vpack.c.b16 %v2119, %v2111
        %v2512 = vpack.c.b16 %v2120, %v2112
        %v2513 = vpack.c.b16 %v2121, %v2113
        %v2514 = vpack.c.b16 %v2122, %v2114
        %v2515 = vpack.c.b16 %v2123, %v2115
        %v2516 = vpack.c.b16 %v2124, %v2116
        %v2517 = vpack.c.b16 %v2125, %v2117
        %v2518 = vpack.c.b16 %v2134, %v2126
        %v2519 = vpack.c.b16 %v2135, %v2127
        %v2520 = vpack.c.b16 %v2136, %v2128
        %v2521 = vpack.c.b16 %v2137, %v2129
        %v2522 = vpack.c.b16 %v2138, %v2130
        %v2523 = vpack.c.b16 %v2139, %v2131
        %v2524 = vpack.c.b16 %v2140, %v2132
        %v2525 = vpack.c.b16 %v2141, %v2133
        %v2526 = vpack.c.b16 %v2150, %v2142
        %v2527 = vpack.c.b16 %v2151, %v2143
        %v2528 = vpack.c.b16 %v2152, %v2144
        %v2529 = vpack.c.b16 %v2153, %v2145
        %v2530 = vpack.c.b16 %v2154, %v2146
        %v2531 = vpack.c.b16 %v2155, %v2147
        %v2532 = vpack.c.b16 %v2156, %v2148
        %v2533 = vpack.c.b16 %v2157, %v2149
        %v2534 = vpack.c.b16 %v2166, %v2158
        %v2535 = vpack.c.b16 %v2167, %v2159
        %v2536 = vpack.c.b16 %v2168, %v2160
        %v2537 = vpack.c.b16 %v2169, %v2161
        %v2538 = vpack.c.b16 %v2170, %v2162
        %v2539 = vpack.c.b16 %v2171, %v2163
        %v2540 = vpack.c.b16 %v2172, %v2164
        %v2541 = vpack.c.b16 %v2173, %v2165
        %v2542 = vpack.c.b16 %v2182, %v2174
        %v2543 = vpack.c.b16 %v2183, %v2175
        %v2544 = vpack.c.b16 %v2184, %v2176
        %v2545 = vpack.c.b16 %v2185, %v2177
        %v2546 = vpack.c.b16 %v2186, %v2178
        %v2547 = vpack.c.b16 %v2187, %v2179
        %v2548 = vpack.c.b16 %v2188, %v2180
        %v2549 = vpack.c.b16 %v2189, %v2181
        %v2550 = vpack.c.b16 %v2198, %v2190
        %v2551 = vpack.c.b16 %v2199, %v2191
        %v2552 = vpack.c.b16 %v2200, %v2192
        %v2553 = vpack.c.b16 %v2201, %v2193
        %v2554 = vpack.c.b16 %v2202, %v2194
        %v2555 = vpack.c.b16 %v2203, %v2195
        %v2556 = vpack.c.b16 %v2204, %v2196
        %v2557 = vpack.c.b16 %v2205, %v2197
        %v2558 = vpack.c.b16 %v2214, %v2206
        %v2559 = vpack.c.b16 %v2215, %v2207
        %v2560 = vpack.c.b16 %v2216, %v2208
        %v2561 = vpack.c.b16 %v2217, %v2209
        %v2562 = vpack.c.b16 %v2218, %v2210
        %v2563 = vpack.c.b16 %v2219, %v2211
        %v2564 = vpack.c.b16 %v2220, %v2212
        %v2565 = vpack.c.b16 %v2221, %v2213
        %v2566 = vpack.c.b16 %v2230, %v2222
        %v2567 = vpack.c.b16 %v2231, %v2223
        %v2568 = vpack.c.b16 %v2232, %v2224
        %v2569 = vpack.c.b16 %v2233, %v2225
        %v2570 = vpack.c.b16 %v2234, %v2226
        %v2571 = vpack.c.b16 %v2235, %v2227
        %v2572 = vpack.c.b16 %v2236, %v2228
        %v2573 = vpack.c.b16 %v2237, %v2229
        %v2574 = vpack.c.b16 %v2246, %v2238
        %v2575 = vpack.c.b16 %v2247, %v2239
        %v2576 = vpack.c.b16 %v2248, %v2240
        %v2577 = vpack.c.b16 %v2249, %v2241
        %v2578 = vpack.c.b16 %v2250, %v2242
        %v2579 = vpack.c.b16 %v2251, %v2243
        %v2580 = vpack.c.b16 %v2252, %v2244
        %v2581 = vpack.c.b16 %v2253, %v2245
        %v2582 = vpack.c.b16 %v2262, %v2254
        %v2583 = vpack.c.b16 %v2263, %v2255
        %v2584 = vpack.c.b16 %v2264, %v2256
        %v2585 = vpack.c.b16 %v2265, %v2257
        %v2586 = vpack.c.b16 %v2266, %v2258
        %v2587 = vpack.c.b16 %v2267, %v2259
        %v2588 = vpack.c.b16 %v2268, %v2260
        %v2589 = vpack.c.b16 %v2269, %v2261
        %v2590 = vpack.c.b16 %v2278, %v2270
        %v2591 = vpack.c.b16 %v2279, %v2271
        %v2592 = vpack.c.b16 %v2280, %v2272
        %v2593 = vpack.c.b16 %v2281, %v2273
        %v2594 = vpack.c.b16 %v2282, %v2274
        %v2595 = vpack.c.b16 %v2283, %v2275
        %v2596 = vpack.c.b16 %v2284, %v2276
        %v2597 = vpack.c.b16 %v2285, %v2277
        %v2598 = vpack.c.b16 %v2294, %v2286
        %v2599 = vpack.c.b16 %v2295, %v2287
        %v2600 = vpack.c.b16 %v2296, %v2288
        %v2601 = vpack.c.b16 %v2297, %v2289
        %v2602 = vpack.c.b16 %v2298, %v2290
        %v2603 = vpack.c.b16 %v2299, %v2291
        %v2604 = vpack.c.b16 %v2300, %v2292
        %v2605 = vpack.c.b16 %v2301, %v2293
        %v2606 = vpack.c.b16 %v2310, %v2302
        %v2607 = vpack.c.b16 %v2311, %v2303
        %v2608 = vpack.c.b16 %v2312, %v2304
        %v2609 = vpack.c.b16 %v2313, %v2305
        %v2610 = vpack.c.b16 %v2314, %v2306
        %v2611 = vpack.c.b16 %v2315, %v2307
        %v2612 = vpack.c.b16 %v2316, %v2308
        %v2613 = vpack.c.b16 %v2317, %v2309
        %v2614 = vpack.c.b16 %v2326, %v2318
        %v2615 = vpack.c.b16 %v2327, %v2319
        %v2616 = vpack.c.b16 %v2328, %v2320
        %v2617 = vpack.c.b16 %v2329, %v2321
        %v2618 = vpack.c.b16 %v2330, %v2322
        %v2619 = vpack.c.b16 %v2331, %v2323
        %v2620 = vpack.c.b16 %v2332, %v2324
        %v2621 = vpack.c.b16 %v2333, %v2325
        %v2622 = vpack.c.b16 %v2342, %v2334
        %v2623 = vpack.c.b16 %v2343, %v2335
        %v2624 = vpack.c.b16 %v2344, %v2336
        %v2625 = vpack.c.b16 %v2345, %v2337
        %v2626 = vpack.c.b16 %v2346, %v2338
        %v2627 = vpack.c.b16 %v2347, %v2339
        %v2628 = vpack.c.b16 %v2348, %v2340
        %v2629 = vpack.c.b16 %v2349, %v2341
        %v2630 = vpack.c.b16 %v2358, %v2350
        %v2631 = vpack.c.b16 %v2359, %v2351
        %v2632 = vpack.c.b16 %v2360, %v2352
        %v2633 = vpack.c.b16 %v2361, %v2353
        %v2634 = vpack.c.b16 %v2362, %v2354
        %v2635 = vpack.c.b16 %v2363, %v2355
        %v2636 = vpack.c.b16 %v2364, %v2356
        %v2637 = vpack.c.b16 %v2365, %v2357
        %v2638 = vpack.c.b16 %v2374, %v2366
        %v2639 = vpack.c.b16 %v2375, %v2367
        %v2640 = vpack.c.b16 %v2376, %v2368
        %v2641 = vpack.c.b16 %v2377, %v2369
        %v2642 = vpack.c.b16 %v2378, %v2370
        %v2643 = vpack.c.b16 %v2379, %v2371
        %v2644 = vpack.c.b16 %v2380, %v2372
        %v2645 = vpack.c.b16 %v2381, %v2373
        %v2646 = vpack.c.b16 %v2390, %v2382
        %v2647 = vpack.c.b16 %v2391, %v2383
        %v2648 = vpack.c.b16 %v2392, %v2384
        %v2649 = vpack.c.b16 %v2393, %v2385
        %v2650 = vpack.c.b16 %v2394, %v2386
        %v2651 = vpack.c.b16 %v2395, %v2387
        %v2652 = vpack.c.b16 %v2396, %v2388
        %v2653 = vpack.c.b16 %v2397, %v2389
        %2910 = vmatpush.bf16.msra.mxu0 %v2454
        %2911 = vmatpush.bf16.msra.mxu0 %v2446
        %2912 = vmatpush.bf16.msra.mxu0 %v2438
        %2913 = vmatpush.bf16.msra.mxu0 %v2430
        %2914 = vmatpush.bf16.msra.mxu0 %v2422
        %2915 = vmatpush.bf16.msra.mxu0 %v2414
        %2916 = vmatpush.bf16.msra.mxu0 %v2406
        %2917 = vmatpush.bf16.msra.mxu0 %v2398
        %2918 = vmatmul.bf16.gmra.mxu0 %v1370
        %v2919 = vpop.f32.mrf.mxu0
        %v2920 = vadd.f32 0.0, %v2919
        %v2921 = vpop.f32.mrf.mxu0
        %2922 = vdwg.mxu0
        %2923 = vmatpush.bf16.msra.mxu0 %v2518
        %2924 = vmatpush.bf16.msra.mxu0 %v2510
        %2925 = vmatpush.bf16.msra.mxu0 %v2502
        %2926 = vmatpush.bf16.msra.mxu0 %v2494
        %2927 = vmatpush.bf16.msra.mxu0 %v2486
        %2928 = vmatpush.bf16.msra.mxu0 %v2478
        %2929 = vmatpush.bf16.msra.mxu0 %v2470
        %2930 = vmatpush.bf16.msra.mxu0 %v2462
        %2931 = vmatmul.bf16.gmra.mxu0 %v1371
        %v2932 = vpop.f32.mrf.mxu0
        %v2933 = vadd.f32 %v2920, %v2932
        %v2934 = vpop.f32.mrf.mxu0
        %2935 = vdwg.mxu0
        %2936 = vmatpush.bf16.msra.mxu0 %v2582
        %2937 = vmatpush.bf16.msra.mxu0 %v2574
        %2938 = vmatpush.bf16.msra.mxu0 %v2566
        %2939 = vmatpush.bf16.msra.mxu0 %v2558
        %2940 = vmatpush.bf16.msra.mxu0 %v2550
        %2941 = vmatpush.bf16.msra.mxu0 %v2542
        %2942 = vmatpush.bf16.msra.mxu0 %v2534
        %2943 = vmatpush.bf16.msra.mxu0 %v2526
        %2944 = vmatmul.bf16.gmra.mxu0 %v1372
        %v2945 = vpop.f32.mrf.mxu0
        %v2946 = vadd.f32 %v2933, %v2945
        %v2947 = vpop.f32.mrf.mxu0
        %2948 = vdwg.mxu0
        %2949 = vmatpush.bf16.msra.mxu0 %v2646
        %2950 = vmatpush.bf16.msra.mxu0 %v2638
        %2951 = vmatpush.bf16.msra.mxu0 %v2630
        %2952 = vmatpush.bf16.msra.mxu0 %v2622
        %2953 = vmatpush.bf16.msra.mxu0 %v2614
        %2954 = vmatpush.bf16.msra.mxu0 %v2606
        %2955 = vmatpush.bf16.msra.mxu0 %v2598
        %2956 = vmatpush.bf16.msra.mxu0 %v2590
        %2957 = vmatmul.bf16.gmra.mxu0 %v1373
        %v2958 = vpop.f32.mrf.mxu0
        %v2959 = vadd.f32 %v2946, %v2958
        %v2960 = vpop.f32.mrf.mxu0
        %2961 = vdwg.mxu0
        %2962 = vmatpush.bf16.msra.mxu0 %v2455
        %2963 = vmatpush.bf16.msra.mxu0 %v2447
        %2964 = vmatpush.bf16.msra.mxu0 %v2439
        %2965 = vmatpush.bf16.msra.mxu0 %v2431
        %2966 = vmatpush.bf16.msra.mxu0 %v2423
        %2967 = vmatpush.bf16.msra.mxu0 %v2415
        %2968 = vmatpush.bf16.msra.mxu0 %v2407
        %2969 = vmatpush.bf16.msra.mxu0 %v2399
        %2970 = vmatmul.bf16.gmra.mxu0 %v1370
        %v2971 = vpop.f32.mrf.mxu0
        %v2972 = vadd.f32 0.0, %v2971
        %v2973 = vpop.f32.mrf.mxu0
        %2974 = vdwg.mxu0
        %2975 = vmatpush.bf16.msra.mxu0 %v2519
        %2976 = vmatpush.bf16.msra.mxu0 %v2511
        %2977 = vmatpush.bf16.msra.mxu0 %v2503
        %2978 = vmatpush.bf16.msra.mxu0 %v2495
        %2979 = vmatpush.bf16.msra.mxu0 %v2487
        %2980 = vmatpush.bf16.msra.mxu0 %v2479
        %2981 = vmatpush.bf16.msra.mxu0 %v2471
        %2982 = vmatpush.bf16.msra.mxu0 %v2463
        %2983 = vmatmul.bf16.gmra.mxu0 %v1371
        %v2984 = vpop.f32.mrf.mxu0
        %v2985 = vadd.f32 %v2972, %v2984
        %v2986 = vpop.f32.mrf.mxu0
        %2987 = vdwg.mxu0
        %2988 = vmatpush.bf16.msra.mxu0 %v2583
        %2989 = vmatpush.bf16.msra.mxu0 %v2575
        %2990 = vmatpush.bf16.msra.mxu0 %v2567
        %2991 = vmatpush.bf16.msra.mxu0 %v2559
        %2992 = vmatpush.bf16.msra.mxu0 %v2551
        %2993 = vmatpush.bf16.msra.mxu0 %v2543
        %2994 = vmatpush.bf16.msra.mxu0 %v2535
        %2995 = vmatpush.bf16.msra.mxu0 %v2527
        %2996 = vmatmul.bf16.gmra.mxu0 %v1372
        %v2997 = vpop.f32.mrf.mxu0
        %v2998 = vadd.f32 %v2985, %v2997
        %v2999 = vpop.f32.mrf.mxu0
        %3000 = vdwg.mxu0
        %3001 = vmatpush.bf16.msra.mxu0 %v2647
        %3002 = vmatpush.bf16.msra.mxu0 %v2639
        %3003 = vmatpush.bf16.msra.mxu0 %v2631
        %3004 = vmatpush.bf16.msra.mxu0 %v2623
        %3005 = vmatpush.bf16.msra.mxu0 %v2615
        %3006 = vmatpush.bf16.msra.mxu0 %v2607
        %3007 = vmatpush.bf16.msra.mxu0 %v2599
        %3008 = vmatpush.bf16.msra.mxu0 %v2591
        %3009 = vmatmul.bf16.gmra.mxu0 %v1373
        %v3010 = vpop.f32.mrf.mxu0
        %v3011 = vadd.f32 %v2998, %v3010
        %v3012 = vpop.f32.mrf.mxu0
        %3013 = vdwg.mxu0
        %3014 = vmatpush.bf16.msra.mxu0 %v2456
        %3015 = vmatpush.bf16.msra.mxu0 %v2448
        %3016 = vmatpush.bf16.msra.mxu0 %v2440
        %3017 = vmatpush.bf16.msra.mxu0 %v2432
        %3018 = vmatpush.bf16.msra.mxu0 %v2424
        %3019 = vmatpush.bf16.msra.mxu0 %v2416
        %3020 = vmatpush.bf16.msra.mxu0 %v2408
        %3021 = vmatpush.bf16.msra.mxu0 %v2400
        %3022 = vmatmul.bf16.gmra.mxu0 %v1370
        %v3023 = vpop.f32.mrf.mxu0
        %v3024 = vadd.f32 0.0, %v3023
        %v3025 = vpop.f32.mrf.mxu0
        %3026 = vdwg.mxu0
        %3027 = vmatpush.bf16.msra.mxu0 %v2520
        %3028 = vmatpush.bf16.msra.mxu0 %v2512
        %3029 = vmatpush.bf16.msra.mxu0 %v2504
        %3030 = vmatpush.bf16.msra.mxu0 %v2496
        %3031 = vmatpush.bf16.msra.mxu0 %v2488
        %3032 = vmatpush.bf16.msra.mxu0 %v2480
        %3033 = vmatpush.bf16.msra.mxu0 %v2472
        %3034 = vmatpush.bf16.msra.mxu0 %v2464
        %3035 = vmatmul.bf16.gmra.mxu0 %v1371
        %v3036 = vpop.f32.mrf.mxu0
        %v3037 = vadd.f32 %v3024, %v3036
        %v3038 = vpop.f32.mrf.mxu0
        %3039 = vdwg.mxu0
        %3040 = vmatpush.bf16.msra.mxu0 %v2584
        %3041 = vmatpush.bf16.msra.mxu0 %v2576
        %3042 = vmatpush.bf16.msra.mxu0 %v2568
        %3043 = vmatpush.bf16.msra.mxu0 %v2560
        %3044 = vmatpush.bf16.msra.mxu0 %v2552
        %3045 = vmatpush.bf16.msra.mxu0 %v2544
        %3046 = vmatpush.bf16.msra.mxu0 %v2536
        %3047 = vmatpush.bf16.msra.mxu0 %v2528
        %3048 = vmatmul.bf16.gmra.mxu0 %v1372
        %v3049 = vpop.f32.mrf.mxu0
        %v3050 = vadd.f32 %v3037, %v3049
        %v3051 = vpop.f32.mrf.mxu0
        %3052 = vdwg.mxu0
        %3053 = vmatpush.bf16.msra.mxu0 %v2648
        %3054 = vmatpush.bf16.msra.mxu0 %v2640
        %3055 = vmatpush.bf16.msra.mxu0 %v2632
        %3056 = vmatpush.bf16.msra.mxu0 %v2624
        %3057 = vmatpush.bf16.msra.mxu0 %v2616
        %3058 = vmatpush.bf16.msra.mxu0 %v2608
        %3059 = vmatpush.bf16.msra.mxu0 %v2600
        %3060 = vmatpush.bf16.msra.mxu0 %v2592
        %3061 = vmatmul.bf16.gmra.mxu0 %v1373
        %v3062 = vpop.f32.mrf.mxu0
        %v3063 = vadd.f32 %v3050, %v3062
        %v3064 = vpop.f32.mrf.mxu0
        %3065 = vdwg.mxu0
        %3066 = vmatpush.bf16.msra.mxu0 %v2457
        %3067 = vmatpush.bf16.msra.mxu0 %v2449
        %3068 = vmatpush.bf16.msra.mxu0 %v2441
        %3069 = vmatpush.bf16.msra.mxu0 %v2433
        %3070 = vmatpush.bf16.msra.mxu0 %v2425
        %3071 = vmatpush.bf16.msra.mxu0 %v2417
        %3072 = vmatpush.bf16.msra.mxu0 %v2409
        %3073 = vmatpush.bf16.msra.mxu0 %v2401
        %3074 = vmatmul.bf16.gmra.mxu0 %v1370
        %v3075 = vpop.f32.mrf.mxu0
        %v3076 = vadd.f32 0.0, %v3075
        %v3077 = vpop.f32.mrf.mxu0
        %3078 = vdwg.mxu0
        %3079 = vmatpush.bf16.msra.mxu0 %v2521
        %3080 = vmatpush.bf16.msra.mxu0 %v2513
        %3081 = vmatpush.bf16.msra.mxu0 %v2505
        %3082 = vmatpush.bf16.msra.mxu0 %v2497
        %3083 = vmatpush.bf16.msra.mxu0 %v2489
        %3084 = vmatpush.bf16.msra.mxu0 %v2481
        %3085 = vmatpush.bf16.msra.mxu0 %v2473
        %3086 = vmatpush.bf16.msra.mxu0 %v2465
        %3087 = vmatmul.bf16.gmra.mxu0 %v1371
        %v3088 = vpop.f32.mrf.mxu0
        %v3089 = vadd.f32 %v3076, %v3088
        %v3090 = vpop.f32.mrf.mxu0
        %3091 = vdwg.mxu0
        %3092 = vmatpush.bf16.msra.mxu0 %v2585
        %3093 = vmatpush.bf16.msra.mxu0 %v2577
        %3094 = vmatpush.bf16.msra.mxu0 %v2569
        %3095 = vmatpush.bf16.msra.mxu0 %v2561
        %3096 = vmatpush.bf16.msra.mxu0 %v2553
        %3097 = vmatpush.bf16.msra.mxu0 %v2545
        %3098 = vmatpush.bf16.msra.mxu0 %v2537
        %3099 = vmatpush.bf16.msra.mxu0 %v2529
        %3100 = vmatmul.bf16.gmra.mxu0 %v1372
        %v3101 = vpop.f32.mrf.mxu0
        %v3102 = vadd.f32 %v3089, %v3101
        %v3103 = vpop.f32.mrf.mxu0
        %3104 = vdwg.mxu0
        %3105 = vmatpush.bf16.msra.mxu0 %v2649
        %3106 = vmatpush.bf16.msra.mxu0 %v2641
        %3107 = vmatpush.bf16.msra.mxu0 %v2633
        %3108 = vmatpush.bf16.msra.mxu0 %v2625
        %3109 = vmatpush.bf16.msra.mxu0 %v2617
        %3110 = vmatpush.bf16.msra.mxu0 %v2609
        %3111 = vmatpush.bf16.msra.mxu0 %v2601
        %3112 = vmatpush.bf16.msra.mxu0 %v2593
        %3113 = vmatmul.bf16.gmra.mxu0 %v1373
        %v3114 = vpop.f32.mrf.mxu0
        %v3115 = vadd.f32 %v3102, %v3114
        %v3116 = vpop.f32.mrf.mxu0
        %3117 = vdwg.mxu0
        %3118 = vmatpush.bf16.msra.mxu0 %v2458
        %3119 = vmatpush.bf16.msra.mxu0 %v2450
        %3120 = vmatpush.bf16.msra.mxu0 %v2442
        %3121 = vmatpush.bf16.msra.mxu0 %v2434
        %3122 = vmatpush.bf16.msra.mxu0 %v2426
        %3123 = vmatpush.bf16.msra.mxu0 %v2418
        %3124 = vmatpush.bf16.msra.mxu0 %v2410
        %3125 = vmatpush.bf16.msra.mxu0 %v2402
        %3126 = vmatmul.bf16.gmra.mxu0 %v1370
        %v3127 = vpop.f32.mrf.mxu0
        %v3128 = vadd.f32 0.0, %v3127
        %v3129 = vpop.f32.mrf.mxu0
        %3130 = vdwg.mxu0
        %3131 = vmatpush.bf16.msra.mxu0 %v2522
        %3132 = vmatpush.bf16.msra.mxu0 %v2514
        %3133 = vmatpush.bf16.msra.mxu0 %v2506
        %3134 = vmatpush.bf16.msra.mxu0 %v2498
        %3135 = vmatpush.bf16.msra.mxu0 %v2490
        %3136 = vmatpush.bf16.msra.mxu0 %v2482
        %3137 = vmatpush.bf16.msra.mxu0 %v2474
        %3138 = vmatpush.bf16.msra.mxu0 %v2466
        %3139 = vmatmul.bf16.gmra.mxu0 %v1371
        %v3140 = vpop.f32.mrf.mxu0
        %v3141 = vadd.f32 %v3128, %v3140
        %v3142 = vpop.f32.mrf.mxu0
        %3143 = vdwg.mxu0
        %3144 = vmatpush.bf16.msra.mxu0 %v2586
        %3145 = vmatpush.bf16.msra.mxu0 %v2578
        %3146 = vmatpush.bf16.msra.mxu0 %v2570
        %3147 = vmatpush.bf16.msra.mxu0 %v2562
        %3148 = vmatpush.bf16.msra.mxu0 %v2554
        %3149 = vmatpush.bf16.msra.mxu0 %v2546
        %3150 = vmatpush.bf16.msra.mxu0 %v2538
        %3151 = vmatpush.bf16.msra.mxu0 %v2530
        %3152 = vmatmul.bf16.gmra.mxu0 %v1372
        %v3153 = vpop.f32.mrf.mxu0
        %v3154 = vadd.f32 %v3141, %v3153
        %v3155 = vpop.f32.mrf.mxu0
        %3156 = vdwg.mxu0
        %3157 = vmatpush.bf16.msra.mxu0 %v2650
        %3158 = vmatpush.bf16.msra.mxu0 %v2642
        %3159 = vmatpush.bf16.msra.mxu0 %v2634
        %3160 = vmatpush.bf16.msra.mxu0 %v2626
        %3161 = vmatpush.bf16.msra.mxu0 %v2618
        %3162 = vmatpush.bf16.msra.mxu0 %v2610
        %3163 = vmatpush.bf16.msra.mxu0 %v2602
        %3164 = vmatpush.bf16.msra.mxu0 %v2594
        %3165 = vmatmul.bf16.gmra.mxu0 %v1373
        %v3166 = vpop.f32.mrf.mxu0
        %v3167 = vadd.f32 %v3154, %v3166
        %v3168 = vpop.f32.mrf.mxu0
        %3169 = vdwg.mxu0
        %3170 = vmatpush.bf16.msra.mxu0 %v2459
        %3171 = vmatpush.bf16.msra.mxu0 %v2451
        %3172 = vmatpush.bf16.msra.mxu0 %v2443
        %3173 = vmatpush.bf16.msra.mxu0 %v2435
        %3174 = vmatpush.bf16.msra.mxu0 %v2427
        %3175 = vmatpush.bf16.msra.mxu0 %v2419
        %3176 = vmatpush.bf16.msra.mxu0 %v2411
        %3177 = vmatpush.bf16.msra.mxu0 %v2403
        %3178 = vmatmul.bf16.gmra.mxu0 %v1370
        %v3179 = vpop.f32.mrf.mxu0
        %v3180 = vadd.f32 0.0, %v3179
        %v3181 = vpop.f32.mrf.mxu0
        %3182 = vdwg.mxu0
        %3183 = vmatpush.bf16.msra.mxu0 %v2523
        %3184 = vmatpush.bf16.msra.mxu0 %v2515
        %3185 = vmatpush.bf16.msra.mxu0 %v2507
        %3186 = vmatpush.bf16.msra.mxu0 %v2499
        %3187 = vmatpush.bf16.msra.mxu0 %v2491
        %3188 = vmatpush.bf16.msra.mxu0 %v2483
        %3189 = vmatpush.bf16.msra.mxu0 %v2475
        %3190 = vmatpush.bf16.msra.mxu0 %v2467
        %3191 = vmatmul.bf16.gmra.mxu0 %v1371
        %v3192 = vpop.f32.mrf.mxu0
        %v3193 = vadd.f32 %v3180, %v3192
        %v3194 = vpop.f32.mrf.mxu0
        %3195 = vdwg.mxu0
        %3196 = vmatpush.bf16.msra.mxu0 %v2587
        %3197 = vmatpush.bf16.msra.mxu0 %v2579
        %3198 = vmatpush.bf16.msra.mxu0 %v2571
        %3199 = vmatpush.bf16.msra.mxu0 %v2563
        %3200 = vmatpush.bf16.msra.mxu0 %v2555
        %3201 = vmatpush.bf16.msra.mxu0 %v2547
        %3202 = vmatpush.bf16.msra.mxu0 %v2539
        %3203 = vmatpush.bf16.msra.mxu0 %v2531
        %3204 = vmatmul.bf16.gmra.mxu0 %v1372
        %v3205 = vpop.f32.mrf.mxu0
        %v3206 = vadd.f32 %v3193, %v3205
        %v3207 = vpop.f32.mrf.mxu0
        %3208 = vdwg.mxu0
        %3209 = vmatpush.bf16.msra.mxu0 %v2651
        %3210 = vmatpush.bf16.msra.mxu0 %v2643
        %3211 = vmatpush.bf16.msra.mxu0 %v2635
        %3212 = vmatpush.bf16.msra.mxu0 %v2627
        %3213 = vmatpush.bf16.msra.mxu0 %v2619
        %3214 = vmatpush.bf16.msra.mxu0 %v2611
        %3215 = vmatpush.bf16.msra.mxu0 %v2603
        %3216 = vmatpush.bf16.msra.mxu0 %v2595
        %3217 = vmatmul.bf16.gmra.mxu0 %v1373
        %v3218 = vpop.f32.mrf.mxu0
        %v3219 = vadd.f32 %v3206, %v3218
        %v3220 = vpop.f32.mrf.mxu0
        %3221 = vdwg.mxu0
        %3222 = vmatpush.bf16.msra.mxu0 %v2460
        %3223 = vmatpush.bf16.msra.mxu0 %v2452
        %3224 = vmatpush.bf16.msra.mxu0 %v2444
        %3225 = vmatpush.bf16.msra.mxu0 %v2436
        %3226 = vmatpush.bf16.msra.mxu0 %v2428
        %3227 = vmatpush.bf16.msra.mxu0 %v2420
        %3228 = vmatpush.bf16.msra.mxu0 %v2412
        %3229 = vmatpush.bf16.msra.mxu0 %v2404
        %3230 = vmatmul.bf16.gmra.mxu0 %v1370
        %v3231 = vpop.f32.mrf.mxu0
        %v3232 = vadd.f32 0.0, %v3231
        %v3233 = vpop.f32.mrf.mxu0
        %3234 = vdwg.mxu0
        %3235 = vmatpush.bf16.msra.mxu0 %v2524
        %3236 = vmatpush.bf16.msra.mxu0 %v2516
        %3237 = vmatpush.bf16.msra.mxu0 %v2508
        %3238 = vmatpush.bf16.msra.mxu0 %v2500
        %3239 = vmatpush.bf16.msra.mxu0 %v2492
        %3240 = vmatpush.bf16.msra.mxu0 %v2484
        %3241 = vmatpush.bf16.msra.mxu0 %v2476
        %3242 = vmatpush.bf16.msra.mxu0 %v2468
        %3243 = vmatmul.bf16.gmra.mxu0 %v1371
        %v3244 = vpop.f32.mrf.mxu0
        %v3245 = vadd.f32 %v3232, %v3244
        %v3246 = vpop.f32.mrf.mxu0
        %3247 = vdwg.mxu0
        %3248 = vmatpush.bf16.msra.mxu0 %v2588
        %3249 = vmatpush.bf16.msra.mxu0 %v2580
        %3250 = vmatpush.bf16.msra.mxu0 %v2572
        %3251 = vmatpush.bf16.msra.mxu0 %v2564
        %3252 = vmatpush.bf16.msra.mxu0 %v2556
        %3253 = vmatpush.bf16.msra.mxu0 %v2548
        %3254 = vmatpush.bf16.msra.mxu0 %v2540
        %3255 = vmatpush.bf16.msra.mxu0 %v2532
        %3256 = vmatmul.bf16.gmra.mxu0 %v1372
        %v3257 = vpop.f32.mrf.mxu0
        %v3258 = vadd.f32 %v3245, %v3257
        %v3259 = vpop.f32.mrf.mxu0
        %3260 = vdwg.mxu0
        %3261 = vmatpush.bf16.msra.mxu0 %v2652
        %3262 = vmatpush.bf16.msra.mxu0 %v2644
        %3263 = vmatpush.bf16.msra.mxu0 %v2636
        %3264 = vmatpush.bf16.msra.mxu0 %v2628
        %3265 = vmatpush.bf16.msra.mxu0 %v2620
        %3266 = vmatpush.bf16.msra.mxu0 %v2612
        %3267 = vmatpush.bf16.msra.mxu0 %v2604
        %3268 = vmatpush.bf16.msra.mxu0 %v2596
        %3269 = vmatmul.bf16.gmra.mxu0 %v1373
        %v3270 = vpop.f32.mrf.mxu0
        %v3271 = vadd.f32 %v3258, %v3270
        %v3272 = vpop.f32.mrf.mxu0
        %3273 = vdwg.mxu0
        %3274 = vmatpush.bf16.msra.mxu0 %v2461
        %3275 = vmatpush.bf16.msra.mxu0 %v2453
        %3276 = vmatpush.bf16.msra.mxu0 %v2445
        %3277 = vmatpush.bf16.msra.mxu0 %v2437
        %3278 = vmatpush.bf16.msra.mxu0 %v2429
        %3279 = vmatpush.bf16.msra.mxu0 %v2421
        %3280 = vmatpush.bf16.msra.mxu0 %v2413
        %3281 = vmatpush.bf16.msra.mxu0 %v2405
        %3282 = vmatmul.bf16.gmra.mxu0 %v1370
        %v3283 = vpop.f32.mrf.mxu0
        %v3284 = vadd.f32 0.0, %v3283
        %v3285 = vpop.f32.mrf.mxu0
        %3286 = vdwg.mxu0
        %3287 = vmatpush.bf16.msra.mxu0 %v2525
        %3288 = vmatpush.bf16.msra.mxu0 %v2517
        %3289 = vmatpush.bf16.msra.mxu0 %v2509
        %3290 = vmatpush.bf16.msra.mxu0 %v2501
        %3291 = vmatpush.bf16.msra.mxu0 %v2493
        %3292 = vmatpush.bf16.msra.mxu0 %v2485
        %3293 = vmatpush.bf16.msra.mxu0 %v2477
        %3294 = vmatpush.bf16.msra.mxu0 %v2469
        %3295 = vmatmul.bf16.gmra.mxu0 %v1371
        %v3296 = vpop.f32.mrf.mxu0
        %v3297 = vadd.f32 %v3284, %v3296
        %v3298 = vpop.f32.mrf.mxu0
        %3299 = vdwg.mxu0
        %3300 = vmatpush.bf16.msra.mxu0 %v2589
        %3301 = vmatpush.bf16.msra.mxu0 %v2581
        %3302 = vmatpush.bf16.msra.mxu0 %v2573
        %3303 = vmatpush.bf16.msra.mxu0 %v2565
        %3304 = vmatpush.bf16.msra.mxu0 %v2557
        %3305 = vmatpush.bf16.msra.mxu0 %v2549
        %3306 = vmatpush.bf16.msra.mxu0 %v2541
        %3307 = vmatpush.bf16.msra.mxu0 %v2533
        %3308 = vmatmul.bf16.gmra.mxu0 %v1372
        %v3309 = vpop.f32.mrf.mxu0
        %v3310 = vadd.f32 %v3297, %v3309
        %v3311 = vpop.f32.mrf.mxu0
        %3312 = vdwg.mxu0
        %3313 = vmatpush.bf16.msra.mxu0 %v2653
        %3314 = vmatpush.bf16.msra.mxu0 %v2645
        %3315 = vmatpush.bf16.msra.mxu0 %v2637
        %3316 = vmatpush.bf16.msra.mxu0 %v2629
        %3317 = vmatpush.bf16.msra.mxu0 %v2621
        %3318 = vmatpush.bf16.msra.mxu0 %v2613
        %3319 = vmatpush.bf16.msra.mxu0 %v2605
        %3320 = vmatpush.bf16.msra.mxu0 %v2597
        %3321 = vmatmul.bf16.gmra.mxu0 %v1373
        %v3322 = vpop.f32.mrf.mxu0
        %v3323 = vadd.f32 %v3310, %v3322
        %v3324 = vpop.f32.mrf.mxu0
        %3325 = vdwg.mxu0
        %s3326 = scalar_lea.vmem [#allocation5], 14
        %v3327 = vld [vmem:[%s3326] ss:$2 sm:$0xff]
        %s3328 = scalar_lea.vmem [#allocation5], 15
        %v3329 = vld [vmem:[%s3328] ss:$2 sm:$0xff]
        %v3330 = vrot.slane %v2959, 4
        %v3331 = vadd.f32 %v2959, %v3330
        %v3332 = vrot.slane %v3331, 2
        %v3333 = vadd.f32 %v3331, %v3332
        %v3334 = vrot.slane %v3333, 1
        %v3335 = vadd.f32 %v3333, %v3334
        %v3336 = vrot.slane %v3011, 4
        %v3337 = vadd.f32 %v3011, %v3336
        %v3338 = vrot.slane %v3337, 2
        %v3339 = vadd.f32 %v3337, %v3338
        %v3340 = vrot.slane %v3339, 1
        %v3341 = vadd.f32 %v3339, %v3340
        %v3342 = vrot.slane %v3063, 4
        %v3343 = vadd.f32 %v3063, %v3342
        %v3344 = vrot.slane %v3343, 2
        %v3345 = vadd.f32 %v3343, %v3344
        %v3346 = vrot.slane %v3345, 1
        %v3347 = vadd.f32 %v3345, %v3346
        %v3348 = vrot.slane %v3115, 4
        %v3349 = vadd.f32 %v3115, %v3348
        %v3350 = vrot.slane %v3349, 2
        %v3351 = vadd.f32 %v3349, %v3350
        %v3352 = vrot.slane %v3351, 1
        %v3353 = vadd.f32 %v3351, %v3352
        %v3354 = vrot.slane %v3167, 4
        %v3355 = vadd.f32 %v3167, %v3354
        %v3356 = vrot.slane %v3355, 2
        %v3357 = vadd.f32 %v3355, %v3356
        %v3358 = vrot.slane %v3357, 1
        %v3359 = vadd.f32 %v3357, %v3358
        %v3360 = vrot.slane %v3219, 4
        %v3361 = vadd.f32 %v3219, %v3360
        %v3362 = vrot.slane %v3361, 2
        %v3363 = vadd.f32 %v3361, %v3362
        %v3364 = vrot.slane %v3363, 1
        %v3365 = vadd.f32 %v3363, %v3364
        %v3366 = vrot.slane %v3271, 4
        %v3367 = vadd.f32 %v3271, %v3366
        %v3368 = vrot.slane %v3367, 2
        %v3369 = vadd.f32 %v3367, %v3368
        %v3370 = vrot.slane %v3369, 1
        %v3371 = vadd.f32 %v3369, %v3370
        %v3372 = vrot.slane %v3323, 4
        %v3373 = vadd.f32 %v3323, %v3372
        %v3374 = vrot.slane %v3373, 2
        %v3375 = vadd.f32 %v3373, %v3374
        %v3376 = vrot.slane %v3375, 1
        %v3377 = vadd.f32 %v3375, %v3376
        %v3378 = vmul.f32 %v2959, %v2959
        %v3379 = vmul.f32 %v3011, %v3011
        %v3380 = vmul.f32 %v3063, %v3063
        %v3381 = vmul.f32 %v3115, %v3115
        %v3382 = vmul.f32 %v3167, %v3167
        %v3383 = vmul.f32 %v3219, %v3219
        %v3384 = vmul.f32 %v3271, %v3271
        %v3385 = vmul.f32 %v3323, %v3323
        %v3386 = vrot.slane %v3378, 4
        %v3387 = vadd.f32 %v3378, %v3386
        %v3388 = vrot.slane %v3387, 2
        %v3389 = vadd.f32 %v3387, %v3388
        %v3390 = vrot.slane %v3389, 1
        %v3391 = vadd.f32 %v3389, %v3390
        %v3392 = vrot.slane %v3379, 4
        %v3393 = vadd.f32 %v3379, %v3392
        %v3394 = vrot.slane %v3393, 2
        %v3395 = vadd.f32 %v3393, %v3394
        %v3396 = vrot.slane %v3395, 1
        %v3397 = vadd.f32 %v3395, %v3396
        %v3398 = vrot.slane %v3380, 4
        %v3399 = vadd.f32 %v3380, %v3398
        %v3400 = vrot.slane %v3399, 2
        %v3401 = vadd.f32 %v3399, %v3400
        %v3402 = vrot.slane %v3401, 1
        %v3403 = vadd.f32 %v3401, %v3402
        %v3404 = vrot.slane %v3381, 4
        %v3405 = vadd.f32 %v3381, %v3404
        %v3406 = vrot.slane %v3405, 2
        %v3407 = vadd.f32 %v3405, %v3406
        %v3408 = vrot.slane %v3407, 1
        %v3409 = vadd.f32 %v3407, %v3408
        %v3410 = vrot.slane %v3382, 4
        %v3411 = vadd.f32 %v3382, %v3410
        %v3412 = vrot.slane %v3411, 2
        %v3413 = vadd.f32 %v3411, %v3412
        %v3414 = vrot.slane %v3413, 1
        %v3415 = vadd.f32 %v3413, %v3414
        %v3416 = vrot.slane %v3383, 4
        %v3417 = vadd.f32 %v3383, %v3416
        %v3418 = vrot.slane %v3417, 2
        %v3419 = vadd.f32 %v3417, %v3418
        %v3420 = vrot.slane %v3419, 1
        %v3421 = vadd.f32 %v3419, %v3420
        %v3422 = vrot.slane %v3384, 4
        %v3423 = vadd.f32 %v3384, %v3422
        %v3424 = vrot.slane %v3423, 2
        %v3425 = vadd.f32 %v3423, %v3424
        %v3426 = vrot.slane %v3425, 1
        %v3427 = vadd.f32 %v3425, %v3426
        %v3428 = vrot.slane %v3385, 4
        %v3429 = vadd.f32 %v3385, %v3428
        %v3430 = vrot.slane %v3429, 2
        %v3431 = vadd.f32 %v3429, %v3430
        %v3432 = vrot.slane %v3431, 1
        %v3433 = vadd.f32 %v3431, %v3432
        %v3434 = vmul.f32 %v3335, 0.125
        %v3435 = vmul.f32 %v3341, 0.125
        %v3436 = vmul.f32 %v3347, 0.125
        %v3437 = vmul.f32 %v3353, 0.125
        %v3438 = vmul.f32 %v3359, 0.125
        %v3439 = vmul.f32 %v3365, 0.125
        %v3440 = vmul.f32 %v3371, 0.125
        %v3441 = vmul.f32 %v3377, 0.125
        %v3442 = vmul.f32 %v3391, 0.125
        %v3443 = vmul.f32 %v3397, 0.125
        %v3444 = vmul.f32 %v3403, 0.125
        %v3445 = vmul.f32 %v3409, 0.125
        %v3446 = vmul.f32 %v3415, 0.125
        %v3447 = vmul.f32 %v3421, 0.125
        %v3448 = vmul.f32 %v3427, 0.125
        %v3449 = vmul.f32 %v3433, 0.125
        %v3450 = vmul.f32 %v3434, %v3434
        %v3451 = vmul.f32 %v3435, %v3435
        %v3452 = vmul.f32 %v3436, %v3436
        %v3453 = vmul.f32 %v3437, %v3437
        %v3454 = vmul.f32 %v3438, %v3438
        %v3455 = vmul.f32 %v3439, %v3439
        %v3456 = vmul.f32 %v3440, %v3440
        %v3457 = vmul.f32 %v3441, %v3441
        %v3458 = vsub.f32 %v3442, %v3450
        %v3459 = vsub.f32 %v3443, %v3451
        %v3460 = vsub.f32 %v3444, %v3452
        %v3461 = vsub.f32 %v3445, %v3453
        %v3462 = vsub.f32 %v3446, %v3454
        %v3463 = vsub.f32 %v3447, %v3455
        %v3464 = vsub.f32 %v3448, %v3456
        %v3465 = vsub.f32 %v3449, %v3457
        %v3466 = vmax.f32 %v3458, 0.0
        %v3467 = vmax.f32 %v3459, 0.0
        %v3468 = vmax.f32 %v3460, 0.0
        %v3469 = vmax.f32 %v3461, 0.0
        %v3470 = vmax.f32 %v3462, 0.0
        %v3471 = vmax.f32 %v3463, 0.0
        %v3472 = vmax.f32 %v3464, 0.0
        %v3473 = vmax.f32 %v3465, 0.0
        %v3474 = vadd.f32 %v3466, 1e-05
        %v3475 = vadd.f32 %v3467, 1e-05
        %v3476 = vadd.f32 %v3468, 1e-05
        %v3477 = vadd.f32 %v3469, 1e-05
        %v3478 = vadd.f32 %v3470, 1e-05
        %v3479 = vadd.f32 %v3471, 1e-05
        %v3480 = vadd.f32 %v3472, 1e-05
        %v3481 = vadd.f32 %v3473, 1e-05
        %v3482 = vrsqrt.pop %v3474
        %v3483 = vmul.f32 %v3482, %v3474
        %v3484 = vmul.f32 %v3483, %v3482
        %v3485 = vmul.f32 0.5, %v3484
        %v3486 = vsub.f32 1.5, %v3485
        %v3487 = vmul.f32 %v3482, %v3486
        %vm3488 = vweird.f32 %v3474
        %vm3489 = vweird.f32 %v3482
        %vm3490 = vmor %vm3488, %vm3489
        %v3491 = vsel %vm3490, %v3482, %v3487
        %v3492 = vrsqrt.pop %v3475
        %v3493 = vmul.f32 %v3492, %v3475
        %v3494 = vmul.f32 %v3493, %v3492
        %v3495 = vmul.f32 0.5, %v3494
        %v3496 = vsub.f32 1.5, %v3495
        %v3497 = vmul.f32 %v3492, %v3496
        %vm3498 = vweird.f32 %v3475
        %vm3499 = vweird.f32 %v3492
        %vm3500 = vmor %vm3498, %vm3499
        %v3501 = vsel %vm3500, %v3492, %v3497
        %v3502 = vrsqrt.pop %v3476
        %v3503 = vmul.f32 %v3502, %v3476
        %v3504 = vmul.f32 %v3503, %v3502
        %v3505 = vmul.f32 0.5, %v3504
        %v3506 = vsub.f32 1.5, %v3505
        %v3507 = vmul.f32 %v3502, %v3506
        %vm3508 = vweird.f32 %v3476
        %vm3509 = vweird.f32 %v3502
        %vm3510 = vmor %vm3508, %vm3509
        %v3511 = vsel %vm3510, %v3502, %v3507
        %v3512 = vrsqrt.pop %v3477
        %v3513 = vmul.f32 %v3512, %v3477
        %v3514 = vmul.f32 %v3513, %v3512
        %v3515 = vmul.f32 0.5, %v3514
        %v3516 = vsub.f32 1.5, %v3515
        %v3517 = vmul.f32 %v3512, %v3516
        %vm3518 = vweird.f32 %v3477
        %vm3519 = vweird.f32 %v3512
        %vm3520 = vmor %vm3518, %vm3519
        %v3521 = vsel %vm3520, %v3512, %v3517
        %v3522 = vrsqrt.pop %v3478
        %v3523 = vmul.f32 %v3522, %v3478
        %v3524 = vmul.f32 %v3523, %v3522
        %v3525 = vmul.f32 0.5, %v3524
        %v3526 = vsub.f32 1.5, %v3525
        %v3527 = vmul.f32 %v3522, %v3526
        %vm3528 = vweird.f32 %v3478
        %vm3529 = vweird.f32 %v3522
        %vm3530 = vmor %vm3528, %vm3529
        %v3531 = vsel %vm3530, %v3522, %v3527
        %v3532 = vrsqrt.pop %v3479
        %v3533 = vmul.f32 %v3532, %v3479
        %v3534 = vmul.f32 %v3533, %v3532
        %v3535 = vmul.f32 0.5, %v3534
        %v3536 = vsub.f32 1.5, %v3535
        %v3537 = vmul.f32 %v3532, %v3536
        %vm3538 = vweird.f32 %v3479
        %vm3539 = vweird.f32 %v3532
        %vm3540 = vmor %vm3538, %vm3539
        %v3541 = vsel %vm3540, %v3532, %v3537
        %v3542 = vrsqrt.pop %v3480
        %v3543 = vmul.f32 %v3542, %v3480
        %v3544 = vmul.f32 %v3543, %v3542
        %v3545 = vmul.f32 0.5, %v3544
        %v3546 = vsub.f32 1.5, %v3545
        %v3547 = vmul.f32 %v3542, %v3546
        %vm3548 = vweird.f32 %v3480
        %vm3549 = vweird.f32 %v3542
        %vm3550 = vmor %vm3548, %vm3549
        %v3551 = vsel %vm3550, %v3542, %v3547
        %v3552 = vrsqrt.pop %v3481
        %v3553 = vmul.f32 %v3552, %v3481
        %v3554 = vmul.f32 %v3553, %v3552
        %v3555 = vmul.f32 0.5, %v3554
        %v3556 = vsub.f32 1.5, %v3555
        %v3557 = vmul.f32 %v3552, %v3556
        %vm3558 = vweird.f32 %v3481
        %vm3559 = vweird.f32 %v3552
        %vm3560 = vmor %vm3558, %vm3559
        %v3561 = vsel %vm3560, %v3552, %v3557
        %v3570 = vrot.slane %v3501, 7
        %v3571 = vrot.slane %v3511, 6
        %v3572 = vrot.slane %v3521, 5
        %v3573 = vrot.slane %v3531, 4
        %v3574 = vrot.slane %v3541, 3
        %v3575 = vrot.slane %v3551, 2
        %v3576 = vrot.slane %v3561, 1
        %v3577 = vsel %vm672, %v3491, %v3570
        %v3578 = vsel %vm1318, %v3571, %v3572
        %v3579 = vsel %vm1320, %v3577, %v3578
        %vm3580 = vcmask 1044484
        %v3581 = vsel %vm3580, %v3573, %v3574
        %vm3582 = vcmask 1046534
        %v3583 = vsel %vm3582, %v3575, %v3576
        %vm3584 = vcmask 1045508
        %v3585 = vsel %vm3584, %v3581, %v3583
        %vm3586 = vcmask 1043456
        %v3587 = vsel %vm3586, %v3579, %v3585
        %v3589 = vmul.f32 %v3327, %v3587
        %v3591 = vperm.slane %v3589, 0
        %v3592 = vperm.slane %v3589, 1
        %v3593 = vperm.slane %v3589, 2
        %v3594 = vperm.slane %v3589, 3
        %v3595 = vperm.slane %v3589, 4
        %v3596 = vperm.slane %v3589, 5
        %v3597 = vperm.slane %v3589, 6
        %v3598 = vperm.slane %v3589, 7
        %v3607 = vmul.f32 %v3434, %v3591
        %v3608 = vmul.f32 %v3435, %v3592
        %v3609 = vmul.f32 %v3436, %v3593
        %v3610 = vmul.f32 %v3437, %v3594
        %v3611 = vmul.f32 %v3438, %v3595
        %v3612 = vmul.f32 %v3439, %v3596
        %v3613 = vmul.f32 %v3440, %v3597
        %v3614 = vmul.f32 %v3441, %v3598
        %v3623 = vrot.slane %v3608, 7
        %v3624 = vrot.slane %v3609, 6
        %v3625 = vrot.slane %v3610, 5
        %v3626 = vrot.slane %v3611, 4
        %v3627 = vrot.slane %v3612, 3
        %v3628 = vrot.slane %v3613, 2
        %v3629 = vrot.slane %v3614, 1
        %v3630 = vsel %vm672, %v3607, %v3623
        %v3631 = vsel %vm1318, %v3624, %v3625
        %v3632 = vsel %vm1320, %v3630, %v3631
        %v3633 = vsel %vm3580, %v3626, %v3627
        %v3634 = vsel %vm3582, %v3628, %v3629
        %v3635 = vsel %vm3584, %v3633, %v3634
        %v3636 = vsel %vm3586, %v3632, %v3635
        %v3638 = vsub.f32 %v3329, %v3636
        %v3639 = vmul.f32 %v2959, %v3591
        %v3640 = vmul.f32 %v3011, %v3592
        %v3641 = vmul.f32 %v3063, %v3593
        %v3642 = vmul.f32 %v3115, %v3594
        %v3643 = vmul.f32 %v3167, %v3595
        %v3644 = vmul.f32 %v3219, %v3596
        %v3645 = vmul.f32 %v3271, %v3597
        %v3646 = vmul.f32 %v3323, %v3598
        %v3648 = vperm.slane %v3638, 0
        %v3649 = vperm.slane %v3638, 1
        %v3650 = vperm.slane %v3638, 2
        %v3651 = vperm.slane %v3638, 3
        %v3652 = vperm.slane %v3638, 4
        %v3653 = vperm.slane %v3638, 5
        %v3654 = vperm.slane %v3638, 6
        %v3655 = vperm.slane %v3638, 7
        %v3664 = vadd.f32 %v3639, %v3648
        %v3665 = vadd.f32 %v3640, %v3649
        %v3666 = vadd.f32 %v3641, %v3650
        %v3667 = vadd.f32 %v3642, %v3651
        %v3668 = vadd.f32 %v3643, %v3652
        %v3669 = vadd.f32 %v3644, %v3653
        %v3670 = vadd.f32 %v3645, %v3654
        %v3671 = vadd.f32 %v3646, %v3655
        %v3672 = vmax.f32 %v3664, 0.0
        %v3673 = vmax.f32 %v3665, 0.0
        %v3674 = vmax.f32 %v3666, 0.0
        %v3675 = vmax.f32 %v3667, 0.0
        %v3676 = vmax.f32 %v3668, 0.0
        %v3677 = vmax.f32 %v3669, 0.0
        %v3678 = vmax.f32 %v3670, 0.0
        %v3679 = vmax.f32 %v3671, 0.0
        %s3680 = scalar_lea.vmem [#allocation5], 30
        %v3681 = vld [vmem:[%s3680] ss:$2 sm:$0xff]
        %v3682 = vpack.c.bf16 %v3672, %v3672
        %v3683 = vpack.c.bf16 %v3673, %v3673
        %v3684 = vpack.c.bf16 %v3674, %v3674
        %v3685 = vpack.c.bf16 %v3675, %v3675
        %v3686 = vpack.c.bf16 %v3676, %v3676
        %v3687 = vpack.c.bf16 %v3677, %v3677
        %v3688 = vpack.c.bf16 %v3678, %v3678
        %v3689 = vpack.c.bf16 %v3679, %v3679
        %v3690 = vld [vmem:[#allocation13] sm:$0xff]
        %v3691 = vld [vmem:[#allocation13 + $0x8] sm:$0xff]
        %v3692 = vld [vmem:[#allocation13 + $0x10] sm:$0xff]
        %v3693 = vld [vmem:[#allocation13 + $0x18] sm:$0xf]
        %v3694 = vld [vmem:[#allocation13 + $0x1c] sm:$0xff]
        %v3695 = vld [vmem:[#allocation13 + $0x24] sm:$0xff]
        %v3696 = vld [vmem:[#allocation13 + $0x2c] sm:$0xff]
        %v3697 = vld [vmem:[#allocation13 + $0x34] sm:$0xf]
        %v3698 = vld [vmem:[#allocation13 + $0x38] sm:$0xff]
        %v3699 = vld [vmem:[#allocation13 + $0x40] sm:$0xff]
        %v3700 = vld [vmem:[#allocation13 + $0x48] sm:$0xff]
        %v3701 = vld [vmem:[#allocation13 + $0x50] sm:$0xf]
        %v3702 = vld [vmem:[#allocation13 + $0x54] sm:$0xff]
        %v3703 = vld [vmem:[#allocation13 + $0x5c] sm:$0xff]
        %v3704 = vld [vmem:[#allocation13 + $0x64] sm:$0xff]
        %v3705 = vld [vmem:[#allocation13 + $0x6c] sm:$0xf]
        %v3706 = vld [vmem:[#allocation13 + $0x70] sm:$0xff]
        %v3707 = vld [vmem:[#allocation13 + $0x78] sm:$0xff]
        %v3708 = vld [vmem:[#allocation13 + $0x80] sm:$0xff]
        %v3709 = vld [vmem:[#allocation13 + $0x88] sm:$0xf]
        %v3710 = vld [vmem:[#allocation13 + $0x8c] sm:$0xff]
        %v3711 = vld [vmem:[#allocation13 + $0x94] sm:$0xff]
        %v3712 = vld [vmem:[#allocation13 + $0x9c] sm:$0xff]
        %v3713 = vld [vmem:[#allocation13 + $0xa4] sm:$0xf]
        %v3714 = vld [vmem:[#allocation13 + $0xa8] sm:$0xff]
        %v3715 = vld [vmem:[#allocation13 + $0xb0] sm:$0xff]
        %v3716 = vld [vmem:[#allocation13 + $0xb8] sm:$0xff]
        %v3717 = vld [vmem:[#allocation13 + $0xc0] sm:$0xf]
        %v3718 = vld [vmem:[#allocation13 + $0xc4] sm:$0xff]
        %v3719 = vld [vmem:[#allocation13 + $0xcc] sm:$0xff]
        %v3720 = vld [vmem:[#allocation13 + $0xd4] sm:$0xff]
        %v3721 = vld [vmem:[#allocation13 + $0xdc] sm:$0xf]
        %v3722 = vld [vmem:[#allocation13 + $0xe0] sm:$0xff]
        %v3723 = vld [vmem:[#allocation13 + $0xe8] sm:$0xff]
        %v3724 = vld [vmem:[#allocation13 + $0xf0] sm:$0xff]
        %v3725 = vld [vmem:[#allocation13 + $0xf8] sm:$0xf]
        %v3726 = vld [vmem:[#allocation13 + $0xfc] sm:$0xff]
        %v3727 = vld [vmem:[#allocation13 + $0x104] sm:$0xff]
        %v3728 = vld [vmem:[#allocation13 + $0x10c] sm:$0xff]
        %v3729 = vld [vmem:[#allocation13 + $0x114] sm:$0xf]
        %v3730 = vld [vmem:[#allocation13 + $0x118] sm:$0xff]
        %v3731 = vld [vmem:[#allocation13 + $0x120] sm:$0xff]
        %v3732 = vld [vmem:[#allocation13 + $0x128] sm:$0xff]
        %v3733 = vld [vmem:[#allocation13 + $0x130] sm:$0xf]
        %v3734 = vld [vmem:[#allocation13 + $0x134] sm:$0xff]
        %v3735 = vld [vmem:[#allocation13 + $0x13c] sm:$0xff]
        %v3736 = vld [vmem:[#allocation13 + $0x144] sm:$0xff]
        %v3737 = vld [vmem:[#allocation13 + $0x14c] sm:$0xf]
        %v3738 = vld [vmem:[#allocation13 + $0x150] sm:$0xff]
        %v3739 = vld [vmem:[#allocation13 + $0x158] sm:$0xff]
        %v3740 = vld [vmem:[#allocation13 + $0x160] sm:$0xff]
        %v3741 = vld [vmem:[#allocation13 + $0x168] sm:$0xf]
        %v3742 = vld [vmem:[#allocation13 + $0x16c] sm:$0xff]
        %v3743 = vld [vmem:[#allocation13 + $0x174] sm:$0xff]
        %v3744 = vld [vmem:[#allocation13 + $0x17c] sm:$0xff]
        %v3745 = vld [vmem:[#allocation13 + $0x184] sm:$0xf]
        %v3746 = vld [vmem:[#allocation13 + $0x188] sm:$0xff]
        %v3747 = vld [vmem:[#allocation13 + $0x190] sm:$0xff]
        %v3748 = vld [vmem:[#allocation13 + $0x198] sm:$0xff]
        %v3749 = vld [vmem:[#allocation13 + $0x1a0] sm:$0xf]
        %v3750 = vld [vmem:[#allocation13 + $0x1a4] sm:$0xff]
        %v3751 = vld [vmem:[#allocation13 + $0x1ac] sm:$0xff]
        %v3752 = vld [vmem:[#allocation13 + $0x1b4] sm:$0xff]
        %v3753 = vld [vmem:[#allocation13 + $0x1bc] sm:$0xf]
        %v3754 = vld [vmem:[#allocation13 + $0x1c0] sm:$0xff]
        %v3755 = vld [vmem:[#allocation13 + $0x1c8] sm:$0xff]
        %v3756 = vld [vmem:[#allocation13 + $0x1d0] sm:$0xff]
        %v3757 = vld [vmem:[#allocation13 + $0x1d8] sm:$0xf]
        %v3758 = vld [vmem:[#allocation13 + $0x1dc] sm:$0xff]
        %v3759 = vld [vmem:[#allocation13 + $0x1e4] sm:$0xff]
        %v3760 = vld [vmem:[#allocation13 + $0x1ec] sm:$0xff]
        %v3761 = vld [vmem:[#allocation13 + $0x1f4] sm:$0xf]
        %v3762 = vld [vmem:[#allocation13 + $0x1f8] sm:$0xff]
        %v3763 = vld [vmem:[#allocation13 + $0x200] sm:$0xff]
        %v3764 = vld [vmem:[#allocation13 + $0x208] sm:$0xff]
        %v3765 = vld [vmem:[#allocation13 + $0x210] sm:$0xf]
        %v3766 = vld [vmem:[#allocation13 + $0x214] sm:$0xff]
        %v3767 = vld [vmem:[#allocation13 + $0x21c] sm:$0xff]
        %v3768 = vld [vmem:[#allocation13 + $0x224] sm:$0xff]
        %v3769 = vld [vmem:[#allocation13 + $0x22c] sm:$0xf]
        %v3770 = vld [vmem:[#allocation13 + $0x230] sm:$0xff]
        %v3771 = vld [vmem:[#allocation13 + $0x238] sm:$0xff]
        %v3772 = vld [vmem:[#allocation13 + $0x240] sm:$0xff]
        %v3773 = vld [vmem:[#allocation13 + $0x248] sm:$0xf]
        %v3774 = vld [vmem:[#allocation13 + $0x24c] sm:$0xff]
        %v3775 = vld [vmem:[#allocation13 + $0x254] sm:$0xff]
        %v3776 = vld [vmem:[#allocation13 + $0x25c] sm:$0xff]
        %v3777 = vld [vmem:[#allocation13 + $0x264] sm:$0xf]
        %v3778 = vld [vmem:[#allocation13 + $0x268] sm:$0xff]
        %v3779 = vld [vmem:[#allocation13 + $0x270] sm:$0xff]
        %v3780 = vld [vmem:[#allocation13 + $0x278] sm:$0xff]
        %v3781 = vld [vmem:[#allocation13 + $0x280] sm:$0xf]
        %v3782 = vld [vmem:[#allocation13 + $0x284] sm:$0xff]
        %v3783 = vld [vmem:[#allocation13 + $0x28c] sm:$0xff]
        %v3784 = vld [vmem:[#allocation13 + $0x294] sm:$0xff]
        %v3785 = vld [vmem:[#allocation13 + $0x29c] sm:$0xf]
        %v3786 = vld [vmem:[#allocation13 + $0x2a0] sm:$0xff]
        %v3787 = vld [vmem:[#allocation13 + $0x2a8] sm:$0xff]
        %v3788 = vld [vmem:[#allocation13 + $0x2b0] sm:$0xff]
        %v3789 = vld [vmem:[#allocation13 + $0x2b8] sm:$0xf]
        %v3790 = vld [vmem:[#allocation13 + $0x2bc] sm:$0xff]
        %v3791 = vld [vmem:[#allocation13 + $0x2c4] sm:$0xff]
        %v3792 = vld [vmem:[#allocation13 + $0x2cc] sm:$0xff]
        %v3793 = vld [vmem:[#allocation13 + $0x2d4] sm:$0xf]
        %v3794 = vld [vmem:[#allocation13 + $0x2d8] sm:$0xff]
        %v3795 = vld [vmem:[#allocation13 + $0x2e0] sm:$0xff]
        %v3796 = vld [vmem:[#allocation13 + $0x2e8] sm:$0xff]
        %v3797 = vld [vmem:[#allocation13 + $0x2f0] sm:$0xf]
        %v3798 = vld [vmem:[#allocation13 + $0x2f4] sm:$0xff]
        %v3799 = vld [vmem:[#allocation13 + $0x2fc] sm:$0xff]
        %v3800 = vld [vmem:[#allocation13 + $0x304] sm:$0xff]
        %v3801 = vld [vmem:[#allocation13 + $0x30c] sm:$0xf]
        %v3802 = vld [vmem:[#allocation13 + $0x310] sm:$0xff]
        %v3803 = vld [vmem:[#allocation13 + $0x318] sm:$0xff]
        %v3804 = vld [vmem:[#allocation13 + $0x320] sm:$0xff]
        %v3805 = vld [vmem:[#allocation13 + $0x328] sm:$0xf]
        %v3806 = vld [vmem:[#allocation13 + $0x32c] sm:$0xff]
        %v3807 = vld [vmem:[#allocation13 + $0x334] sm:$0xff]
        %v3808 = vld [vmem:[#allocation13 + $0x33c] sm:$0xff]
        %v3809 = vld [vmem:[#allocation13 + $0x344] sm:$0xf]
        %v3810 = vld [vmem:[#allocation13 + $0x348] sm:$0xff]
        %v3811 = vld [vmem:[#allocation13 + $0x350] sm:$0xff]
        %v3812 = vld [vmem:[#allocation13 + $0x358] sm:$0xff]
        %v3813 = vld [vmem:[#allocation13 + $0x360] sm:$0xf]
        %v3814 = vld [vmem:[#allocation13 + $0x364] sm:$0xff]
        %v3815 = vld [vmem:[#allocation13 + $0x36c] sm:$0xff]
        %v3816 = vld [vmem:[#allocation13 + $0x374] sm:$0xff]
        %v3817 = vld [vmem:[#allocation13 + $0x37c] sm:$0xf]
        %v3818 = vld [vmem:[#allocation13 + $0x380] sm:$0xff]
        %v3819 = vld [vmem:[#allocation13 + $0x388] sm:$0xff]
        %v3820 = vld [vmem:[#allocation13 + $0x390] sm:$0xff]
        %v3821 = vld [vmem:[#allocation13 + $0x398] sm:$0xf]
        %v3822 = vld [vmem:[#allocation13 + $0x39c] sm:$0xff]
        %v3823 = vld [vmem:[#allocation13 + $0x3a4] sm:$0xff]
        %v3824 = vld [vmem:[#allocation13 + $0x3ac] sm:$0xff]
        %v3825 = vld [vmem:[#allocation13 + $0x3b4] sm:$0xf]
        %v3826 = vld [vmem:[#allocation13 + $0x3b8] sm:$0xff]
        %v3827 = vld [vmem:[#allocation13 + $0x3c0] sm:$0xff]
        %v3828 = vld [vmem:[#allocation13 + $0x3c8] sm:$0xff]
        %v3829 = vld [vmem:[#allocation13 + $0x3d0] sm:$0xf]
        %v3830 = vld [vmem:[#allocation13 + $0x3d4] sm:$0xff]
        %v3831 = vld [vmem:[#allocation13 + $0x3dc] sm:$0xff]
        %v3832 = vld [vmem:[#allocation13 + $0x3e4] sm:$0xff]
        %v3833 = vld [vmem:[#allocation13 + $0x3ec] sm:$0xf]
        %v3834 = vld [vmem:[#allocation13 + $0x3f0] sm:$0xff]
        %v3835 = vld [vmem:[#allocation13 + $0x3f8] sm:$0xff]
        %v3836 = vld [vmem:[#allocation13 + $0x400] sm:$0xff]
        %v3837 = vld [vmem:[#allocation13 + $0x408] sm:$0xf]
        %v3838 = vld [vmem:[#allocation13 + $0x40c] sm:$0xff]
        %v3839 = vld [vmem:[#allocation13 + $0x414] sm:$0xff]
        %v3840 = vld [vmem:[#allocation13 + $0x41c] sm:$0xff]
        %v3841 = vld [vmem:[#allocation13 + $0x424] sm:$0xf]
        %v3842 = vld [vmem:[#allocation13 + $0x428] sm:$0xff]
        %v3843 = vld [vmem:[#allocation13 + $0x430] sm:$0xff]
        %v3844 = vld [vmem:[#allocation13 + $0x438] sm:$0xff]
        %v3845 = vld [vmem:[#allocation13 + $0x440] sm:$0xf]
        %v3846 = vld [vmem:[#allocation13 + $0x444] sm:$0xff]
        %v3847 = vld [vmem:[#allocation13 + $0x44c] sm:$0xff]
        %v3848 = vld [vmem:[#allocation13 + $0x454] sm:$0xff]
        %v3849 = vld [vmem:[#allocation13 + $0x45c] sm:$0xf]
        %v3850 = vld [vmem:[#allocation13 + $0x460] sm:$0xff]
        %v3851 = vld [vmem:[#allocation13 + $0x468] sm:$0xff]
        %v3852 = vld [vmem:[#allocation13 + $0x470] sm:$0xff]
        %v3853 = vld [vmem:[#allocation13 + $0x478] sm:$0xf]
        %v3854 = vld [vmem:[#allocation13 + $0x47c] sm:$0xff]
        %v3855 = vld [vmem:[#allocation13 + $0x484] sm:$0xff]
        %v3856 = vld [vmem:[#allocation13 + $0x48c] sm:$0xff]
        %v3857 = vld [vmem:[#allocation13 + $0x494] sm:$0xf]
        %v3858 = vld [vmem:[#allocation13 + $0x498] sm:$0xff]
        %v3859 = vld [vmem:[#allocation13 + $0x4a0] sm:$0xff]
        %v3860 = vld [vmem:[#allocation13 + $0x4a8] sm:$0xff]
        %v3861 = vld [vmem:[#allocation13 + $0x4b0] sm:$0xf]
        %v3862 = vld [vmem:[#allocation13 + $0x4b4] sm:$0xff]
        %v3863 = vld [vmem:[#allocation13 + $0x4bc] sm:$0xff]
        %v3864 = vld [vmem:[#allocation13 + $0x4c4] sm:$0xff]
        %v3865 = vld [vmem:[#allocation13 + $0x4cc] sm:$0xf]
        %v3866 = vld [vmem:[#allocation13 + $0x4d0] sm:$0xff]
        %v3867 = vld [vmem:[#allocation13 + $0x4d8] sm:$0xff]
        %v3868 = vld [vmem:[#allocation13 + $0x4e0] sm:$0xff]
        %v3869 = vld [vmem:[#allocation13 + $0x4e8] sm:$0xf]
        %v3870 = vld [vmem:[#allocation13 + $0x4ec] sm:$0xff]
        %v3871 = vld [vmem:[#allocation13 + $0x4f4] sm:$0xff]
        %v3872 = vld [vmem:[#allocation13 + $0x4fc] sm:$0xff]
        %v3873 = vld [vmem:[#allocation13 + $0x504] sm:$0xf]
        %v3874 = vld [vmem:[#allocation13 + $0x508] sm:$0xff]
        %v3875 = vld [vmem:[#allocation13 + $0x510] sm:$0xff]
        %v3876 = vld [vmem:[#allocation13 + $0x518] sm:$0xff]
        %v3877 = vld [vmem:[#allocation13 + $0x520] sm:$0xf]
        %v3878 = vld [vmem:[#allocation13 + $0x524] sm:$0xff]
        %v3879 = vld [vmem:[#allocation13 + $0x52c] sm:$0xff]
        %v3880 = vld [vmem:[#allocation13 + $0x534] sm:$0xff]
        %v3881 = vld [vmem:[#allocation13 + $0x53c] sm:$0xf]
        %v3882 = vld [vmem:[#allocation13 + $0x540] sm:$0xff]
        %v3883 = vld [vmem:[#allocation13 + $0x548] sm:$0xff]
        %v3884 = vld [vmem:[#allocation13 + $0x550] sm:$0xff]
        %v3885 = vld [vmem:[#allocation13 + $0x558] sm:$0xf]
        %v3886 = vld [vmem:[#allocation13 + $0x55c] sm:$0xff]
        %v3887 = vld [vmem:[#allocation13 + $0x564] sm:$0xff]
        %v3888 = vld [vmem:[#allocation13 + $0x56c] sm:$0xff]
        %v3889 = vld [vmem:[#allocation13 + $0x574] sm:$0xf]
        %v3890 = vld [vmem:[#allocation13 + $0x578] sm:$0xff]
        %v3891 = vld [vmem:[#allocation13 + $0x580] sm:$0xff]
        %v3892 = vld [vmem:[#allocation13 + $0x588] sm:$0xff]
        %v3893 = vld [vmem:[#allocation13 + $0x590] sm:$0xf]
        %v3894 = vld [vmem:[#allocation13 + $0x594] sm:$0xff]
        %v3895 = vld [vmem:[#allocation13 + $0x59c] sm:$0xff]
        %v3896 = vld [vmem:[#allocation13 + $0x5a4] sm:$0xff]
        %v3897 = vld [vmem:[#allocation13 + $0x5ac] sm:$0xf]
        %v3898 = vld [vmem:[#allocation13 + $0x5b0] sm:$0xff]
        %v3899 = vld [vmem:[#allocation13 + $0x5b8] sm:$0xff]
        %v3900 = vld [vmem:[#allocation13 + $0x5c0] sm:$0xff]
        %v3901 = vld [vmem:[#allocation13 + $0x5c8] sm:$0xf]
        %v3902 = vld [vmem:[#allocation13 + $0x5cc] sm:$0xff]
        %v3903 = vld [vmem:[#allocation13 + $0x5d4] sm:$0xff]
        %v3904 = vld [vmem:[#allocation13 + $0x5dc] sm:$0xff]
        %v3905 = vld [vmem:[#allocation13 + $0x5e4] sm:$0xf]
        %v3906 = vld [vmem:[#allocation13 + $0x5e8] sm:$0xff]
        %v3907 = vld [vmem:[#allocation13 + $0x5f0] sm:$0xff]
        %v3908 = vld [vmem:[#allocation13 + $0x5f8] sm:$0xff]
        %v3909 = vld [vmem:[#allocation13 + $0x600] sm:$0xf]
        %v3910 = vld [vmem:[#allocation13 + $0x604] sm:$0xff]
        %v3911 = vld [vmem:[#allocation13 + $0x60c] sm:$0xff]
        %v3912 = vld [vmem:[#allocation13 + $0x614] sm:$0xff]
        %v3913 = vld [vmem:[#allocation13 + $0x61c] sm:$0xf]
        %v3914 = vld [vmem:[#allocation13 + $0x620] sm:$0xff]
        %v3915 = vld [vmem:[#allocation13 + $0x628] sm:$0xff]
        %v3916 = vld [vmem:[#allocation13 + $0x630] sm:$0xff]
        %v3917 = vld [vmem:[#allocation13 + $0x638] sm:$0xf]
        %v3918 = vld [vmem:[#allocation13 + $0x63c] sm:$0xff]
        %v3919 = vld [vmem:[#allocation13 + $0x644] sm:$0xff]
        %v3920 = vld [vmem:[#allocation13 + $0x64c] sm:$0xff]
        %v3921 = vld [vmem:[#allocation13 + $0x654] sm:$0xf]
        %v3922 = vld [vmem:[#allocation13 + $0x658] sm:$0xff]
        %v3923 = vld [vmem:[#allocation13 + $0x660] sm:$0xff]
        %v3924 = vld [vmem:[#allocation13 + $0x668] sm:$0xff]
        %v3925 = vld [vmem:[#allocation13 + $0x670] sm:$0xf]
        %v3926 = vld [vmem:[#allocation13 + $0x674] sm:$0xff]
        %v3927 = vld [vmem:[#allocation13 + $0x67c] sm:$0xff]
        %v3928 = vld [vmem:[#allocation13 + $0x684] sm:$0xff]
        %v3929 = vld [vmem:[#allocation13 + $0x68c] sm:$0xf]
        %v3930 = vld [vmem:[#allocation13 + $0x690] sm:$0xff]
        %v3931 = vld [vmem:[#allocation13 + $0x698] sm:$0xff]
        %v3932 = vld [vmem:[#allocation13 + $0x6a0] sm:$0xff]
        %v3933 = vld [vmem:[#allocation13 + $0x6a8] sm:$0xf]
        %v3934 = vld [vmem:[#allocation13 + $0x6ac] sm:$0xff]
        %v3935 = vld [vmem:[#allocation13 + $0x6b4] sm:$0xff]
        %v3936 = vld [vmem:[#allocation13 + $0x6bc] sm:$0xff]
        %v3937 = vld [vmem:[#allocation13 + $0x6c4] sm:$0xf]
        %v3938 = vld [vmem:[#allocation13 + $0x6c8] sm:$0xff]
        %v3939 = vld [vmem:[#allocation13 + $0x6d0] sm:$0xff]
        %v3940 = vld [vmem:[#allocation13 + $0x6d8] sm:$0xff]
        %v3941 = vld [vmem:[#allocation13 + $0x6e0] sm:$0xf]
        %v3942 = vld [vmem:[#allocation13 + $0x6e4] sm:$0xff]
        %v3943 = vld [vmem:[#allocation13 + $0x6ec] sm:$0xff]
        %v3944 = vld [vmem:[#allocation13 + $0x6f4] sm:$0xff]
        %v3945 = vld [vmem:[#allocation13 + $0x6fc] sm:$0xf]
        %v3946 = vld [vmem:[#allocation13 + $0x700] sm:$0xff]
        %v3947 = vld [vmem:[#allocation13 + $0x708] sm:$0xff]
        %v3948 = vld [vmem:[#allocation13 + $0x710] sm:$0xff]
        %v3949 = vld [vmem:[#allocation13 + $0x718] sm:$0xf]
        %v3950 = vld [vmem:[#allocation13 + $0x71c] sm:$0xff]
        %v3951 = vld [vmem:[#allocation13 + $0x724] sm:$0xff]
        %v3952 = vld [vmem:[#allocation13 + $0x72c] sm:$0xff]
        %v3953 = vld [vmem:[#allocation13 + $0x734] sm:$0xf]
        %v3954 = vld [vmem:[#allocation13 + $0x738] sm:$0xff]
        %v3955 = vld [vmem:[#allocation13 + $0x740] sm:$0xff]
        %v3956 = vld [vmem:[#allocation13 + $0x748] sm:$0xff]
        %v3957 = vld [vmem:[#allocation13 + $0x750] sm:$0xf]
        %v3958 = vld [vmem:[#allocation13 + $0x754] sm:$0xff]
        %v3959 = vld [vmem:[#allocation13 + $0x75c] sm:$0xff]
        %v3960 = vld [vmem:[#allocation13 + $0x764] sm:$0xff]
        %v3961 = vld [vmem:[#allocation13 + $0x76c] sm:$0xf]
        %v3962 = vld [vmem:[#allocation13 + $0x770] sm:$0xff]
        %v3963 = vld [vmem:[#allocation13 + $0x778] sm:$0xff]
        %v3964 = vld [vmem:[#allocation13 + $0x780] sm:$0xff]
        %v3965 = vld [vmem:[#allocation13 + $0x788] sm:$0xf]
        %v3966 = vld [vmem:[#allocation13 + $0x78c] sm:$0xff]
        %v3967 = vld [vmem:[#allocation13 + $0x794] sm:$0xff]
        %v3968 = vld [vmem:[#allocation13 + $0x79c] sm:$0xff]
        %v3969 = vld [vmem:[#allocation13 + $0x7a4] sm:$0xf]
        %v3970 = vld [vmem:[#allocation13 + $0x7a8] sm:$0xff]
        %v3971 = vld [vmem:[#allocation13 + $0x7b0] sm:$0xff]
        %v3972 = vld [vmem:[#allocation13 + $0x7b8] sm:$0xff]
        %v3973 = vld [vmem:[#allocation13 + $0x7c0] sm:$0xf]
        %v3974 = vld [vmem:[#allocation13 + $0x7c4] sm:$0xff]
        %v3975 = vld [vmem:[#allocation13 + $0x7cc] sm:$0xff]
        %v3976 = vld [vmem:[#allocation13 + $0x7d4] sm:$0xff]
        %v3977 = vld [vmem:[#allocation13 + $0x7dc] sm:$0xf]
        %v3978 = vld [vmem:[#allocation13 + $0x7e0] sm:$0xff]
        %v3979 = vld [vmem:[#allocation13 + $0x7e8] sm:$0xff]
        %v3980 = vld [vmem:[#allocation13 + $0x7f0] sm:$0xff]
        %v3981 = vld [vmem:[#allocation13 + $0x7f8] sm:$0xf]
        %v3982 = vld [vmem:[#allocation13 + $0x7fc] sm:$0xff]
        %v3983 = vld [vmem:[#allocation13 + $0x804] sm:$0xff]
        %v3984 = vld [vmem:[#allocation13 + $0x80c] sm:$0xff]
        %v3985 = vld [vmem:[#allocation13 + $0x814] sm:$0xf]
        %v3986 = vld [vmem:[#allocation13 + $0x818] sm:$0xff]
        %v3987 = vld [vmem:[#allocation13 + $0x820] sm:$0xff]
        %v3988 = vld [vmem:[#allocation13 + $0x828] sm:$0xff]
        %v3989 = vld [vmem:[#allocation13 + $0x830] sm:$0xf]
        %v3990 = vld [vmem:[#allocation13 + $0x834] sm:$0xff]
        %v3991 = vld [vmem:[#allocation13 + $0x83c] sm:$0xff]
        %v3992 = vld [vmem:[#allocation13 + $0x844] sm:$0xff]
        %v3993 = vld [vmem:[#allocation13 + $0x84c] sm:$0xf]
        %v3994 = vld [vmem:[#allocation13 + $0x850] sm:$0xff]
        %v3995 = vld [vmem:[#allocation13 + $0x858] sm:$0xff]
        %v3996 = vld [vmem:[#allocation13 + $0x860] sm:$0xff]
        %v3997 = vld [vmem:[#allocation13 + $0x868] sm:$0xf]
        %v3998 = vld [vmem:[#allocation13 + $0x86c] sm:$0xff]
        %v3999 = vld [vmem:[#allocation13 + $0x874] sm:$0xff]
        %v4000 = vld [vmem:[#allocation13 + $0x87c] sm:$0xff]
        %v4001 = vld [vmem:[#allocation13 + $0x884] sm:$0xf]
        %v4002 = vld [vmem:[#allocation13 + $0x888] sm:$0xff]
        %v4003 = vld [vmem:[#allocation13 + $0x890] sm:$0xff]
        %v4004 = vld [vmem:[#allocation13 + $0x898] sm:$0xff]
        %v4005 = vld [vmem:[#allocation13 + $0x8a0] sm:$0xf]
        %v4006 = vld [vmem:[#allocation13 + $0x8a4] sm:$0xff]
        %v4007 = vld [vmem:[#allocation13 + $0x8ac] sm:$0xff]
        %v4008 = vld [vmem:[#allocation13 + $0x8b4] sm:$0xff]
        %v4009 = vld [vmem:[#allocation13 + $0x8bc] sm:$0xf]
        %v4010 = vld [vmem:[#allocation13 + $0x8c0] sm:$0xff]
        %v4011 = vld [vmem:[#allocation13 + $0x8c8] sm:$0xff]
        %v4012 = vld [vmem:[#allocation13 + $0x8d0] sm:$0xff]
        %v4013 = vld [vmem:[#allocation13 + $0x8d8] sm:$0xf]
        %v4014 = vld [vmem:[#allocation13 + $0x8dc] sm:$0xff]
        %v4015 = vld [vmem:[#allocation13 + $0x8e4] sm:$0xff]
        %v4016 = vld [vmem:[#allocation13 + $0x8ec] sm:$0xff]
        %v4017 = vld [vmem:[#allocation13 + $0x8f4] sm:$0xf]
        %v4018 = vld [vmem:[#allocation13 + $0x8f8] sm:$0xff]
        %v4019 = vld [vmem:[#allocation13 + $0x900] sm:$0xff]
        %v4020 = vld [vmem:[#allocation13 + $0x908] sm:$0xff]
        %v4021 = vld [vmem:[#allocation13 + $0x910] sm:$0xf]
        %v4022 = vld [vmem:[#allocation13 + $0x914] sm:$0xff]
        %v4023 = vld [vmem:[#allocation13 + $0x91c] sm:$0xff]
        %v4024 = vld [vmem:[#allocation13 + $0x924] sm:$0xff]
        %v4025 = vld [vmem:[#allocation13 + $0x92c] sm:$0xf]
        %v4026 = vld [vmem:[#allocation13 + $0x930] sm:$0xff]
        %v4027 = vld [vmem:[#allocation13 + $0x938] sm:$0xff]
        %v4028 = vld [vmem:[#allocation13 + $0x940] sm:$0xff]
        %v4029 = vld [vmem:[#allocation13 + $0x948] sm:$0xf]
        %v4030 = vld [vmem:[#allocation13 + $0x94c] sm:$0xff]
        %v4031 = vld [vmem:[#allocation13 + $0x954] sm:$0xff]
        %v4032 = vld [vmem:[#allocation13 + $0x95c] sm:$0xff]
        %v4033 = vld [vmem:[#allocation13 + $0x964] sm:$0xf]
        %v4034 = vld [vmem:[#allocation13 + $0x968] sm:$0xff]
        %v4035 = vld [vmem:[#allocation13 + $0x970] sm:$0xff]
        %v4036 = vld [vmem:[#allocation13 + $0x978] sm:$0xff]
        %v4037 = vld [vmem:[#allocation13 + $0x980] sm:$0xf]
        %v4038 = vld [vmem:[#allocation13 + $0x984] sm:$0xff]
        %v4039 = vld [vmem:[#allocation13 + $0x98c] sm:$0xff]
        %v4040 = vld [vmem:[#allocation13 + $0x994] sm:$0xff]
        %v4041 = vld [vmem:[#allocation13 + $0x99c] sm:$0xf]
        %v4042 = vld [vmem:[#allocation13 + $0x9a0] sm:$0xff]
        %v4043 = vld [vmem:[#allocation13 + $0x9a8] sm:$0xff]
        %v4044 = vld [vmem:[#allocation13 + $0x9b0] sm:$0xff]
        %v4045 = vld [vmem:[#allocation13 + $0x9b8] sm:$0xf]
        %v4046 = vld [vmem:[#allocation13 + $0x9bc] sm:$0xff]
        %v4047 = vld [vmem:[#allocation13 + $0x9c4] sm:$0xff]
        %v4048 = vld [vmem:[#allocation13 + $0x9cc] sm:$0xff]
        %v4049 = vld [vmem:[#allocation13 + $0x9d4] sm:$0xf]
        %v4050 = vld [vmem:[#allocation13 + $0x9d8] sm:$0xff]
        %v4051 = vld [vmem:[#allocation13 + $0x9e0] sm:$0xff]
        %v4052 = vld [vmem:[#allocation13 + $0x9e8] sm:$0xff]
        %v4053 = vld [vmem:[#allocation13 + $0x9f0] sm:$0xf]
        %v4054 = vld [vmem:[#allocation13 + $0x9f4] sm:$0xff]
        %v4055 = vld [vmem:[#allocation13 + $0x9fc] sm:$0xff]
        %v4056 = vld [vmem:[#allocation13 + $0xa04] sm:$0xff]
        %v4057 = vld [vmem:[#allocation13 + $0xa0c] sm:$0xf]
        %v4058 = vld [vmem:[#allocation13 + $0xa10] sm:$0xff]
        %v4059 = vld [vmem:[#allocation13 + $0xa18] sm:$0xff]
        %v4060 = vld [vmem:[#allocation13 + $0xa20] sm:$0xff]
        %v4061 = vld [vmem:[#allocation13 + $0xa28] sm:$0xf]
        %v4062 = vld [vmem:[#allocation13 + $0xa2c] sm:$0xff]
        %v4063 = vld [vmem:[#allocation13 + $0xa34] sm:$0xff]
        %v4064 = vld [vmem:[#allocation13 + $0xa3c] sm:$0xff]
        %v4065 = vld [vmem:[#allocation13 + $0xa44] sm:$0xf]
        %v4066 = vld [vmem:[#allocation13 + $0xa48] sm:$0xff]
        %v4067 = vld [vmem:[#allocation13 + $0xa50] sm:$0xff]
        %v4068 = vld [vmem:[#allocation13 + $0xa58] sm:$0xff]
        %v4069 = vld [vmem:[#allocation13 + $0xa60] sm:$0xf]
        %v4070 = vld [vmem:[#allocation13 + $0xa64] sm:$0xff]
        %v4071 = vld [vmem:[#allocation13 + $0xa6c] sm:$0xff]
        %v4072 = vld [vmem:[#allocation13 + $0xa74] sm:$0xff]
        %v4073 = vld [vmem:[#allocation13 + $0xa7c] sm:$0xf]
        %v4074 = vld [vmem:[#allocation13 + $0xa80] sm:$0xff]
        %v4075 = vld [vmem:[#allocation13 + $0xa88] sm:$0xff]
        %v4076 = vld [vmem:[#allocation13 + $0xa90] sm:$0xff]
        %v4077 = vld [vmem:[#allocation13 + $0xa98] sm:$0xf]
        %v4078 = vld [vmem:[#allocation13 + $0xa9c] sm:$0xff]
        %v4079 = vld [vmem:[#allocation13 + $0xaa4] sm:$0xff]
        %v4080 = vld [vmem:[#allocation13 + $0xaac] sm:$0xff]
        %v4081 = vld [vmem:[#allocation13 + $0xab4] sm:$0xf]
        %v4082 = vld [vmem:[#allocation13 + $0xab8] sm:$0xff]
        %v4083 = vld [vmem:[#allocation13 + $0xac0] sm:$0xff]
        %v4084 = vld [vmem:[#allocation13 + $0xac8] sm:$0xff]
        %v4085 = vld [vmem:[#allocation13 + $0xad0] sm:$0xf]
        %v4086 = vld [vmem:[#allocation13 + $0xad4] sm:$0xff]
        %v4087 = vld [vmem:[#allocation13 + $0xadc] sm:$0xff]
        %v4088 = vld [vmem:[#allocation13 + $0xae4] sm:$0xff]
        %v4089 = vld [vmem:[#allocation13 + $0xaec] sm:$0xf]
        %v4090 = vld [vmem:[#allocation13 + $0xaf0] sm:$0xff]
        %v4091 = vld [vmem:[#allocation13 + $0xaf8] sm:$0xff]
        %v4092 = vld [vmem:[#allocation13 + $0xb00] sm:$0xff]
        %v4093 = vld [vmem:[#allocation13 + $0xb08] sm:$0xf]
        %v4094 = vld [vmem:[#allocation13 + $0xb0c] sm:$0xff]
        %v4095 = vld [vmem:[#allocation13 + $0xb14] sm:$0xff]
        %v4096 = vld [vmem:[#allocation13 + $0xb1c] sm:$0xff]
        %v4097 = vld [vmem:[#allocation13 + $0xb24] sm:$0xf]
        %v4098 = vld [vmem:[#allocation13 + $0xb28] sm:$0xff]
        %v4099 = vld [vmem:[#allocation13 + $0xb30] sm:$0xff]
        %v4100 = vld [vmem:[#allocation13 + $0xb38] sm:$0xff]
        %v4101 = vld [vmem:[#allocation13 + $0xb40] sm:$0xf]
        %v4102 = vld [vmem:[#allocation13 + $0xb44] sm:$0xff]
        %v4103 = vld [vmem:[#allocation13 + $0xb4c] sm:$0xff]
        %v4104 = vld [vmem:[#allocation13 + $0xb54] sm:$0xff]
        %v4105 = vld [vmem:[#allocation13 + $0xb5c] sm:$0xf]
        %v4106 = vld [vmem:[#allocation13 + $0xb60] sm:$0xff]
        %v4107 = vld [vmem:[#allocation13 + $0xb68] sm:$0xff]
        %v4108 = vld [vmem:[#allocation13 + $0xb70] sm:$0xff]
        %v4109 = vld [vmem:[#allocation13 + $0xb78] sm:$0xf]
        %v4110 = vld [vmem:[#allocation13 + $0xb7c] sm:$0xff]
        %v4111 = vld [vmem:[#allocation13 + $0xb84] sm:$0xff]
        %v4112 = vld [vmem:[#allocation13 + $0xb8c] sm:$0xff]
        %v4113 = vld [vmem:[#allocation13 + $0xb94] sm:$0xf]
        %v4114 = vld [vmem:[#allocation13 + $0xb98] sm:$0xff]
        %v4115 = vld [vmem:[#allocation13 + $0xba0] sm:$0xff]
        %v4116 = vld [vmem:[#allocation13 + $0xba8] sm:$0xff]
        %v4117 = vld [vmem:[#allocation13 + $0xbb0] sm:$0xf]
        %v4118 = vld [vmem:[#allocation13 + $0xbb4] sm:$0xff]
        %v4119 = vld [vmem:[#allocation13 + $0xbbc] sm:$0xff]
        %v4120 = vld [vmem:[#allocation13 + $0xbc4] sm:$0xff]
        %v4121 = vld [vmem:[#allocation13 + $0xbcc] sm:$0xf]
        %v4122 = vld [vmem:[#allocation13 + $0xbd0] sm:$0xff]
        %v4123 = vld [vmem:[#allocation13 + $0xbd8] sm:$0xff]
        %v4124 = vld [vmem:[#allocation13 + $0xbe0] sm:$0xff]
        %v4125 = vld [vmem:[#allocation13 + $0xbe8] sm:$0xf]
        %v4126 = vld [vmem:[#allocation13 + $0xbec] sm:$0xff]
        %v4127 = vld [vmem:[#allocation13 + $0xbf4] sm:$0xff]
        %v4128 = vld [vmem:[#allocation13 + $0xbfc] sm:$0xff]
        %v4129 = vld [vmem:[#allocation13 + $0xc04] sm:$0xf]
        %v4130 = vld [vmem:[#allocation13 + $0xc08] sm:$0xff]
        %v4131 = vld [vmem:[#allocation13 + $0xc10] sm:$0xff]
        %v4132 = vld [vmem:[#allocation13 + $0xc18] sm:$0xff]
        %v4133 = vld [vmem:[#allocation13 + $0xc20] sm:$0xf]
        %v4134 = vld [vmem:[#allocation13 + $0xc24] sm:$0xff]
        %v4135 = vld [vmem:[#allocation13 + $0xc2c] sm:$0xff]
        %v4136 = vld [vmem:[#allocation13 + $0xc34] sm:$0xff]
        %v4137 = vld [vmem:[#allocation13 + $0xc3c] sm:$0xf]
        %v4138 = vld [vmem:[#allocation13 + $0xc40] sm:$0xff]
        %v4139 = vld [vmem:[#allocation13 + $0xc48] sm:$0xff]
        %v4140 = vld [vmem:[#allocation13 + $0xc50] sm:$0xff]
        %v4141 = vld [vmem:[#allocation13 + $0xc58] sm:$0xf]
        %v4142 = vld [vmem:[#allocation13 + $0xc5c] sm:$0xff]
        %v4143 = vld [vmem:[#allocation13 + $0xc64] sm:$0xff]
        %v4144 = vld [vmem:[#allocation13 + $0xc6c] sm:$0xff]
        %v4145 = vld [vmem:[#allocation13 + $0xc74] sm:$0xf]
        %v4146 = vld [vmem:[#allocation13 + $0xc78] sm:$0xff]
        %v4147 = vld [vmem:[#allocation13 + $0xc80] sm:$0xff]
        %v4148 = vld [vmem:[#allocation13 + $0xc88] sm:$0xff]
        %v4149 = vld [vmem:[#allocation13 + $0xc90] sm:$0xf]
        %v4150 = vld [vmem:[#allocation13 + $0xc94] sm:$0xff]
        %v4151 = vld [vmem:[#allocation13 + $0xc9c] sm:$0xff]
        %v4152 = vld [vmem:[#allocation13 + $0xca4] sm:$0xff]
        %v4153 = vld [vmem:[#allocation13 + $0xcac] sm:$0xf]
        %v4154 = vld [vmem:[#allocation13 + $0xcb0] sm:$0xff]
        %v4155 = vld [vmem:[#allocation13 + $0xcb8] sm:$0xff]
        %v4156 = vld [vmem:[#allocation13 + $0xcc0] sm:$0xff]
        %v4157 = vld [vmem:[#allocation13 + $0xcc8] sm:$0xf]
        %v4158 = vld [vmem:[#allocation13 + $0xccc] sm:$0xff]
        %v4159 = vld [vmem:[#allocation13 + $0xcd4] sm:$0xff]
        %v4160 = vld [vmem:[#allocation13 + $0xcdc] sm:$0xff]
        %v4161 = vld [vmem:[#allocation13 + $0xce4] sm:$0xf]
        %v4162 = vld [vmem:[#allocation13 + $0xce8] sm:$0xff]
        %v4163 = vld [vmem:[#allocation13 + $0xcf0] sm:$0xff]
        %v4164 = vld [vmem:[#allocation13 + $0xcf8] sm:$0xff]
        %v4165 = vld [vmem:[#allocation13 + $0xd00] sm:$0xf]
        %v4166 = vld [vmem:[#allocation13 + $0xd04] sm:$0xff]
        %v4167 = vld [vmem:[#allocation13 + $0xd0c] sm:$0xff]
        %v4168 = vld [vmem:[#allocation13 + $0xd14] sm:$0xff]
        %v4169 = vld [vmem:[#allocation13 + $0xd1c] sm:$0xf]
        %v4170 = vld [vmem:[#allocation13 + $0xd20] sm:$0xff]
        %v4171 = vld [vmem:[#allocation13 + $0xd28] sm:$0xff]
        %v4172 = vld [vmem:[#allocation13 + $0xd30] sm:$0xff]
        %v4173 = vld [vmem:[#allocation13 + $0xd38] sm:$0xf]
        %v4174 = vld [vmem:[#allocation13 + $0xd3c] sm:$0xff]
        %v4175 = vld [vmem:[#allocation13 + $0xd44] sm:$0xff]
        %v4176 = vld [vmem:[#allocation13 + $0xd4c] sm:$0xff]
        %v4177 = vld [vmem:[#allocation13 + $0xd54] sm:$0xf]
        %v4178 = vld [vmem:[#allocation13 + $0xd58] sm:$0xff]
        %v4179 = vld [vmem:[#allocation13 + $0xd60] sm:$0xff]
        %v4180 = vld [vmem:[#allocation13 + $0xd68] sm:$0xff]
        %v4181 = vld [vmem:[#allocation13 + $0xd70] sm:$0xf]
        %v4182 = vld [vmem:[#allocation13 + $0xd74] sm:$0xff]
        %v4183 = vld [vmem:[#allocation13 + $0xd7c] sm:$0xff]
        %v4184 = vld [vmem:[#allocation13 + $0xd84] sm:$0xff]
        %v4185 = vld [vmem:[#allocation13 + $0xd8c] sm:$0xf]
        %v4186 = vld [vmem:[#allocation13 + $0xd90] sm:$0xff]
        %v4187 = vld [vmem:[#allocation13 + $0xd98] sm:$0xff]
        %v4188 = vld [vmem:[#allocation13 + $0xda0] sm:$0xff]
        %v4189 = vld [vmem:[#allocation13 + $0xda8] sm:$0xf]
        %v4190 = vld [vmem:[#allocation13 + $0xdac] sm:$0xff]
        %v4191 = vld [vmem:[#allocation13 + $0xdb4] sm:$0xff]
        %v4192 = vld [vmem:[#allocation13 + $0xdbc] sm:$0xff]
        %v4193 = vld [vmem:[#allocation13 + $0xdc4] sm:$0xf]
        %v4194 = vld [vmem:[#allocation13 + $0xdc8] sm:$0xff]
        %v4195 = vld [vmem:[#allocation13 + $0xdd0] sm:$0xff]
        %v4196 = vld [vmem:[#allocation13 + $0xdd8] sm:$0xff]
        %v4197 = vld [vmem:[#allocation13 + $0xde0] sm:$0xf]
        %v4198 = vld [vmem:[#allocation13 + $0xde4] sm:$0xff]
        %v4199 = vld [vmem:[#allocation13 + $0xdec] sm:$0xff]
        %v4200 = vld [vmem:[#allocation13 + $0xdf4] sm:$0xff]
        %v4201 = vld [vmem:[#allocation13 + $0xdfc] sm:$0xf]
        %v4203 = vperm.slane %v3681, 0
        %v4204 = vperm.slane %v3681, 1
        %v4205 = vperm.slane %v3681, 2
        %v4206 = vperm.slane %v3681, 3
        %v4207 = vperm.slane %v3681, 4
        %v4208 = vperm.slane %v3681, 5
        %v4209 = vperm.slane %v3681, 6
        %v4729 = vunpack.c.l.b16 %v3690
        %v4730 = vunpack.c.h.b16 %v3690
        %v4731 = vunpack.c.l.b16 %v3691
        %v4732 = vunpack.c.h.b16 %v3691
        %v4733 = vunpack.c.l.b16 %v3692
        %v4734 = vunpack.c.h.b16 %v3692
        %v4735 = vunpack.c.l.b16 %v3693
        %v4736 = vunpack.c.l.b16 %v3694
        %v4737 = vunpack.c.h.b16 %v3694
        %v4738 = vunpack.c.l.b16 %v3695
        %v4739 = vunpack.c.h.b16 %v3695
        %v4740 = vunpack.c.l.b16 %v3696
        %v4741 = vunpack.c.h.b16 %v3696
        %v4742 = vunpack.c.l.b16 %v3697
        %v4743 = vunpack.c.l.b16 %v3698
        %v4744 = vunpack.c.h.b16 %v3698
        %v4745 = vunpack.c.l.b16 %v3699
        %v4746 = vunpack.c.h.b16 %v3699
        %v4747 = vunpack.c.l.b16 %v3700
        %v4748 = vunpack.c.h.b16 %v3700
        %v4749 = vunpack.c.l.b16 %v3701
        %v4750 = vunpack.c.l.b16 %v3702
        %v4751 = vunpack.c.h.b16 %v3702
        %v4752 = vunpack.c.l.b16 %v3703
        %v4753 = vunpack.c.h.b16 %v3703
        %v4754 = vunpack.c.l.b16 %v3704
        %v4755 = vunpack.c.h.b16 %v3704
        %v4756 = vunpack.c.l.b16 %v3705
        %v4757 = vunpack.c.l.b16 %v3706
        %v4758 = vunpack.c.h.b16 %v3706
        %v4759 = vunpack.c.l.b16 %v3707
        %v4760 = vunpack.c.h.b16 %v3707
        %v4761 = vunpack.c.l.b16 %v3708
        %v4762 = vunpack.c.h.b16 %v3708
        %v4763 = vunpack.c.l.b16 %v3709
        %v4764 = vunpack.c.l.b16 %v3710
        %v4765 = vunpack.c.h.b16 %v3710
        %v4766 = vunpack.c.l.b16 %v3711
        %v4767 = vunpack.c.h.b16 %v3711
        %v4768 = vunpack.c.l.b16 %v3712
        %v4769 = vunpack.c.h.b16 %v3712
        %v4770 = vunpack.c.l.b16 %v3713
        %v4771 = vunpack.c.l.b16 %v3714
        %v4772 = vunpack.c.h.b16 %v3714
        %v4773 = vunpack.c.l.b16 %v3715
        %v4774 = vunpack.c.h.b16 %v3715
        %v4775 = vunpack.c.l.b16 %v3716
        %v4776 = vunpack.c.h.b16 %v3716
        %v4777 = vunpack.c.l.b16 %v3717
        %v4778 = vunpack.c.l.b16 %v3718
        %v4779 = vunpack.c.h.b16 %v3718
        %v4780 = vunpack.c.l.b16 %v3719
        %v4781 = vunpack.c.h.b16 %v3719
        %v4782 = vunpack.c.l.b16 %v3720
        %v4783 = vunpack.c.h.b16 %v3720
        %v4784 = vunpack.c.l.b16 %v3721
        %v4785 = vunpack.c.l.b16 %v3722
        %v4786 = vunpack.c.h.b16 %v3722
        %v4787 = vunpack.c.l.b16 %v3723
        %v4788 = vunpack.c.h.b16 %v3723
        %v4789 = vunpack.c.l.b16 %v3724
        %v4790 = vunpack.c.h.b16 %v3724
        %v4791 = vunpack.c.l.b16 %v3725
        %v4792 = vunpack.c.l.b16 %v3726
        %v4793 = vunpack.c.h.b16 %v3726
        %v4794 = vunpack.c.l.b16 %v3727
        %v4795 = vunpack.c.h.b16 %v3727
        %v4796 = vunpack.c.l.b16 %v3728
        %v4797 = vunpack.c.h.b16 %v3728
        %v4798 = vunpack.c.l.b16 %v3729
        %v4799 = vunpack.c.l.b16 %v3730
        %v4800 = vunpack.c.h.b16 %v3730
        %v4801 = vunpack.c.l.b16 %v3731
        %v4802 = vunpack.c.h.b16 %v3731
        %v4803 = vunpack.c.l.b16 %v3732
        %v4804 = vunpack.c.h.b16 %v3732
        %v4805 = vunpack.c.l.b16 %v3733
        %v4806 = vunpack.c.l.b16 %v3734
        %v4807 = vunpack.c.h.b16 %v3734
        %v4808 = vunpack.c.l.b16 %v3735
        %v4809 = vunpack.c.h.b16 %v3735
        %v4810 = vunpack.c.l.b16 %v3736
        %v4811 = vunpack.c.h.b16 %v3736
        %v4812 = vunpack.c.l.b16 %v3737
        %v4813 = vunpack.c.l.b16 %v3738
        %v4814 = vunpack.c.h.b16 %v3738
        %v4815 = vunpack.c.l.b16 %v3739
        %v4816 = vunpack.c.h.b16 %v3739
        %v4817 = vunpack.c.l.b16 %v3740
        %v4818 = vunpack.c.h.b16 %v3740
        %v4819 = vunpack.c.l.b16 %v3741
        %v4820 = vunpack.c.l.b16 %v3742
        %v4821 = vunpack.c.h.b16 %v3742
        %v4822 = vunpack.c.l.b16 %v3743
        %v4823 = vunpack.c.h.b16 %v3743
        %v4824 = vunpack.c.l.b16 %v3744
        %v4825 = vunpack.c.h.b16 %v3744
        %v4826 = vunpack.c.l.b16 %v3745
        %v4827 = vunpack.c.l.b16 %v3746
        %v4828 = vunpack.c.h.b16 %v3746
        %v4829 = vunpack.c.l.b16 %v3747
        %v4830 = vunpack.c.h.b16 %v3747
        %v4831 = vunpack.c.l.b16 %v3748
        %v4832 = vunpack.c.h.b16 %v3748
        %v4833 = vunpack.c.l.b16 %v3749
        %v4834 = vunpack.c.l.b16 %v3750
        %v4835 = vunpack.c.h.b16 %v3750
        %v4836 = vunpack.c.l.b16 %v3751
        %v4837 = vunpack.c.h.b16 %v3751
        %v4838 = vunpack.c.l.b16 %v3752
        %v4839 = vunpack.c.h.b16 %v3752
        %v4840 = vunpack.c.l.b16 %v3753
        %v4841 = vunpack.c.l.b16 %v3754
        %v4842 = vunpack.c.h.b16 %v3754
        %v4843 = vunpack.c.l.b16 %v3755
        %v4844 = vunpack.c.h.b16 %v3755
        %v4845 = vunpack.c.l.b16 %v3756
        %v4846 = vunpack.c.h.b16 %v3756
        %v4847 = vunpack.c.l.b16 %v3757
        %v4848 = vunpack.c.l.b16 %v3758
        %v4849 = vunpack.c.h.b16 %v3758
        %v4850 = vunpack.c.l.b16 %v3759
        %v4851 = vunpack.c.h.b16 %v3759
        %v4852 = vunpack.c.l.b16 %v3760
        %v4853 = vunpack.c.h.b16 %v3760
        %v4854 = vunpack.c.l.b16 %v3761
        %v4855 = vunpack.c.l.b16 %v3762
        %v4856 = vunpack.c.h.b16 %v3762
        %v4857 = vunpack.c.l.b16 %v3763
        %v4858 = vunpack.c.h.b16 %v3763
        %v4859 = vunpack.c.l.b16 %v3764
        %v4860 = vunpack.c.h.b16 %v3764
        %v4861 = vunpack.c.l.b16 %v3765
        %v4862 = vunpack.c.l.b16 %v3766
        %v4863 = vunpack.c.h.b16 %v3766
        %v4864 = vunpack.c.l.b16 %v3767
        %v4865 = vunpack.c.h.b16 %v3767
        %v4866 = vunpack.c.l.b16 %v3768
        %v4867 = vunpack.c.h.b16 %v3768
        %v4868 = vunpack.c.l.b16 %v3769
        %v4869 = vunpack.c.l.b16 %v3770
        %v4870 = vunpack.c.h.b16 %v3770
        %v4871 = vunpack.c.l.b16 %v3771
        %v4872 = vunpack.c.h.b16 %v3771
        %v4873 = vunpack.c.l.b16 %v3772
        %v4874 = vunpack.c.h.b16 %v3772
        %v4875 = vunpack.c.l.b16 %v3773
        %v4876 = vunpack.c.l.b16 %v3774
        %v4877 = vunpack.c.h.b16 %v3774
        %v4878 = vunpack.c.l.b16 %v3775
        %v4879 = vunpack.c.h.b16 %v3775
        %v4880 = vunpack.c.l.b16 %v3776
        %v4881 = vunpack.c.h.b16 %v3776
        %v4882 = vunpack.c.l.b16 %v3777
        %v4883 = vunpack.c.l.b16 %v3778
        %v4884 = vunpack.c.h.b16 %v3778
        %v4885 = vunpack.c.l.b16 %v3779
        %v4886 = vunpack.c.h.b16 %v3779
        %v4887 = vunpack.c.l.b16 %v3780
        %v4888 = vunpack.c.h.b16 %v3780
        %v4889 = vunpack.c.l.b16 %v3781
        %v4890 = vunpack.c.l.b16 %v3782
        %v4891 = vunpack.c.h.b16 %v3782
        %v4892 = vunpack.c.l.b16 %v3783
        %v4893 = vunpack.c.h.b16 %v3783
        %v4894 = vunpack.c.l.b16 %v3784
        %v4895 = vunpack.c.h.b16 %v3784
        %v4896 = vunpack.c.l.b16 %v3785
        %v4897 = vunpack.c.l.b16 %v3786
        %v4898 = vunpack.c.h.b16 %v3786
        %v4899 = vunpack.c.l.b16 %v3787
        %v4900 = vunpack.c.h.b16 %v3787
        %v4901 = vunpack.c.l.b16 %v3788
        %v4902 = vunpack.c.h.b16 %v3788
        %v4903 = vunpack.c.l.b16 %v3789
        %v4904 = vunpack.c.l.b16 %v3790
        %v4905 = vunpack.c.h.b16 %v3790
        %v4906 = vunpack.c.l.b16 %v3791
        %v4907 = vunpack.c.h.b16 %v3791
        %v4908 = vunpack.c.l.b16 %v3792
        %v4909 = vunpack.c.h.b16 %v3792
        %v4910 = vunpack.c.l.b16 %v3793
        %v4911 = vunpack.c.l.b16 %v3794
        %v4912 = vunpack.c.h.b16 %v3794
        %v4913 = vunpack.c.l.b16 %v3795
        %v4914 = vunpack.c.h.b16 %v3795
        %v4915 = vunpack.c.l.b16 %v3796
        %v4916 = vunpack.c.h.b16 %v3796
        %v4917 = vunpack.c.l.b16 %v3797
        %v4918 = vunpack.c.l.b16 %v3798
        %v4919 = vunpack.c.h.b16 %v3798
        %v4920 = vunpack.c.l.b16 %v3799
        %v4921 = vunpack.c.h.b16 %v3799
        %v4922 = vunpack.c.l.b16 %v3800
        %v4923 = vunpack.c.h.b16 %v3800
        %v4924 = vunpack.c.l.b16 %v3801
        %v4925 = vunpack.c.l.b16 %v3802
        %v4926 = vunpack.c.h.b16 %v3802
        %v4927 = vunpack.c.l.b16 %v3803
        %v4928 = vunpack.c.h.b16 %v3803
        %v4929 = vunpack.c.l.b16 %v3804
        %v4930 = vunpack.c.h.b16 %v3804
        %v4931 = vunpack.c.l.b16 %v3805
        %v4932 = vunpack.c.l.b16 %v3806
        %v4933 = vunpack.c.h.b16 %v3806
        %v4934 = vunpack.c.l.b16 %v3807
        %v4935 = vunpack.c.h.b16 %v3807
        %v4936 = vunpack.c.l.b16 %v3808
        %v4937 = vunpack.c.h.b16 %v3808
        %v4938 = vunpack.c.l.b16 %v3809
        %v4939 = vunpack.c.l.b16 %v3810
        %v4940 = vunpack.c.h.b16 %v3810
        %v4941 = vunpack.c.l.b16 %v3811
        %v4942 = vunpack.c.h.b16 %v3811
        %v4943 = vunpack.c.l.b16 %v3812
        %v4944 = vunpack.c.h.b16 %v3812
        %v4945 = vunpack.c.l.b16 %v3813
        %v4946 = vunpack.c.l.b16 %v3814
        %v4947 = vunpack.c.h.b16 %v3814
        %v4948 = vunpack.c.l.b16 %v3815
        %v4949 = vunpack.c.h.b16 %v3815
        %v4950 = vunpack.c.l.b16 %v3816
        %v4951 = vunpack.c.h.b16 %v3816
        %v4952 = vunpack.c.l.b16 %v3817
        %v4953 = vunpack.c.l.b16 %v3818
        %v4954 = vunpack.c.h.b16 %v3818
        %v4955 = vunpack.c.l.b16 %v3819
        %v4956 = vunpack.c.h.b16 %v3819
        %v4957 = vunpack.c.l.b16 %v3820
        %v4958 = vunpack.c.h.b16 %v3820
        %v4959 = vunpack.c.l.b16 %v3821
        %v4960 = vunpack.c.l.b16 %v3822
        %v4961 = vunpack.c.h.b16 %v3822
        %v4962 = vunpack.c.l.b16 %v3823
        %v4963 = vunpack.c.h.b16 %v3823
        %v4964 = vunpack.c.l.b16 %v3824
        %v4965 = vunpack.c.h.b16 %v3824
        %v4966 = vunpack.c.l.b16 %v3825
        %v4967 = vunpack.c.l.b16 %v3826
        %v4968 = vunpack.c.h.b16 %v3826
        %v4969 = vunpack.c.l.b16 %v3827
        %v4970 = vunpack.c.h.b16 %v3827
        %v4971 = vunpack.c.l.b16 %v3828
        %v4972 = vunpack.c.h.b16 %v3828
        %v4973 = vunpack.c.l.b16 %v3829
        %v4974 = vunpack.c.l.b16 %v3830
        %v4975 = vunpack.c.h.b16 %v3830
        %v4976 = vunpack.c.l.b16 %v3831
        %v4977 = vunpack.c.h.b16 %v3831
        %v4978 = vunpack.c.l.b16 %v3832
        %v4979 = vunpack.c.h.b16 %v3832
        %v4980 = vunpack.c.l.b16 %v3833
        %v4981 = vunpack.c.l.b16 %v3834
        %v4982 = vunpack.c.h.b16 %v3834
        %v4983 = vunpack.c.l.b16 %v3835
        %v4984 = vunpack.c.h.b16 %v3835
        %v4985 = vunpack.c.l.b16 %v3836
        %v4986 = vunpack.c.h.b16 %v3836
        %v4987 = vunpack.c.l.b16 %v3837
        %v4988 = vunpack.c.l.b16 %v3838
        %v4989 = vunpack.c.h.b16 %v3838
        %v4990 = vunpack.c.l.b16 %v3839
        %v4991 = vunpack.c.h.b16 %v3839
        %v4992 = vunpack.c.l.b16 %v3840
        %v4993 = vunpack.c.h.b16 %v3840
        %v4994 = vunpack.c.l.b16 %v3841
        %v4995 = vunpack.c.l.b16 %v3842
        %v4996 = vunpack.c.h.b16 %v3842
        %v4997 = vunpack.c.l.b16 %v3843
        %v4998 = vunpack.c.h.b16 %v3843
        %v4999 = vunpack.c.l.b16 %v3844
        %v5000 = vunpack.c.h.b16 %v3844
        %v5001 = vunpack.c.l.b16 %v3845
        %v5002 = vunpack.c.l.b16 %v3846
        %v5003 = vunpack.c.h.b16 %v3846
        %v5004 = vunpack.c.l.b16 %v3847
        %v5005 = vunpack.c.h.b16 %v3847
        %v5006 = vunpack.c.l.b16 %v3848
        %v5007 = vunpack.c.h.b16 %v3848
        %v5008 = vunpack.c.l.b16 %v3849
        %v5009 = vunpack.c.l.b16 %v3850
        %v5010 = vunpack.c.h.b16 %v3850
        %v5011 = vunpack.c.l.b16 %v3851
        %v5012 = vunpack.c.h.b16 %v3851
        %v5013 = vunpack.c.l.b16 %v3852
        %v5014 = vunpack.c.h.b16 %v3852
        %v5015 = vunpack.c.l.b16 %v3853
        %v5016 = vunpack.c.l.b16 %v3854
        %v5017 = vunpack.c.h.b16 %v3854
        %v5018 = vunpack.c.l.b16 %v3855
        %v5019 = vunpack.c.h.b16 %v3855
        %v5020 = vunpack.c.l.b16 %v3856
        %v5021 = vunpack.c.h.b16 %v3856
        %v5022 = vunpack.c.l.b16 %v3857
        %v5023 = vunpack.c.l.b16 %v3858
        %v5024 = vunpack.c.h.b16 %v3858
        %v5025 = vunpack.c.l.b16 %v3859
        %v5026 = vunpack.c.h.b16 %v3859
        %v5027 = vunpack.c.l.b16 %v3860
        %v5028 = vunpack.c.h.b16 %v3860
        %v5029 = vunpack.c.l.b16 %v3861
        %v5030 = vunpack.c.l.b16 %v3862
        %v5031 = vunpack.c.h.b16 %v3862
        %v5032 = vunpack.c.l.b16 %v3863
        %v5033 = vunpack.c.h.b16 %v3863
        %v5034 = vunpack.c.l.b16 %v3864
        %v5035 = vunpack.c.h.b16 %v3864
        %v5036 = vunpack.c.l.b16 %v3865
        %v5037 = vunpack.c.l.b16 %v3866
        %v5038 = vunpack.c.h.b16 %v3866
        %v5039 = vunpack.c.l.b16 %v3867
        %v5040 = vunpack.c.h.b16 %v3867
        %v5041 = vunpack.c.l.b16 %v3868
        %v5042 = vunpack.c.h.b16 %v3868
        %v5043 = vunpack.c.l.b16 %v3869
        %v5044 = vunpack.c.l.b16 %v3870
        %v5045 = vunpack.c.h.b16 %v3870
        %v5046 = vunpack.c.l.b16 %v3871
        %v5047 = vunpack.c.h.b16 %v3871
        %v5048 = vunpack.c.l.b16 %v3872
        %v5049 = vunpack.c.h.b16 %v3872
        %v5050 = vunpack.c.l.b16 %v3873
        %v5051 = vunpack.c.l.b16 %v3874
        %v5052 = vunpack.c.h.b16 %v3874
        %v5053 = vunpack.c.l.b16 %v3875
        %v5054 = vunpack.c.h.b16 %v3875
        %v5055 = vunpack.c.l.b16 %v3876
        %v5056 = vunpack.c.h.b16 %v3876
        %v5057 = vunpack.c.l.b16 %v3877
        %v5058 = vunpack.c.l.b16 %v3878
        %v5059 = vunpack.c.h.b16 %v3878
        %v5060 = vunpack.c.l.b16 %v3879
        %v5061 = vunpack.c.h.b16 %v3879
        %v5062 = vunpack.c.l.b16 %v3880
        %v5063 = vunpack.c.h.b16 %v3880
        %v5064 = vunpack.c.l.b16 %v3881
        %v5065 = vunpack.c.l.b16 %v3882
        %v5066 = vunpack.c.h.b16 %v3882
        %v5067 = vunpack.c.l.b16 %v3883
        %v5068 = vunpack.c.h.b16 %v3883
        %v5069 = vunpack.c.l.b16 %v3884
        %v5070 = vunpack.c.h.b16 %v3884
        %v5071 = vunpack.c.l.b16 %v3885
        %v5072 = vunpack.c.l.b16 %v3886
        %v5073 = vunpack.c.h.b16 %v3886
        %v5074 = vunpack.c.l.b16 %v3887
        %v5075 = vunpack.c.h.b16 %v3887
        %v5076 = vunpack.c.l.b16 %v3888
        %v5077 = vunpack.c.h.b16 %v3888
        %v5078 = vunpack.c.l.b16 %v3889
        %v5079 = vunpack.c.l.b16 %v3890
        %v5080 = vunpack.c.h.b16 %v3890
        %v5081 = vunpack.c.l.b16 %v3891
        %v5082 = vunpack.c.h.b16 %v3891
        %v5083 = vunpack.c.l.b16 %v3892
        %v5084 = vunpack.c.h.b16 %v3892
        %v5085 = vunpack.c.l.b16 %v3893
        %v5086 = vunpack.c.l.b16 %v3894
        %v5087 = vunpack.c.h.b16 %v3894
        %v5088 = vunpack.c.l.b16 %v3895
        %v5089 = vunpack.c.h.b16 %v3895
        %v5090 = vunpack.c.l.b16 %v3896
        %v5091 = vunpack.c.h.b16 %v3896
        %v5092 = vunpack.c.l.b16 %v3897
        %v5093 = vunpack.c.l.b16 %v3898
        %v5094 = vunpack.c.h.b16 %v3898
        %v5095 = vunpack.c.l.b16 %v3899
        %v5096 = vunpack.c.h.b16 %v3899
        %v5097 = vunpack.c.l.b16 %v3900
        %v5098 = vunpack.c.h.b16 %v3900
        %v5099 = vunpack.c.l.b16 %v3901
        %v5100 = vunpack.c.l.b16 %v3902
        %v5101 = vunpack.c.h.b16 %v3902
        %v5102 = vunpack.c.l.b16 %v3903
        %v5103 = vunpack.c.h.b16 %v3903
        %v5104 = vunpack.c.l.b16 %v3904
        %v5105 = vunpack.c.h.b16 %v3904
        %v5106 = vunpack.c.l.b16 %v3905
        %v5107 = vunpack.c.l.b16 %v3906
        %v5108 = vunpack.c.h.b16 %v3906
        %v5109 = vunpack.c.l.b16 %v3907
        %v5110 = vunpack.c.h.b16 %v3907
        %v5111 = vunpack.c.l.b16 %v3908
        %v5112 = vunpack.c.h.b16 %v3908
        %v5113 = vunpack.c.l.b16 %v3909
        %v5114 = vunpack.c.l.b16 %v3910
        %v5115 = vunpack.c.h.b16 %v3910
        %v5116 = vunpack.c.l.b16 %v3911
        %v5117 = vunpack.c.h.b16 %v3911
        %v5118 = vunpack.c.l.b16 %v3912
        %v5119 = vunpack.c.h.b16 %v3912
        %v5120 = vunpack.c.l.b16 %v3913
        %v5121 = vunpack.c.l.b16 %v3914
        %v5122 = vunpack.c.h.b16 %v3914
        %v5123 = vunpack.c.l.b16 %v3915
        %v5124 = vunpack.c.h.b16 %v3915
        %v5125 = vunpack.c.l.b16 %v3916
        %v5126 = vunpack.c.h.b16 %v3916
        %v5127 = vunpack.c.l.b16 %v3917
        %v5128 = vunpack.c.l.b16 %v3918
        %v5129 = vunpack.c.h.b16 %v3918
        %v5130 = vunpack.c.l.b16 %v3919
        %v5131 = vunpack.c.h.b16 %v3919
        %v5132 = vunpack.c.l.b16 %v3920
        %v5133 = vunpack.c.h.b16 %v3920
        %v5134 = vunpack.c.l.b16 %v3921
        %v5135 = vunpack.c.l.b16 %v3922
        %v5136 = vunpack.c.h.b16 %v3922
        %v5137 = vunpack.c.l.b16 %v3923
        %v5138 = vunpack.c.h.b16 %v3923
        %v5139 = vunpack.c.l.b16 %v3924
        %v5140 = vunpack.c.h.b16 %v3924
        %v5141 = vunpack.c.l.b16 %v3925
        %v5142 = vunpack.c.l.b16 %v3926
        %v5143 = vunpack.c.h.b16 %v3926
        %v5144 = vunpack.c.l.b16 %v3927
        %v5145 = vunpack.c.h.b16 %v3927
        %v5146 = vunpack.c.l.b16 %v3928
        %v5147 = vunpack.c.h.b16 %v3928
        %v5148 = vunpack.c.l.b16 %v3929
        %v5149 = vunpack.c.l.b16 %v3930
        %v5150 = vunpack.c.h.b16 %v3930
        %v5151 = vunpack.c.l.b16 %v3931
        %v5152 = vunpack.c.h.b16 %v3931
        %v5153 = vunpack.c.l.b16 %v3932
        %v5154 = vunpack.c.h.b16 %v3932
        %v5155 = vunpack.c.l.b16 %v3933
        %v5156 = vunpack.c.l.b16 %v3934
        %v5157 = vunpack.c.h.b16 %v3934
        %v5158 = vunpack.c.l.b16 %v3935
        %v5159 = vunpack.c.h.b16 %v3935
        %v5160 = vunpack.c.l.b16 %v3936
        %v5161 = vunpack.c.h.b16 %v3936
        %v5162 = vunpack.c.l.b16 %v3937
        %v5163 = vunpack.c.l.b16 %v3938
        %v5164 = vunpack.c.h.b16 %v3938
        %v5165 = vunpack.c.l.b16 %v3939
        %v5166 = vunpack.c.h.b16 %v3939
        %v5167 = vunpack.c.l.b16 %v3940
        %v5168 = vunpack.c.h.b16 %v3940
        %v5169 = vunpack.c.l.b16 %v3941
        %v5170 = vunpack.c.l.b16 %v3942
        %v5171 = vunpack.c.h.b16 %v3942
        %v5172 = vunpack.c.l.b16 %v3943
        %v5173 = vunpack.c.h.b16 %v3943
        %v5174 = vunpack.c.l.b16 %v3944
        %v5175 = vunpack.c.h.b16 %v3944
        %v5176 = vunpack.c.l.b16 %v3945
        %v5177 = vunpack.c.l.b16 %v3946
        %v5178 = vunpack.c.h.b16 %v3946
        %v5179 = vunpack.c.l.b16 %v3947
        %v5180 = vunpack.c.h.b16 %v3947
        %v5181 = vunpack.c.l.b16 %v3948
        %v5182 = vunpack.c.h.b16 %v3948
        %v5183 = vunpack.c.l.b16 %v3949
        %v5184 = vunpack.c.l.b16 %v3950
        %v5185 = vunpack.c.h.b16 %v3950
        %v5186 = vunpack.c.l.b16 %v3951
        %v5187 = vunpack.c.h.b16 %v3951
        %v5188 = vunpack.c.l.b16 %v3952
        %v5189 = vunpack.c.h.b16 %v3952
        %v5190 = vunpack.c.l.b16 %v3953
        %v5191 = vunpack.c.l.b16 %v3954
        %v5192 = vunpack.c.h.b16 %v3954
        %v5193 = vunpack.c.l.b16 %v3955
        %v5194 = vunpack.c.h.b16 %v3955
        %v5195 = vunpack.c.l.b16 %v3956
        %v5196 = vunpack.c.h.b16 %v3956
        %v5197 = vunpack.c.l.b16 %v3957
        %v5198 = vunpack.c.l.b16 %v3958
        %v5199 = vunpack.c.h.b16 %v3958
        %v5200 = vunpack.c.l.b16 %v3959
        %v5201 = vunpack.c.h.b16 %v3959
        %v5202 = vunpack.c.l.b16 %v3960
        %v5203 = vunpack.c.h.b16 %v3960
        %v5204 = vunpack.c.l.b16 %v3961
        %v5205 = vunpack.c.l.b16 %v3962
        %v5206 = vunpack.c.h.b16 %v3962
        %v5207 = vunpack.c.l.b16 %v3963
        %v5208 = vunpack.c.h.b16 %v3963
        %v5209 = vunpack.c.l.b16 %v3964
        %v5210 = vunpack.c.h.b16 %v3964
        %v5211 = vunpack.c.l.b16 %v3965
        %v5212 = vunpack.c.l.b16 %v3966
        %v5213 = vunpack.c.h.b16 %v3966
        %v5214 = vunpack.c.l.b16 %v3967
        %v5215 = vunpack.c.h.b16 %v3967
        %v5216 = vunpack.c.l.b16 %v3968
        %v5217 = vunpack.c.h.b16 %v3968
        %v5218 = vunpack.c.l.b16 %v3969
        %v5219 = vunpack.c.l.b16 %v3970
        %v5220 = vunpack.c.h.b16 %v3970
        %v5221 = vunpack.c.l.b16 %v3971
        %v5222 = vunpack.c.h.b16 %v3971
        %v5223 = vunpack.c.l.b16 %v3972
        %v5224 = vunpack.c.h.b16 %v3972
        %v5225 = vunpack.c.l.b16 %v3973
        %v5226 = vunpack.c.l.b16 %v3974
        %v5227 = vunpack.c.h.b16 %v3974
        %v5228 = vunpack.c.l.b16 %v3975
        %v5229 = vunpack.c.h.b16 %v3975
        %v5230 = vunpack.c.l.b16 %v3976
        %v5231 = vunpack.c.h.b16 %v3976
        %v5232 = vunpack.c.l.b16 %v3977
        %v5233 = vunpack.c.l.b16 %v3978
        %v5234 = vunpack.c.h.b16 %v3978
        %v5235 = vunpack.c.l.b16 %v3979
        %v5236 = vunpack.c.h.b16 %v3979
        %v5237 = vunpack.c.l.b16 %v3980
        %v5238 = vunpack.c.h.b16 %v3980
        %v5239 = vunpack.c.l.b16 %v3981
        %v5240 = vunpack.c.l.b16 %v3982
        %v5241 = vunpack.c.h.b16 %v3982
        %v5242 = vunpack.c.l.b16 %v3983
        %v5243 = vunpack.c.h.b16 %v3983
        %v5244 = vunpack.c.l.b16 %v3984
        %v5245 = vunpack.c.h.b16 %v3984
        %v5246 = vunpack.c.l.b16 %v3985
        %v5247 = vunpack.c.l.b16 %v3986
        %v5248 = vunpack.c.h.b16 %v3986
        %v5249 = vunpack.c.l.b16 %v3987
        %v5250 = vunpack.c.h.b16 %v3987
        %v5251 = vunpack.c.l.b16 %v3988
        %v5252 = vunpack.c.h.b16 %v3988
        %v5253 = vunpack.c.l.b16 %v3989
        %v5254 = vunpack.c.l.b16 %v3990
        %v5255 = vunpack.c.h.b16 %v3990
        %v5256 = vunpack.c.l.b16 %v3991
        %v5257 = vunpack.c.h.b16 %v3991
        %v5258 = vunpack.c.l.b16 %v3992
        %v5259 = vunpack.c.h.b16 %v3992
        %v5260 = vunpack.c.l.b16 %v3993
        %v5261 = vunpack.c.l.b16 %v3994
        %v5262 = vunpack.c.h.b16 %v3994
        %v5263 = vunpack.c.l.b16 %v3995
        %v5264 = vunpack.c.h.b16 %v3995
        %v5265 = vunpack.c.l.b16 %v3996
        %v5266 = vunpack.c.h.b16 %v3996
        %v5267 = vunpack.c.l.b16 %v3997
        %v5268 = vunpack.c.l.b16 %v3998
        %v5269 = vunpack.c.h.b16 %v3998
        %v5270 = vunpack.c.l.b16 %v3999
        %v5271 = vunpack.c.h.b16 %v3999
        %v5272 = vunpack.c.l.b16 %v4000
        %v5273 = vunpack.c.h.b16 %v4000
        %v5274 = vunpack.c.l.b16 %v4001
        %v5275 = vunpack.c.l.b16 %v4002
        %v5276 = vunpack.c.h.b16 %v4002
        %v5277 = vunpack.c.l.b16 %v4003
        %v5278 = vunpack.c.h.b16 %v4003
        %v5279 = vunpack.c.l.b16 %v4004
        %v5280 = vunpack.c.h.b16 %v4004
        %v5281 = vunpack.c.l.b16 %v4005
        %v5282 = vunpack.c.l.b16 %v4006
        %v5283 = vunpack.c.h.b16 %v4006
        %v5284 = vunpack.c.l.b16 %v4007
        %v5285 = vunpack.c.h.b16 %v4007
        %v5286 = vunpack.c.l.b16 %v4008
        %v5287 = vunpack.c.h.b16 %v4008
        %v5288 = vunpack.c.l.b16 %v4009
        %v5289 = vunpack.c.l.b16 %v4010
        %v5290 = vunpack.c.h.b16 %v4010
        %v5291 = vunpack.c.l.b16 %v4011
        %v5292 = vunpack.c.h.b16 %v4011
        %v5293 = vunpack.c.l.b16 %v4012
        %v5294 = vunpack.c.h.b16 %v4012
        %v5295 = vunpack.c.l.b16 %v4013
        %v5296 = vunpack.c.l.b16 %v4014
        %v5297 = vunpack.c.h.b16 %v4014
        %v5298 = vunpack.c.l.b16 %v4015
        %v5299 = vunpack.c.h.b16 %v4015
        %v5300 = vunpack.c.l.b16 %v4016
        %v5301 = vunpack.c.h.b16 %v4016
        %v5302 = vunpack.c.l.b16 %v4017
        %v5303 = vunpack.c.l.b16 %v4018
        %v5304 = vunpack.c.h.b16 %v4018
        %v5305 = vunpack.c.l.b16 %v4019
        %v5306 = vunpack.c.h.b16 %v4019
        %v5307 = vunpack.c.l.b16 %v4020
        %v5308 = vunpack.c.h.b16 %v4020
        %v5309 = vunpack.c.l.b16 %v4021
        %v5310 = vunpack.c.l.b16 %v4022
        %v5311 = vunpack.c.h.b16 %v4022
        %v5312 = vunpack.c.l.b16 %v4023
        %v5313 = vunpack.c.h.b16 %v4023
        %v5314 = vunpack.c.l.b16 %v4024
        %v5315 = vunpack.c.h.b16 %v4024
        %v5316 = vunpack.c.l.b16 %v4025
        %v5317 = vunpack.c.l.b16 %v4026
        %v5318 = vunpack.c.h.b16 %v4026
        %v5319 = vunpack.c.l.b16 %v4027
        %v5320 = vunpack.c.h.b16 %v4027
        %v5321 = vunpack.c.l.b16 %v4028
        %v5322 = vunpack.c.h.b16 %v4028
        %v5323 = vunpack.c.l.b16 %v4029
        %v5324 = vunpack.c.l.b16 %v4030
        %v5325 = vunpack.c.h.b16 %v4030
        %v5326 = vunpack.c.l.b16 %v4031
        %v5327 = vunpack.c.h.b16 %v4031
        %v5328 = vunpack.c.l.b16 %v4032
        %v5329 = vunpack.c.h.b16 %v4032
        %v5330 = vunpack.c.l.b16 %v4033
        %v5331 = vunpack.c.l.b16 %v4034
        %v5332 = vunpack.c.h.b16 %v4034
        %v5333 = vunpack.c.l.b16 %v4035
        %v5334 = vunpack.c.h.b16 %v4035
        %v5335 = vunpack.c.l.b16 %v4036
        %v5336 = vunpack.c.h.b16 %v4036
        %v5337 = vunpack.c.l.b16 %v4037
        %v5338 = vunpack.c.l.b16 %v4038
        %v5339 = vunpack.c.h.b16 %v4038
        %v5340 = vunpack.c.l.b16 %v4039
        %v5341 = vunpack.c.h.b16 %v4039
        %v5342 = vunpack.c.l.b16 %v4040
        %v5343 = vunpack.c.h.b16 %v4040
        %v5344 = vunpack.c.l.b16 %v4041
        %v5345 = vunpack.c.l.b16 %v4042
        %v5346 = vunpack.c.h.b16 %v4042
        %v5347 = vunpack.c.l.b16 %v4043
        %v5348 = vunpack.c.h.b16 %v4043
        %v5349 = vunpack.c.l.b16 %v4044
        %v5350 = vunpack.c.h.b16 %v4044
        %v5351 = vunpack.c.l.b16 %v4045
        %v5352 = vunpack.c.l.b16 %v4046
        %v5353 = vunpack.c.h.b16 %v4046
        %v5354 = vunpack.c.l.b16 %v4047
        %v5355 = vunpack.c.h.b16 %v4047
        %v5356 = vunpack.c.l.b16 %v4048
        %v5357 = vunpack.c.h.b16 %v4048
        %v5358 = vunpack.c.l.b16 %v4049
        %v5359 = vunpack.c.l.b16 %v4050
        %v5360 = vunpack.c.h.b16 %v4050
        %v5361 = vunpack.c.l.b16 %v4051
        %v5362 = vunpack.c.h.b16 %v4051
        %v5363 = vunpack.c.l.b16 %v4052
        %v5364 = vunpack.c.h.b16 %v4052
        %v5365 = vunpack.c.l.b16 %v4053
        %v5366 = vunpack.c.l.b16 %v4054
        %v5367 = vunpack.c.h.b16 %v4054
        %v5368 = vunpack.c.l.b16 %v4055
        %v5369 = vunpack.c.h.b16 %v4055
        %v5370 = vunpack.c.l.b16 %v4056
        %v5371 = vunpack.c.h.b16 %v4056
        %v5372 = vunpack.c.l.b16 %v4057
        %v5373 = vunpack.c.l.b16 %v4058
        %v5374 = vunpack.c.h.b16 %v4058
        %v5375 = vunpack.c.l.b16 %v4059
        %v5376 = vunpack.c.h.b16 %v4059
        %v5377 = vunpack.c.l.b16 %v4060
        %v5378 = vunpack.c.h.b16 %v4060
        %v5379 = vunpack.c.l.b16 %v4061
        %v5380 = vunpack.c.l.b16 %v4062
        %v5381 = vunpack.c.h.b16 %v4062
        %v5382 = vunpack.c.l.b16 %v4063
        %v5383 = vunpack.c.h.b16 %v4063
        %v5384 = vunpack.c.l.b16 %v4064
        %v5385 = vunpack.c.h.b16 %v4064
        %v5386 = vunpack.c.l.b16 %v4065
        %v5387 = vunpack.c.l.b16 %v4066
        %v5388 = vunpack.c.h.b16 %v4066
        %v5389 = vunpack.c.l.b16 %v4067
        %v5390 = vunpack.c.h.b16 %v4067
        %v5391 = vunpack.c.l.b16 %v4068
        %v5392 = vunpack.c.h.b16 %v4068
        %v5393 = vunpack.c.l.b16 %v4069
        %v5394 = vunpack.c.l.b16 %v4070
        %v5395 = vunpack.c.h.b16 %v4070
        %v5396 = vunpack.c.l.b16 %v4071
        %v5397 = vunpack.c.h.b16 %v4071
        %v5398 = vunpack.c.l.b16 %v4072
        %v5399 = vunpack.c.h.b16 %v4072
        %v5400 = vunpack.c.l.b16 %v4073
        %v5401 = vunpack.c.l.b16 %v4074
        %v5402 = vunpack.c.h.b16 %v4074
        %v5403 = vunpack.c.l.b16 %v4075
        %v5404 = vunpack.c.h.b16 %v4075
        %v5405 = vunpack.c.l.b16 %v4076
        %v5406 = vunpack.c.h.b16 %v4076
        %v5407 = vunpack.c.l.b16 %v4077
        %v5408 = vunpack.c.l.b16 %v4078
        %v5409 = vunpack.c.h.b16 %v4078
        %v5410 = vunpack.c.l.b16 %v4079
        %v5411 = vunpack.c.h.b16 %v4079
        %v5412 = vunpack.c.l.b16 %v4080
        %v5413 = vunpack.c.h.b16 %v4080
        %v5414 = vunpack.c.l.b16 %v4081
        %v5415 = vunpack.c.l.b16 %v4082
        %v5416 = vunpack.c.h.b16 %v4082
        %v5417 = vunpack.c.l.b16 %v4083
        %v5418 = vunpack.c.h.b16 %v4083
        %v5419 = vunpack.c.l.b16 %v4084
        %v5420 = vunpack.c.h.b16 %v4084
        %v5421 = vunpack.c.l.b16 %v4085
        %v5422 = vunpack.c.l.b16 %v4086
        %v5423 = vunpack.c.h.b16 %v4086
        %v5424 = vunpack.c.l.b16 %v4087
        %v5425 = vunpack.c.h.b16 %v4087
        %v5426 = vunpack.c.l.b16 %v4088
        %v5427 = vunpack.c.h.b16 %v4088
        %v5428 = vunpack.c.l.b16 %v4089
        %v5429 = vunpack.c.l.b16 %v4090
        %v5430 = vunpack.c.h.b16 %v4090
        %v5431 = vunpack.c.l.b16 %v4091
        %v5432 = vunpack.c.h.b16 %v4091
        %v5433 = vunpack.c.l.b16 %v4092
        %v5434 = vunpack.c.h.b16 %v4092
        %v5435 = vunpack.c.l.b16 %v4093
        %v5436 = vunpack.c.l.b16 %v4094
        %v5437 = vunpack.c.h.b16 %v4094
        %v5438 = vunpack.c.l.b16 %v4095
        %v5439 = vunpack.c.h.b16 %v4095
        %v5440 = vunpack.c.l.b16 %v4096
        %v5441 = vunpack.c.h.b16 %v4096
        %v5442 = vunpack.c.l.b16 %v4097
        %v5443 = vunpack.c.l.b16 %v4098
        %v5444 = vunpack.c.h.b16 %v4098
        %v5445 = vunpack.c.l.b16 %v4099
        %v5446 = vunpack.c.h.b16 %v4099
        %v5447 = vunpack.c.l.b16 %v4100
        %v5448 = vunpack.c.h.b16 %v4100
        %v5449 = vunpack.c.l.b16 %v4101
        %v5450 = vunpack.c.l.b16 %v4102
        %v5451 = vunpack.c.h.b16 %v4102
        %v5452 = vunpack.c.l.b16 %v4103
        %v5453 = vunpack.c.h.b16 %v4103
        %v5454 = vunpack.c.l.b16 %v4104
        %v5455 = vunpack.c.h.b16 %v4104
        %v5456 = vunpack.c.l.b16 %v4105
        %v5457 = vunpack.c.l.b16 %v4106
        %v5458 = vunpack.c.h.b16 %v4106
        %v5459 = vunpack.c.l.b16 %v4107
        %v5460 = vunpack.c.h.b16 %v4107
        %v5461 = vunpack.c.l.b16 %v4108
        %v5462 = vunpack.c.h.b16 %v4108
        %v5463 = vunpack.c.l.b16 %v4109
        %v5464 = vunpack.c.l.b16 %v4110
        %v5465 = vunpack.c.h.b16 %v4110
        %v5466 = vunpack.c.l.b16 %v4111
        %v5467 = vunpack.c.h.b16 %v4111
        %v5468 = vunpack.c.l.b16 %v4112
        %v5469 = vunpack.c.h.b16 %v4112
        %v5470 = vunpack.c.l.b16 %v4113
        %v5471 = vunpack.c.l.b16 %v4114
        %v5472 = vunpack.c.h.b16 %v4114
        %v5473 = vunpack.c.l.b16 %v4115
        %v5474 = vunpack.c.h.b16 %v4115
        %v5475 = vunpack.c.l.b16 %v4116
        %v5476 = vunpack.c.h.b16 %v4116
        %v5477 = vunpack.c.l.b16 %v4117
        %v5478 = vunpack.c.l.b16 %v4118
        %v5479 = vunpack.c.h.b16 %v4118
        %v5480 = vunpack.c.l.b16 %v4119
        %v5481 = vunpack.c.h.b16 %v4119
        %v5482 = vunpack.c.l.b16 %v4120
        %v5483 = vunpack.c.h.b16 %v4120
        %v5484 = vunpack.c.l.b16 %v4121
        %v5485 = vunpack.c.l.b16 %v4122
        %v5486 = vunpack.c.h.b16 %v4122
        %v5487 = vunpack.c.l.b16 %v4123
        %v5488 = vunpack.c.h.b16 %v4123
        %v5489 = vunpack.c.l.b16 %v4124
        %v5490 = vunpack.c.h.b16 %v4124
        %v5491 = vunpack.c.l.b16 %v4125
        %v5492 = vunpack.c.l.b16 %v4126
        %v5493 = vunpack.c.h.b16 %v4126
        %v5494 = vunpack.c.l.b16 %v4127
        %v5495 = vunpack.c.h.b16 %v4127
        %v5496 = vunpack.c.l.b16 %v4128
        %v5497 = vunpack.c.h.b16 %v4128
        %v5498 = vunpack.c.l.b16 %v4129
        %v5499 = vunpack.c.l.b16 %v4130
        %v5500 = vunpack.c.h.b16 %v4130
        %v5501 = vunpack.c.l.b16 %v4131
        %v5502 = vunpack.c.h.b16 %v4131
        %v5503 = vunpack.c.l.b16 %v4132
        %v5504 = vunpack.c.h.b16 %v4132
        %v5505 = vunpack.c.l.b16 %v4133
        %v5506 = vunpack.c.l.b16 %v4134
        %v5507 = vunpack.c.h.b16 %v4134
        %v5508 = vunpack.c.l.b16 %v4135
        %v5509 = vunpack.c.h.b16 %v4135
        %v5510 = vunpack.c.l.b16 %v4136
        %v5511 = vunpack.c.h.b16 %v4136
        %v5512 = vunpack.c.l.b16 %v4137
        %v5513 = vunpack.c.l.b16 %v4138
        %v5514 = vunpack.c.h.b16 %v4138
        %v5515 = vunpack.c.l.b16 %v4139
        %v5516 = vunpack.c.h.b16 %v4139
        %v5517 = vunpack.c.l.b16 %v4140
        %v5518 = vunpack.c.h.b16 %v4140
        %v5519 = vunpack.c.l.b16 %v4141
        %v5520 = vunpack.c.l.b16 %v4142
        %v5521 = vunpack.c.h.b16 %v4142
        %v5522 = vunpack.c.l.b16 %v4143
        %v5523 = vunpack.c.h.b16 %v4143
        %v5524 = vunpack.c.l.b16 %v4144
        %v5525 = vunpack.c.h.b16 %v4144
        %v5526 = vunpack.c.l.b16 %v4145
        %v5527 = vunpack.c.l.b16 %v4146
        %v5528 = vunpack.c.h.b16 %v4146
        %v5529 = vunpack.c.l.b16 %v4147
        %v5530 = vunpack.c.h.b16 %v4147
        %v5531 = vunpack.c.l.b16 %v4148
        %v5532 = vunpack.c.h.b16 %v4148
        %v5533 = vunpack.c.l.b16 %v4149
        %v5534 = vunpack.c.l.b16 %v4150
        %v5535 = vunpack.c.h.b16 %v4150
        %v5536 = vunpack.c.l.b16 %v4151
        %v5537 = vunpack.c.h.b16 %v4151
        %v5538 = vunpack.c.l.b16 %v4152
        %v5539 = vunpack.c.h.b16 %v4152
        %v5540 = vunpack.c.l.b16 %v4153
        %v5541 = vunpack.c.l.b16 %v4154
        %v5542 = vunpack.c.h.b16 %v4154
        %v5543 = vunpack.c.l.b16 %v4155
        %v5544 = vunpack.c.h.b16 %v4155
        %v5545 = vunpack.c.l.b16 %v4156
        %v5546 = vunpack.c.h.b16 %v4156
        %v5547 = vunpack.c.l.b16 %v4157
        %v5548 = vunpack.c.l.b16 %v4158
        %v5549 = vunpack.c.h.b16 %v4158
        %v5550 = vunpack.c.l.b16 %v4159
        %v5551 = vunpack.c.h.b16 %v4159
        %v5552 = vunpack.c.l.b16 %v4160
        %v5553 = vunpack.c.h.b16 %v4160
        %v5554 = vunpack.c.l.b16 %v4161
        %v5555 = vunpack.c.l.b16 %v4162
        %v5556 = vunpack.c.h.b16 %v4162
        %v5557 = vunpack.c.l.b16 %v4163
        %v5558 = vunpack.c.h.b16 %v4163
        %v5559 = vunpack.c.l.b16 %v4164
        %v5560 = vunpack.c.h.b16 %v4164
        %v5561 = vunpack.c.l.b16 %v4165
        %v5562 = vunpack.c.l.b16 %v4166
        %v5563 = vunpack.c.h.b16 %v4166
        %v5564 = vunpack.c.l.b16 %v4167
        %v5565 = vunpack.c.h.b16 %v4167
        %v5566 = vunpack.c.l.b16 %v4168
        %v5567 = vunpack.c.h.b16 %v4168
        %v5568 = vunpack.c.l.b16 %v4169
        %v5569 = vunpack.c.l.b16 %v4170
        %v5570 = vunpack.c.h.b16 %v4170
        %v5571 = vunpack.c.l.b16 %v4171
        %v5572 = vunpack.c.h.b16 %v4171
        %v5573 = vunpack.c.l.b16 %v4172
        %v5574 = vunpack.c.h.b16 %v4172
        %v5575 = vunpack.c.l.b16 %v4173
        %v5576 = vunpack.c.l.b16 %v4174
        %v5577 = vunpack.c.h.b16 %v4174
        %v5578 = vunpack.c.l.b16 %v4175
        %v5579 = vunpack.c.h.b16 %v4175
        %v5580 = vunpack.c.l.b16 %v4176
        %v5581 = vunpack.c.h.b16 %v4176
        %v5582 = vunpack.c.l.b16 %v4177
        %v5583 = vunpack.c.l.b16 %v4178
        %v5584 = vunpack.c.h.b16 %v4178
        %v5585 = vunpack.c.l.b16 %v4179
        %v5586 = vunpack.c.h.b16 %v4179
        %v5587 = vunpack.c.l.b16 %v4180
        %v5588 = vunpack.c.h.b16 %v4180
        %v5589 = vunpack.c.l.b16 %v4181
        %v5590 = vunpack.c.l.b16 %v4182
        %v5591 = vunpack.c.h.b16 %v4182
        %v5592 = vunpack.c.l.b16 %v4183
        %v5593 = vunpack.c.h.b16 %v4183
        %v5594 = vunpack.c.l.b16 %v4184
        %v5595 = vunpack.c.h.b16 %v4184
        %v5596 = vunpack.c.l.b16 %v4185
        %v5597 = vunpack.c.l.b16 %v4186
        %v5598 = vunpack.c.h.b16 %v4186
        %v5599 = vunpack.c.l.b16 %v4187
        %v5600 = vunpack.c.h.b16 %v4187
        %v5601 = vunpack.c.l.b16 %v4188
        %v5602 = vunpack.c.h.b16 %v4188
        %v5603 = vunpack.c.l.b16 %v4189
        %v5604 = vunpack.c.l.b16 %v4190
        %v5605 = vunpack.c.h.b16 %v4190
        %v5606 = vunpack.c.l.b16 %v4191
        %v5607 = vunpack.c.h.b16 %v4191
        %v5608 = vunpack.c.l.b16 %v4192
        %v5609 = vunpack.c.h.b16 %v4192
        %v5610 = vunpack.c.l.b16 %v4193
        %v5611 = vunpack.c.l.b16 %v4194
        %v5612 = vunpack.c.h.b16 %v4194
        %v5613 = vunpack.c.l.b16 %v4195
        %v5614 = vunpack.c.h.b16 %v4195
        %v5615 = vunpack.c.l.b16 %v4196
        %v5616 = vunpack.c.h.b16 %v4196
        %v5617 = vunpack.c.l.b16 %v4197
        %v5618 = vunpack.c.l.b16 %v4198
        %v5619 = vunpack.c.h.b16 %v4198
        %v5620 = vunpack.c.l.b16 %v4199
        %v5621 = vunpack.c.h.b16 %v4199
        %v5622 = vunpack.c.l.b16 %v4200
        %v5623 = vunpack.c.h.b16 %v4200
        %v5624 = vunpack.c.l.b16 %v4201
        %v5625 = vpack.c.b16 %v4736, %v4729
        %v5626 = vpack.c.b16 %v4737, %v4730
        %v5627 = vpack.c.b16 %v4738, %v4731
        %v5628 = vpack.c.b16 %v4739, %v4732
        %v5629 = vpack.c.b16 %v4740, %v4733
        %v5630 = vpack.c.b16 %v4741, %v4734
        %v5631 = vpack.c.b16 %v4742, %v4735
        %v5632 = vpack.c.b16 %v4750, %v4743
        %v5633 = vpack.c.b16 %v4751, %v4744
        %v5634 = vpack.c.b16 %v4752, %v4745
        %v5635 = vpack.c.b16 %v4753, %v4746
        %v5636 = vpack.c.b16 %v4754, %v4747
        %v5637 = vpack.c.b16 %v4755, %v4748
        %v5638 = vpack.c.b16 %v4756, %v4749
        %v5639 = vpack.c.b16 %v4764, %v4757
        %v5640 = vpack.c.b16 %v4765, %v4758
        %v5641 = vpack.c.b16 %v4766, %v4759
        %v5642 = vpack.c.b16 %v4767, %v4760
        %v5643 = vpack.c.b16 %v4768, %v4761
        %v5644 = vpack.c.b16 %v4769, %v4762
        %v5645 = vpack.c.b16 %v4770, %v4763
        %v5646 = vpack.c.b16 %v4778, %v4771
        %v5647 = vpack.c.b16 %v4779, %v4772
        %v5648 = vpack.c.b16 %v4780, %v4773
        %v5649 = vpack.c.b16 %v4781, %v4774
        %v5650 = vpack.c.b16 %v4782, %v4775
        %v5651 = vpack.c.b16 %v4783, %v4776
        %v5652 = vpack.c.b16 %v4784, %v4777
        %v5653 = vpack.c.b16 %v4792, %v4785
        %v5654 = vpack.c.b16 %v4793, %v4786
        %v5655 = vpack.c.b16 %v4794, %v4787
        %v5656 = vpack.c.b16 %v4795, %v4788
        %v5657 = vpack.c.b16 %v4796, %v4789
        %v5658 = vpack.c.b16 %v4797, %v4790
        %v5659 = vpack.c.b16 %v4798, %v4791
        %v5660 = vpack.c.b16 %v4806, %v4799
        %v5661 = vpack.c.b16 %v4807, %v4800
        %v5662 = vpack.c.b16 %v4808, %v4801
        %v5663 = vpack.c.b16 %v4809, %v4802
        %v5664 = vpack.c.b16 %v4810, %v4803
        %v5665 = vpack.c.b16 %v4811, %v4804
        %v5666 = vpack.c.b16 %v4812, %v4805
        %v5667 = vpack.c.b16 %v4820, %v4813
        %v5668 = vpack.c.b16 %v4821, %v4814
        %v5669 = vpack.c.b16 %v4822, %v4815
        %v5670 = vpack.c.b16 %v4823, %v4816
        %v5671 = vpack.c.b16 %v4824, %v4817
        %v5672 = vpack.c.b16 %v4825, %v4818
        %v5673 = vpack.c.b16 %v4826, %v4819
        %v5674 = vpack.c.b16 %v4834, %v4827
        %v5675 = vpack.c.b16 %v4835, %v4828
        %v5676 = vpack.c.b16 %v4836, %v4829
        %v5677 = vpack.c.b16 %v4837, %v4830
        %v5678 = vpack.c.b16 %v4838, %v4831
        %v5679 = vpack.c.b16 %v4839, %v4832
        %v5680 = vpack.c.b16 %v4840, %v4833
        %v5681 = vpack.c.b16 %v4848, %v4841
        %v5682 = vpack.c.b16 %v4849, %v4842
        %v5683 = vpack.c.b16 %v4850, %v4843
        %v5684 = vpack.c.b16 %v4851, %v4844
        %v5685 = vpack.c.b16 %v4852, %v4845
        %v5686 = vpack.c.b16 %v4853, %v4846
        %v5687 = vpack.c.b16 %v4854, %v4847
        %v5688 = vpack.c.b16 %v4862, %v4855
        %v5689 = vpack.c.b16 %v4863, %v4856
        %v5690 = vpack.c.b16 %v4864, %v4857
        %v5691 = vpack.c.b16 %v4865, %v4858
        %v5692 = vpack.c.b16 %v4866, %v4859
        %v5693 = vpack.c.b16 %v4867, %v4860
        %v5694 = vpack.c.b16 %v4868, %v4861
        %v5695 = vpack.c.b16 %v4876, %v4869
        %v5696 = vpack.c.b16 %v4877, %v4870
        %v5697 = vpack.c.b16 %v4878, %v4871
        %v5698 = vpack.c.b16 %v4879, %v4872
        %v5699 = vpack.c.b16 %v4880, %v4873
        %v5700 = vpack.c.b16 %v4881, %v4874
        %v5701 = vpack.c.b16 %v4882, %v4875
        %v5702 = vpack.c.b16 %v4890, %v4883
        %v5703 = vpack.c.b16 %v4891, %v4884
        %v5704 = vpack.c.b16 %v4892, %v4885
        %v5705 = vpack.c.b16 %v4893, %v4886
        %v5706 = vpack.c.b16 %v4894, %v4887
        %v5707 = vpack.c.b16 %v4895, %v4888
        %v5708 = vpack.c.b16 %v4896, %v4889
        %v5709 = vpack.c.b16 %v4904, %v4897
        %v5710 = vpack.c.b16 %v4905, %v4898
        %v5711 = vpack.c.b16 %v4906, %v4899
        %v5712 = vpack.c.b16 %v4907, %v4900
        %v5713 = vpack.c.b16 %v4908, %v4901
        %v5714 = vpack.c.b16 %v4909, %v4902
        %v5715 = vpack.c.b16 %v4910, %v4903
        %v5716 = vpack.c.b16 %v4918, %v4911
        %v5717 = vpack.c.b16 %v4919, %v4912
        %v5718 = vpack.c.b16 %v4920, %v4913
        %v5719 = vpack.c.b16 %v4921, %v4914
        %v5720 = vpack.c.b16 %v4922, %v4915
        %v5721 = vpack.c.b16 %v4923, %v4916
        %v5722 = vpack.c.b16 %v4924, %v4917
        %v5723 = vpack.c.b16 %v4932, %v4925
        %v5724 = vpack.c.b16 %v4933, %v4926
        %v5725 = vpack.c.b16 %v4934, %v4927
        %v5726 = vpack.c.b16 %v4935, %v4928
        %v5727 = vpack.c.b16 %v4936, %v4929
        %v5728 = vpack.c.b16 %v4937, %v4930
        %v5729 = vpack.c.b16 %v4938, %v4931
        %v5730 = vpack.c.b16 %v4946, %v4939
        %v5731 = vpack.c.b16 %v4947, %v4940
        %v5732 = vpack.c.b16 %v4948, %v4941
        %v5733 = vpack.c.b16 %v4949, %v4942
        %v5734 = vpack.c.b16 %v4950, %v4943
        %v5735 = vpack.c.b16 %v4951, %v4944
        %v5736 = vpack.c.b16 %v4952, %v4945
        %v5737 = vpack.c.b16 %v4960, %v4953
        %v5738 = vpack.c.b16 %v4961, %v4954
        %v5739 = vpack.c.b16 %v4962, %v4955
        %v5740 = vpack.c.b16 %v4963, %v4956
        %v5741 = vpack.c.b16 %v4964, %v4957
        %v5742 = vpack.c.b16 %v4965, %v4958
        %v5743 = vpack.c.b16 %v4966, %v4959
        %v5744 = vpack.c.b16 %v4974, %v4967
        %v5745 = vpack.c.b16 %v4975, %v4968
        %v5746 = vpack.c.b16 %v4976, %v4969
        %v5747 = vpack.c.b16 %v4977, %v4970
        %v5748 = vpack.c.b16 %v4978, %v4971
        %v5749 = vpack.c.b16 %v4979, %v4972
        %v5750 = vpack.c.b16 %v4980, %v4973
        %v5751 = vpack.c.b16 %v4988, %v4981
        %v5752 = vpack.c.b16 %v4989, %v4982
        %v5753 = vpack.c.b16 %v4990, %v4983
        %v5754 = vpack.c.b16 %v4991, %v4984
        %v5755 = vpack.c.b16 %v4992, %v4985
        %v5756 = vpack.c.b16 %v4993, %v4986
        %v5757 = vpack.c.b16 %v4994, %v4987
        %v5758 = vpack.c.b16 %v5002, %v4995
        %v5759 = vpack.c.b16 %v5003, %v4996
        %v5760 = vpack.c.b16 %v5004, %v4997
        %v5761 = vpack.c.b16 %v5005, %v4998
        %v5762 = vpack.c.b16 %v5006, %v4999
        %v5763 = vpack.c.b16 %v5007, %v5000
        %v5764 = vpack.c.b16 %v5008, %v5001
        %v5765 = vpack.c.b16 %v5016, %v5009
        %v5766 = vpack.c.b16 %v5017, %v5010
        %v5767 = vpack.c.b16 %v5018, %v5011
        %v5768 = vpack.c.b16 %v5019, %v5012
        %v5769 = vpack.c.b16 %v5020, %v5013
        %v5770 = vpack.c.b16 %v5021, %v5014
        %v5771 = vpack.c.b16 %v5022, %v5015
        %v5772 = vpack.c.b16 %v5030, %v5023
        %v5773 = vpack.c.b16 %v5031, %v5024
        %v5774 = vpack.c.b16 %v5032, %v5025
        %v5775 = vpack.c.b16 %v5033, %v5026
        %v5776 = vpack.c.b16 %v5034, %v5027
        %v5777 = vpack.c.b16 %v5035, %v5028
        %v5778 = vpack.c.b16 %v5036, %v5029
        %v5779 = vpack.c.b16 %v5044, %v5037
        %v5780 = vpack.c.b16 %v5045, %v5038
        %v5781 = vpack.c.b16 %v5046, %v5039
        %v5782 = vpack.c.b16 %v5047, %v5040
        %v5783 = vpack.c.b16 %v5048, %v5041
        %v5784 = vpack.c.b16 %v5049, %v5042
        %v5785 = vpack.c.b16 %v5050, %v5043
        %v5786 = vpack.c.b16 %v5058, %v5051
        %v5787 = vpack.c.b16 %v5059, %v5052
        %v5788 = vpack.c.b16 %v5060, %v5053
        %v5789 = vpack.c.b16 %v5061, %v5054
        %v5790 = vpack.c.b16 %v5062, %v5055
        %v5791 = vpack.c.b16 %v5063, %v5056
        %v5792 = vpack.c.b16 %v5064, %v5057
        %v5793 = vpack.c.b16 %v5072, %v5065
        %v5794 = vpack.c.b16 %v5073, %v5066
        %v5795 = vpack.c.b16 %v5074, %v5067
        %v5796 = vpack.c.b16 %v5075, %v5068
        %v5797 = vpack.c.b16 %v5076, %v5069
        %v5798 = vpack.c.b16 %v5077, %v5070
        %v5799 = vpack.c.b16 %v5078, %v5071
        %v5800 = vpack.c.b16 %v5086, %v5079
        %v5801 = vpack.c.b16 %v5087, %v5080
        %v5802 = vpack.c.b16 %v5088, %v5081
        %v5803 = vpack.c.b16 %v5089, %v5082
        %v5804 = vpack.c.b16 %v5090, %v5083
        %v5805 = vpack.c.b16 %v5091, %v5084
        %v5806 = vpack.c.b16 %v5092, %v5085
        %v5807 = vpack.c.b16 %v5100, %v5093
        %v5808 = vpack.c.b16 %v5101, %v5094
        %v5809 = vpack.c.b16 %v5102, %v5095
        %v5810 = vpack.c.b16 %v5103, %v5096
        %v5811 = vpack.c.b16 %v5104, %v5097
        %v5812 = vpack.c.b16 %v5105, %v5098
        %v5813 = vpack.c.b16 %v5106, %v5099
        %v5814 = vpack.c.b16 %v5114, %v5107
        %v5815 = vpack.c.b16 %v5115, %v5108
        %v5816 = vpack.c.b16 %v5116, %v5109
        %v5817 = vpack.c.b16 %v5117, %v5110
        %v5818 = vpack.c.b16 %v5118, %v5111
        %v5819 = vpack.c.b16 %v5119, %v5112
        %v5820 = vpack.c.b16 %v5120, %v5113
        %v5821 = vpack.c.b16 %v5128, %v5121
        %v5822 = vpack.c.b16 %v5129, %v5122
        %v5823 = vpack.c.b16 %v5130, %v5123
        %v5824 = vpack.c.b16 %v5131, %v5124
        %v5825 = vpack.c.b16 %v5132, %v5125
        %v5826 = vpack.c.b16 %v5133, %v5126
        %v5827 = vpack.c.b16 %v5134, %v5127
        %v5828 = vpack.c.b16 %v5142, %v5135
        %v5829 = vpack.c.b16 %v5143, %v5136
        %v5830 = vpack.c.b16 %v5144, %v5137
        %v5831 = vpack.c.b16 %v5145, %v5138
        %v5832 = vpack.c.b16 %v5146, %v5139
        %v5833 = vpack.c.b16 %v5147, %v5140
        %v5834 = vpack.c.b16 %v5148, %v5141
        %v5835 = vpack.c.b16 %v5156, %v5149
        %v5836 = vpack.c.b16 %v5157, %v5150
        %v5837 = vpack.c.b16 %v5158, %v5151
        %v5838 = vpack.c.b16 %v5159, %v5152
        %v5839 = vpack.c.b16 %v5160, %v5153
        %v5840 = vpack.c.b16 %v5161, %v5154
        %v5841 = vpack.c.b16 %v5162, %v5155
        %v5842 = vpack.c.b16 %v5170, %v5163
        %v5843 = vpack.c.b16 %v5171, %v5164
        %v5844 = vpack.c.b16 %v5172, %v5165
        %v5845 = vpack.c.b16 %v5173, %v5166
        %v5846 = vpack.c.b16 %v5174, %v5167
        %v5847 = vpack.c.b16 %v5175, %v5168
        %v5848 = vpack.c.b16 %v5176, %v5169
        %v5849 = vpack.c.b16 %v5184, %v5177
        %v5850 = vpack.c.b16 %v5185, %v5178
        %v5851 = vpack.c.b16 %v5186, %v5179
        %v5852 = vpack.c.b16 %v5187, %v5180
        %v5853 = vpack.c.b16 %v5188, %v5181
        %v5854 = vpack.c.b16 %v5189, %v5182
        %v5855 = vpack.c.b16 %v5190, %v5183
        %v5856 = vpack.c.b16 %v5198, %v5191
        %v5857 = vpack.c.b16 %v5199, %v5192
        %v5858 = vpack.c.b16 %v5200, %v5193
        %v5859 = vpack.c.b16 %v5201, %v5194
        %v5860 = vpack.c.b16 %v5202, %v5195
        %v5861 = vpack.c.b16 %v5203, %v5196
        %v5862 = vpack.c.b16 %v5204, %v5197
        %v5863 = vpack.c.b16 %v5212, %v5205
        %v5864 = vpack.c.b16 %v5213, %v5206
        %v5865 = vpack.c.b16 %v5214, %v5207
        %v5866 = vpack.c.b16 %v5215, %v5208
        %v5867 = vpack.c.b16 %v5216, %v5209
        %v5868 = vpack.c.b16 %v5217, %v5210
        %v5869 = vpack.c.b16 %v5218, %v5211
        %v5870 = vpack.c.b16 %v5226, %v5219
        %v5871 = vpack.c.b16 %v5227, %v5220
        %v5872 = vpack.c.b16 %v5228, %v5221
        %v5873 = vpack.c.b16 %v5229, %v5222
        %v5874 = vpack.c.b16 %v5230, %v5223
        %v5875 = vpack.c.b16 %v5231, %v5224
        %v5876 = vpack.c.b16 %v5232, %v5225
        %v5877 = vpack.c.b16 %v5240, %v5233
        %v5878 = vpack.c.b16 %v5241, %v5234
        %v5879 = vpack.c.b16 %v5242, %v5235
        %v5880 = vpack.c.b16 %v5243, %v5236
        %v5881 = vpack.c.b16 %v5244, %v5237
        %v5882 = vpack.c.b16 %v5245, %v5238
        %v5883 = vpack.c.b16 %v5246, %v5239
        %v5884 = vpack.c.b16 %v5254, %v5247
        %v5885 = vpack.c.b16 %v5255, %v5248
        %v5886 = vpack.c.b16 %v5256, %v5249
        %v5887 = vpack.c.b16 %v5257, %v5250
        %v5888 = vpack.c.b16 %v5258, %v5251
        %v5889 = vpack.c.b16 %v5259, %v5252
        %v5890 = vpack.c.b16 %v5260, %v5253
        %v5891 = vpack.c.b16 %v5268, %v5261
        %v5892 = vpack.c.b16 %v5269, %v5262
        %v5893 = vpack.c.b16 %v5270, %v5263
        %v5894 = vpack.c.b16 %v5271, %v5264
        %v5895 = vpack.c.b16 %v5272, %v5265
        %v5896 = vpack.c.b16 %v5273, %v5266
        %v5897 = vpack.c.b16 %v5274, %v5267
        %v5898 = vpack.c.b16 %v5282, %v5275
        %v5899 = vpack.c.b16 %v5283, %v5276
        %v5900 = vpack.c.b16 %v5284, %v5277
        %v5901 = vpack.c.b16 %v5285, %v5278
        %v5902 = vpack.c.b16 %v5286, %v5279
        %v5903 = vpack.c.b16 %v5287, %v5280
        %v5904 = vpack.c.b16 %v5288, %v5281
        %v5905 = vpack.c.b16 %v5296, %v5289
        %v5906 = vpack.c.b16 %v5297, %v5290
        %v5907 = vpack.c.b16 %v5298, %v5291
        %v5908 = vpack.c.b16 %v5299, %v5292
        %v5909 = vpack.c.b16 %v5300, %v5293
        %v5910 = vpack.c.b16 %v5301, %v5294
        %v5911 = vpack.c.b16 %v5302, %v5295
        %v5912 = vpack.c.b16 %v5310, %v5303
        %v5913 = vpack.c.b16 %v5311, %v5304
        %v5914 = vpack.c.b16 %v5312, %v5305
        %v5915 = vpack.c.b16 %v5313, %v5306
        %v5916 = vpack.c.b16 %v5314, %v5307
        %v5917 = vpack.c.b16 %v5315, %v5308
        %v5918 = vpack.c.b16 %v5316, %v5309
        %v5919 = vpack.c.b16 %v5324, %v5317
        %v5920 = vpack.c.b16 %v5325, %v5318
        %v5921 = vpack.c.b16 %v5326, %v5319
        %v5922 = vpack.c.b16 %v5327, %v5320
        %v5923 = vpack.c.b16 %v5328, %v5321
        %v5924 = vpack.c.b16 %v5329, %v5322
        %v5925 = vpack.c.b16 %v5330, %v5323
        %v5926 = vpack.c.b16 %v5338, %v5331
        %v5927 = vpack.c.b16 %v5339, %v5332
        %v5928 = vpack.c.b16 %v5340, %v5333
        %v5929 = vpack.c.b16 %v5341, %v5334
        %v5930 = vpack.c.b16 %v5342, %v5335
        %v5931 = vpack.c.b16 %v5343, %v5336
        %v5932 = vpack.c.b16 %v5344, %v5337
        %v5933 = vpack.c.b16 %v5352, %v5345
        %v5934 = vpack.c.b16 %v5353, %v5346
        %v5935 = vpack.c.b16 %v5354, %v5347
        %v5936 = vpack.c.b16 %v5355, %v5348
        %v5937 = vpack.c.b16 %v5356, %v5349
        %v5938 = vpack.c.b16 %v5357, %v5350
        %v5939 = vpack.c.b16 %v5358, %v5351
        %v5940 = vpack.c.b16 %v5366, %v5359
        %v5941 = vpack.c.b16 %v5367, %v5360
        %v5942 = vpack.c.b16 %v5368, %v5361
        %v5943 = vpack.c.b16 %v5369, %v5362
        %v5944 = vpack.c.b16 %v5370, %v5363
        %v5945 = vpack.c.b16 %v5371, %v5364
        %v5946 = vpack.c.b16 %v5372, %v5365
        %v5947 = vpack.c.b16 %v5380, %v5373
        %v5948 = vpack.c.b16 %v5381, %v5374
        %v5949 = vpack.c.b16 %v5382, %v5375
        %v5950 = vpack.c.b16 %v5383, %v5376
        %v5951 = vpack.c.b16 %v5384, %v5377
        %v5952 = vpack.c.b16 %v5385, %v5378
        %v5953 = vpack.c.b16 %v5386, %v5379
        %v5954 = vpack.c.b16 %v5394, %v5387
        %v5955 = vpack.c.b16 %v5395, %v5388
        %v5956 = vpack.c.b16 %v5396, %v5389
        %v5957 = vpack.c.b16 %v5397, %v5390
        %v5958 = vpack.c.b16 %v5398, %v5391
        %v5959 = vpack.c.b16 %v5399, %v5392
        %v5960 = vpack.c.b16 %v5400, %v5393
        %v5961 = vpack.c.b16 %v5408, %v5401
        %v5962 = vpack.c.b16 %v5409, %v5402
        %v5963 = vpack.c.b16 %v5410, %v5403
        %v5964 = vpack.c.b16 %v5411, %v5404
        %v5965 = vpack.c.b16 %v5412, %v5405
        %v5966 = vpack.c.b16 %v5413, %v5406
        %v5967 = vpack.c.b16 %v5414, %v5407
        %v5968 = vpack.c.b16 %v5422, %v5415
        %v5969 = vpack.c.b16 %v5423, %v5416
        %v5970 = vpack.c.b16 %v5424, %v5417
        %v5971 = vpack.c.b16 %v5425, %v5418
        %v5972 = vpack.c.b16 %v5426, %v5419
        %v5973 = vpack.c.b16 %v5427, %v5420
        %v5974 = vpack.c.b16 %v5428, %v5421
        %v5975 = vpack.c.b16 %v5436, %v5429
        %v5976 = vpack.c.b16 %v5437, %v5430
        %v5977 = vpack.c.b16 %v5438, %v5431
        %v5978 = vpack.c.b16 %v5439, %v5432
        %v5979 = vpack.c.b16 %v5440, %v5433
        %v5980 = vpack.c.b16 %v5441, %v5434
        %v5981 = vpack.c.b16 %v5442, %v5435
        %v5982 = vpack.c.b16 %v5450, %v5443
        %v5983 = vpack.c.b16 %v5451, %v5444
        %v5984 = vpack.c.b16 %v5452, %v5445
        %v5985 = vpack.c.b16 %v5453, %v5446
        %v5986 = vpack.c.b16 %v5454, %v5447
        %v5987 = vpack.c.b16 %v5455, %v5448
        %v5988 = vpack.c.b16 %v5456, %v5449
        %v5989 = vpack.c.b16 %v5464, %v5457
        %v5990 = vpack.c.b16 %v5465, %v5458
        %v5991 = vpack.c.b16 %v5466, %v5459
        %v5992 = vpack.c.b16 %v5467, %v5460
        %v5993 = vpack.c.b16 %v5468, %v5461
        %v5994 = vpack.c.b16 %v5469, %v5462
        %v5995 = vpack.c.b16 %v5470, %v5463
        %v5996 = vpack.c.b16 %v5478, %v5471
        %v5997 = vpack.c.b16 %v5479, %v5472
        %v5998 = vpack.c.b16 %v5480, %v5473
        %v5999 = vpack.c.b16 %v5481, %v5474
        %v6000 = vpack.c.b16 %v5482, %v5475
        %v6001 = vpack.c.b16 %v5483, %v5476
        %v6002 = vpack.c.b16 %v5484, %v5477
        %v6003 = vpack.c.b16 %v5492, %v5485
        %v6004 = vpack.c.b16 %v5493, %v5486
        %v6005 = vpack.c.b16 %v5494, %v5487
        %v6006 = vpack.c.b16 %v5495, %v5488
        %v6007 = vpack.c.b16 %v5496, %v5489
        %v6008 = vpack.c.b16 %v5497, %v5490
        %v6009 = vpack.c.b16 %v5498, %v5491
        %v6010 = vpack.c.b16 %v5506, %v5499
        %v6011 = vpack.c.b16 %v5507, %v5500
        %v6012 = vpack.c.b16 %v5508, %v5501
        %v6013 = vpack.c.b16 %v5509, %v5502
        %v6014 = vpack.c.b16 %v5510, %v5503
        %v6015 = vpack.c.b16 %v5511, %v5504
        %v6016 = vpack.c.b16 %v5512, %v5505
        %v6017 = vpack.c.b16 %v5520, %v5513
        %v6018 = vpack.c.b16 %v5521, %v5514
        %v6019 = vpack.c.b16 %v5522, %v5515
        %v6020 = vpack.c.b16 %v5523, %v5516
        %v6021 = vpack.c.b16 %v5524, %v5517
        %v6022 = vpack.c.b16 %v5525, %v5518
        %v6023 = vpack.c.b16 %v5526, %v5519
        %v6024 = vpack.c.b16 %v5534, %v5527
        %v6025 = vpack.c.b16 %v5535, %v5528
        %v6026 = vpack.c.b16 %v5536, %v5529
        %v6027 = vpack.c.b16 %v5537, %v5530
        %v6028 = vpack.c.b16 %v5538, %v5531
        %v6029 = vpack.c.b16 %v5539, %v5532
        %v6030 = vpack.c.b16 %v5540, %v5533
        %v6031 = vpack.c.b16 %v5548, %v5541
        %v6032 = vpack.c.b16 %v5549, %v5542
        %v6033 = vpack.c.b16 %v5550, %v5543
        %v6034 = vpack.c.b16 %v5551, %v5544
        %v6035 = vpack.c.b16 %v5552, %v5545
        %v6036 = vpack.c.b16 %v5553, %v5546
        %v6037 = vpack.c.b16 %v5554, %v5547
        %v6038 = vpack.c.b16 %v5562, %v5555
        %v6039 = vpack.c.b16 %v5563, %v5556
        %v6040 = vpack.c.b16 %v5564, %v5557
        %v6041 = vpack.c.b16 %v5565, %v5558
        %v6042 = vpack.c.b16 %v5566, %v5559
        %v6043 = vpack.c.b16 %v5567, %v5560
        %v6044 = vpack.c.b16 %v5568, %v5561
        %v6045 = vpack.c.b16 %v5576, %v5569
        %v6046 = vpack.c.b16 %v5577, %v5570
        %v6047 = vpack.c.b16 %v5578, %v5571
        %v6048 = vpack.c.b16 %v5579, %v5572
        %v6049 = vpack.c.b16 %v5580, %v5573
        %v6050 = vpack.c.b16 %v5581, %v5574
        %v6051 = vpack.c.b16 %v5582, %v5575
        %v6052 = vpack.c.b16 %v5590, %v5583
        %v6053 = vpack.c.b16 %v5591, %v5584
        %v6054 = vpack.c.b16 %v5592, %v5585
        %v6055 = vpack.c.b16 %v5593, %v5586
        %v6056 = vpack.c.b16 %v5594, %v5587
        %v6057 = vpack.c.b16 %v5595, %v5588
        %v6058 = vpack.c.b16 %v5596, %v5589
        %v6059 = vpack.c.b16 %v5604, %v5597
        %v6060 = vpack.c.b16 %v5605, %v5598
        %v6061 = vpack.c.b16 %v5606, %v5599
        %v6062 = vpack.c.b16 %v5607, %v5600
        %v6063 = vpack.c.b16 %v5608, %v5601
        %v6064 = vpack.c.b16 %v5609, %v5602
        %v6065 = vpack.c.b16 %v5610, %v5603
        %v6066 = vpack.c.b16 %v5618, %v5611
        %v6067 = vpack.c.b16 %v5619, %v5612
        %v6068 = vpack.c.b16 %v5620, %v5613
        %v6069 = vpack.c.b16 %v5621, %v5614
        %v6070 = vpack.c.b16 %v5622, %v5615
        %v6071 = vpack.c.b16 %v5623, %v5616
        %v6072 = vpack.c.b16 %v5624, %v5617
        %6521 = vmatpush.bf16.msra.mxu0 %v5674
        %6522 = vmatpush.bf16.msra.mxu0 %v5667
        %6523 = vmatpush.bf16.msra.mxu0 %v5660
        %6524 = vmatpush.bf16.msra.mxu0 %v5653
        %6525 = vmatpush.bf16.msra.mxu0 %v5646
        %6526 = vmatpush.bf16.msra.mxu0 %v5639
        %6527 = vmatpush.bf16.msra.mxu0 %v5632
        %6528 = vmatpush.bf16.msra.mxu0 %v5625
        %6529 = vmatmul.bf16.gmra.mxu0 %v3682
        %v6530 = vpop.f32.mrf.mxu0
        %v6531 = vadd.f32 %v4203, %v6530
        %v6532 = vpop.f32.mrf.mxu0
        %6533 = vdwg.mxu0
        %6534 = vmatpush.bf16.msra.mxu0 %v5730
        %6535 = vmatpush.bf16.msra.mxu0 %v5723
        %6536 = vmatpush.bf16.msra.mxu0 %v5716
        %6537 = vmatpush.bf16.msra.mxu0 %v5709
        %6538 = vmatpush.bf16.msra.mxu0 %v5702
        %6539 = vmatpush.bf16.msra.mxu0 %v5695
        %6540 = vmatpush.bf16.msra.mxu0 %v5688
        %6541 = vmatpush.bf16.msra.mxu0 %v5681
        %6542 = vmatmul.bf16.gmra.mxu0 %v3683
        %v6543 = vpop.f32.mrf.mxu0
        %v6544 = vadd.f32 %v6531, %v6543
        %v6545 = vpop.f32.mrf.mxu0
        %6546 = vdwg.mxu0
        %6547 = vmatpush.bf16.msra.mxu0 %v5786
        %6548 = vmatpush.bf16.msra.mxu0 %v5779
        %6549 = vmatpush.bf16.msra.mxu0 %v5772
        %6550 = vmatpush.bf16.msra.mxu0 %v5765
        %6551 = vmatpush.bf16.msra.mxu0 %v5758
        %6552 = vmatpush.bf16.msra.mxu0 %v5751
        %6553 = vmatpush.bf16.msra.mxu0 %v5744
        %6554 = vmatpush.bf16.msra.mxu0 %v5737
        %6555 = vmatmul.bf16.gmra.mxu0 %v3684
        %v6556 = vpop.f32.mrf.mxu0
        %v6557 = vadd.f32 %v6544, %v6556
        %v6558 = vpop.f32.mrf.mxu0
        %6559 = vdwg.mxu0
        %6560 = vmatpush.bf16.msra.mxu0 %v5842
        %6561 = vmatpush.bf16.msra.mxu0 %v5835
        %6562 = vmatpush.bf16.msra.mxu0 %v5828
        %6563 = vmatpush.bf16.msra.mxu0 %v5821
        %6564 = vmatpush.bf16.msra.mxu0 %v5814
        %6565 = vmatpush.bf16.msra.mxu0 %v5807
        %6566 = vmatpush.bf16.msra.mxu0 %v5800
        %6567 = vmatpush.bf16.msra.mxu0 %v5793
        %6568 = vmatmul.bf16.gmra.mxu0 %v3685
        %v6569 = vpop.f32.mrf.mxu0
        %v6570 = vadd.f32 %v6557, %v6569
        %v6571 = vpop.f32.mrf.mxu0
        %6572 = vdwg.mxu0
        %6573 = vmatpush.bf16.msra.mxu0 %v5898
        %6574 = vmatpush.bf16.msra.mxu0 %v5891
        %6575 = vmatpush.bf16.msra.mxu0 %v5884
        %6576 = vmatpush.bf16.msra.mxu0 %v5877
        %6577 = vmatpush.bf16.msra.mxu0 %v5870
        %6578 = vmatpush.bf16.msra.mxu0 %v5863
        %6579 = vmatpush.bf16.msra.mxu0 %v5856
        %6580 = vmatpush.bf16.msra.mxu0 %v5849
        %6581 = vmatmul.bf16.gmra.mxu0 %v3686
        %v6582 = vpop.f32.mrf.mxu0
        %v6583 = vadd.f32 %v6570, %v6582
        %v6584 = vpop.f32.mrf.mxu0
        %6585 = vdwg.mxu0
        %6586 = vmatpush.bf16.msra.mxu0 %v5954
        %6587 = vmatpush.bf16.msra.mxu0 %v5947
        %6588 = vmatpush.bf16.msra.mxu0 %v5940
        %6589 = vmatpush.bf16.msra.mxu0 %v5933
        %6590 = vmatpush.bf16.msra.mxu0 %v5926
        %6591 = vmatpush.bf16.msra.mxu0 %v5919
        %6592 = vmatpush.bf16.msra.mxu0 %v5912
        %6593 = vmatpush.bf16.msra.mxu0 %v5905
        %6594 = vmatmul.bf16.gmra.mxu0 %v3687
        %v6595 = vpop.f32.mrf.mxu0
        %v6596 = vadd.f32 %v6583, %v6595
        %v6597 = vpop.f32.mrf.mxu0
        %6598 = vdwg.mxu0
        %6599 = vmatpush.bf16.msra.mxu0 %v6010
        %6600 = vmatpush.bf16.msra.mxu0 %v6003
        %6601 = vmatpush.bf16.msra.mxu0 %v5996
        %6602 = vmatpush.bf16.msra.mxu0 %v5989
        %6603 = vmatpush.bf16.msra.mxu0 %v5982
        %6604 = vmatpush.bf16.msra.mxu0 %v5975
        %6605 = vmatpush.bf16.msra.mxu0 %v5968
        %6606 = vmatpush.bf16.msra.mxu0 %v5961
        %6607 = vmatmul.bf16.gmra.mxu0 %v3688
        %v6608 = vpop.f32.mrf.mxu0
        %v6609 = vadd.f32 %v6596, %v6608
        %v6610 = vpop.f32.mrf.mxu0
        %6611 = vdwg.mxu0
        %6612 = vmatpush.bf16.msra.mxu0 %v6066
        %6613 = vmatpush.bf16.msra.mxu0 %v6059
        %6614 = vmatpush.bf16.msra.mxu0 %v6052
        %6615 = vmatpush.bf16.msra.mxu0 %v6045
        %6616 = vmatpush.bf16.msra.mxu0 %v6038
        %6617 = vmatpush.bf16.msra.mxu0 %v6031
        %6618 = vmatpush.bf16.msra.mxu0 %v6024
        %6619 = vmatpush.bf16.msra.mxu0 %v6017
        %6620 = vmatmul.bf16.gmra.mxu0 %v3689
        %v6621 = vpop.f32.mrf.mxu0
        %v6622 = vadd.f32 %v6609, %v6621
        %v6623 = vpop.f32.mrf.mxu0
        %6624 = vdwg.mxu0
        %6625 = vmatpush.bf16.msra.mxu0 %v5675
        %6626 = vmatpush.bf16.msra.mxu0 %v5668
        %6627 = vmatpush.bf16.msra.mxu0 %v5661
        %6628 = vmatpush.bf16.msra.mxu0 %v5654
        %6629 = vmatpush.bf16.msra.mxu0 %v5647
        %6630 = vmatpush.bf16.msra.mxu0 %v5640
        %6631 = vmatpush.bf16.msra.mxu0 %v5633
        %6632 = vmatpush.bf16.msra.mxu0 %v5626
        %6633 = vmatmul.bf16.gmra.mxu0 %v3682
        %v6634 = vpop.f32.mrf.mxu0
        %v6635 = vadd.f32 %v4204, %v6634
        %v6636 = vpop.f32.mrf.mxu0
        %6637 = vdwg.mxu0
        %6638 = vmatpush.bf16.msra.mxu0 %v5731
        %6639 = vmatpush.bf16.msra.mxu0 %v5724
        %6640 = vmatpush.bf16.msra.mxu0 %v5717
        %6641 = vmatpush.bf16.msra.mxu0 %v5710
        %6642 = vmatpush.bf16.msra.mxu0 %v5703
        %6643 = vmatpush.bf16.msra.mxu0 %v5696
        %6644 = vmatpush.bf16.msra.mxu0 %v5689
        %6645 = vmatpush.bf16.msra.mxu0 %v5682
        %6646 = vmatmul.bf16.gmra.mxu0 %v3683
        %v6647 = vpop.f32.mrf.mxu0
        %v6648 = vadd.f32 %v6635, %v6647
        %v6649 = vpop.f32.mrf.mxu0
        %6650 = vdwg.mxu0
        %6651 = vmatpush.bf16.msra.mxu0 %v5787
        %6652 = vmatpush.bf16.msra.mxu0 %v5780
        %6653 = vmatpush.bf16.msra.mxu0 %v5773
        %6654 = vmatpush.bf16.msra.mxu0 %v5766
        %6655 = vmatpush.bf16.msra.mxu0 %v5759
        %6656 = vmatpush.bf16.msra.mxu0 %v5752
        %6657 = vmatpush.bf16.msra.mxu0 %v5745
        %6658 = vmatpush.bf16.msra.mxu0 %v5738
        %6659 = vmatmul.bf16.gmra.mxu0 %v3684
        %v6660 = vpop.f32.mrf.mxu0
        %v6661 = vadd.f32 %v6648, %v6660
        %v6662 = vpop.f32.mrf.mxu0
        %6663 = vdwg.mxu0
        %6664 = vmatpush.bf16.msra.mxu0 %v5843
        %6665 = vmatpush.bf16.msra.mxu0 %v5836
        %6666 = vmatpush.bf16.msra.mxu0 %v5829
        %6667 = vmatpush.bf16.msra.mxu0 %v5822
        %6668 = vmatpush.bf16.msra.mxu0 %v5815
        %6669 = vmatpush.bf16.msra.mxu0 %v5808
        %6670 = vmatpush.bf16.msra.mxu0 %v5801
        %6671 = vmatpush.bf16.msra.mxu0 %v5794
        %6672 = vmatmul.bf16.gmra.mxu0 %v3685
        %v6673 = vpop.f32.mrf.mxu0
        %v6674 = vadd.f32 %v6661, %v6673
        %v6675 = vpop.f32.mrf.mxu0
        %6676 = vdwg.mxu0
        %6677 = vmatpush.bf16.msra.mxu0 %v5899
        %6678 = vmatpush.bf16.msra.mxu0 %v5892
        %6679 = vmatpush.bf16.msra.mxu0 %v5885
        %6680 = vmatpush.bf16.msra.mxu0 %v5878
        %6681 = vmatpush.bf16.msra.mxu0 %v5871
        %6682 = vmatpush.bf16.msra.mxu0 %v5864
        %6683 = vmatpush.bf16.msra.mxu0 %v5857
        %6684 = vmatpush.bf16.msra.mxu0 %v5850
        %6685 = vmatmul.bf16.gmra.mxu0 %v3686
        %v6686 = vpop.f32.mrf.mxu0
        %v6687 = vadd.f32 %v6674, %v6686
        %v6688 = vpop.f32.mrf.mxu0
        %6689 = vdwg.mxu0
        %6690 = vmatpush.bf16.msra.mxu0 %v5955
        %6691 = vmatpush.bf16.msra.mxu0 %v5948
        %6692 = vmatpush.bf16.msra.mxu0 %v5941
        %6693 = vmatpush.bf16.msra.mxu0 %v5934
        %6694 = vmatpush.bf16.msra.mxu0 %v5927
        %6695 = vmatpush.bf16.msra.mxu0 %v5920
        %6696 = vmatpush.bf16.msra.mxu0 %v5913
        %6697 = vmatpush.bf16.msra.mxu0 %v5906
        %6698 = vmatmul.bf16.gmra.mxu0 %v3687
        %v6699 = vpop.f32.mrf.mxu0
        %v6700 = vadd.f32 %v6687, %v6699
        %v6701 = vpop.f32.mrf.mxu0
        %6702 = vdwg.mxu0
        %6703 = vmatpush.bf16.msra.mxu0 %v6011
        %6704 = vmatpush.bf16.msra.mxu0 %v6004
        %6705 = vmatpush.bf16.msra.mxu0 %v5997
        %6706 = vmatpush.bf16.msra.mxu0 %v5990
        %6707 = vmatpush.bf16.msra.mxu0 %v5983
        %6708 = vmatpush.bf16.msra.mxu0 %v5976
        %6709 = vmatpush.bf16.msra.mxu0 %v5969
        %6710 = vmatpush.bf16.msra.mxu0 %v5962
        %6711 = vmatmul.bf16.gmra.mxu0 %v3688
        %v6712 = vpop.f32.mrf.mxu0
        %v6713 = vadd.f32 %v6700, %v6712
        %v6714 = vpop.f32.mrf.mxu0
        %6715 = vdwg.mxu0
        %6716 = vmatpush.bf16.msra.mxu0 %v6067
        %6717 = vmatpush.bf16.msra.mxu0 %v6060
        %6718 = vmatpush.bf16.msra.mxu0 %v6053
        %6719 = vmatpush.bf16.msra.mxu0 %v6046
        %6720 = vmatpush.bf16.msra.mxu0 %v6039
        %6721 = vmatpush.bf16.msra.mxu0 %v6032
        %6722 = vmatpush.bf16.msra.mxu0 %v6025
        %6723 = vmatpush.bf16.msra.mxu0 %v6018
        %6724 = vmatmul.bf16.gmra.mxu0 %v3689
        %v6725 = vpop.f32.mrf.mxu0
        %v6726 = vadd.f32 %v6713, %v6725
        %v6727 = vpop.f32.mrf.mxu0
        %6728 = vdwg.mxu0
        %6729 = vmatpush.bf16.msra.mxu0 %v5676
        %6730 = vmatpush.bf16.msra.mxu0 %v5669
        %6731 = vmatpush.bf16.msra.mxu0 %v5662
        %6732 = vmatpush.bf16.msra.mxu0 %v5655
        %6733 = vmatpush.bf16.msra.mxu0 %v5648
        %6734 = vmatpush.bf16.msra.mxu0 %v5641
        %6735 = vmatpush.bf16.msra.mxu0 %v5634
        %6736 = vmatpush.bf16.msra.mxu0 %v5627
        %6737 = vmatmul.bf16.gmra.mxu0 %v3682
        %v6738 = vpop.f32.mrf.mxu0
        %v6739 = vadd.f32 %v4205, %v6738
        %v6740 = vpop.f32.mrf.mxu0
        %6741 = vdwg.mxu0
        %6742 = vmatpush.bf16.msra.mxu0 %v5732
        %6743 = vmatpush.bf16.msra.mxu0 %v5725
        %6744 = vmatpush.bf16.msra.mxu0 %v5718
        %6745 = vmatpush.bf16.msra.mxu0 %v5711
        %6746 = vmatpush.bf16.msra.mxu0 %v5704
        %6747 = vmatpush.bf16.msra.mxu0 %v5697
        %6748 = vmatpush.bf16.msra.mxu0 %v5690
        %6749 = vmatpush.bf16.msra.mxu0 %v5683
        %6750 = vmatmul.bf16.gmra.mxu0 %v3683
        %v6751 = vpop.f32.mrf.mxu0
        %v6752 = vadd.f32 %v6739, %v6751
        %v6753 = vpop.f32.mrf.mxu0
        %6754 = vdwg.mxu0
        %6755 = vmatpush.bf16.msra.mxu0 %v5788
        %6756 = vmatpush.bf16.msra.mxu0 %v5781
        %6757 = vmatpush.bf16.msra.mxu0 %v5774
        %6758 = vmatpush.bf16.msra.mxu0 %v5767
        %6759 = vmatpush.bf16.msra.mxu0 %v5760
        %6760 = vmatpush.bf16.msra.mxu0 %v5753
        %6761 = vmatpush.bf16.msra.mxu0 %v5746
        %6762 = vmatpush.bf16.msra.mxu0 %v5739
        %6763 = vmatmul.bf16.gmra.mxu0 %v3684
        %v6764 = vpop.f32.mrf.mxu0
        %v6765 = vadd.f32 %v6752, %v6764
        %v6766 = vpop.f32.mrf.mxu0
        %6767 = vdwg.mxu0
        %6768 = vmatpush.bf16.msra.mxu0 %v5844
        %6769 = vmatpush.bf16.msra.mxu0 %v5837
        %6770 = vmatpush.bf16.msra.mxu0 %v5830
        %6771 = vmatpush.bf16.msra.mxu0 %v5823
        %6772 = vmatpush.bf16.msra.mxu0 %v5816
        %6773 = vmatpush.bf16.msra.mxu0 %v5809
        %6774 = vmatpush.bf16.msra.mxu0 %v5802
        %6775 = vmatpush.bf16.msra.mxu0 %v5795
        %6776 = vmatmul.bf16.gmra.mxu0 %v3685
        %v6777 = vpop.f32.mrf.mxu0
        %v6778 = vadd.f32 %v6765, %v6777
        %v6779 = vpop.f32.mrf.mxu0
        %6780 = vdwg.mxu0
        %6781 = vmatpush.bf16.msra.mxu0 %v5900
        %6782 = vmatpush.bf16.msra.mxu0 %v5893
        %6783 = vmatpush.bf16.msra.mxu0 %v5886
        %6784 = vmatpush.bf16.msra.mxu0 %v5879
        %6785 = vmatpush.bf16.msra.mxu0 %v5872
        %6786 = vmatpush.bf16.msra.mxu0 %v5865
        %6787 = vmatpush.bf16.msra.mxu0 %v5858
        %6788 = vmatpush.bf16.msra.mxu0 %v5851
        %6789 = vmatmul.bf16.gmra.mxu0 %v3686
        %v6790 = vpop.f32.mrf.mxu0
        %v6791 = vadd.f32 %v6778, %v6790
        %v6792 = vpop.f32.mrf.mxu0
        %6793 = vdwg.mxu0
        %6794 = vmatpush.bf16.msra.mxu0 %v5956
        %6795 = vmatpush.bf16.msra.mxu0 %v5949
        %6796 = vmatpush.bf16.msra.mxu0 %v5942
        %6797 = vmatpush.bf16.msra.mxu0 %v5935
        %6798 = vmatpush.bf16.msra.mxu0 %v5928
        %6799 = vmatpush.bf16.msra.mxu0 %v5921
        %6800 = vmatpush.bf16.msra.mxu0 %v5914
        %6801 = vmatpush.bf16.msra.mxu0 %v5907
        %6802 = vmatmul.bf16.gmra.mxu0 %v3687
        %v6803 = vpop.f32.mrf.mxu0
        %v6804 = vadd.f32 %v6791, %v6803
        %v6805 = vpop.f32.mrf.mxu0
        %6806 = vdwg.mxu0
        %6807 = vmatpush.bf16.msra.mxu0 %v6012
        %6808 = vmatpush.bf16.msra.mxu0 %v6005
        %6809 = vmatpush.bf16.msra.mxu0 %v5998
        %6810 = vmatpush.bf16.msra.mxu0 %v5991
        %6811 = vmatpush.bf16.msra.mxu0 %v5984
        %6812 = vmatpush.bf16.msra.mxu0 %v5977
        %6813 = vmatpush.bf16.msra.mxu0 %v5970
        %6814 = vmatpush.bf16.msra.mxu0 %v5963
        %6815 = vmatmul.bf16.gmra.mxu0 %v3688
        %v6816 = vpop.f32.mrf.mxu0
        %v6817 = vadd.f32 %v6804, %v6816
        %v6818 = vpop.f32.mrf.mxu0
        %6819 = vdwg.mxu0
        %6820 = vmatpush.bf16.msra.mxu0 %v6068
        %6821 = vmatpush.bf16.msra.mxu0 %v6061
        %6822 = vmatpush.bf16.msra.mxu0 %v6054
        %6823 = vmatpush.bf16.msra.mxu0 %v6047
        %6824 = vmatpush.bf16.msra.mxu0 %v6040
        %6825 = vmatpush.bf16.msra.mxu0 %v6033
        %6826 = vmatpush.bf16.msra.mxu0 %v6026
        %6827 = vmatpush.bf16.msra.mxu0 %v6019
        %6828 = vmatmul.bf16.gmra.mxu0 %v3689
        %v6829 = vpop.f32.mrf.mxu0
        %v6830 = vadd.f32 %v6817, %v6829
        %v6831 = vpop.f32.mrf.mxu0
        %6832 = vdwg.mxu0
        %6833 = vmatpush.bf16.msra.mxu0 %v5677
        %6834 = vmatpush.bf16.msra.mxu0 %v5670
        %6835 = vmatpush.bf16.msra.mxu0 %v5663
        %6836 = vmatpush.bf16.msra.mxu0 %v5656
        %6837 = vmatpush.bf16.msra.mxu0 %v5649
        %6838 = vmatpush.bf16.msra.mxu0 %v5642
        %6839 = vmatpush.bf16.msra.mxu0 %v5635
        %6840 = vmatpush.bf16.msra.mxu0 %v5628
        %6841 = vmatmul.bf16.gmra.mxu0 %v3682
        %v6842 = vpop.f32.mrf.mxu0
        %v6843 = vadd.f32 %v4206, %v6842
        %v6844 = vpop.f32.mrf.mxu0
        %6845 = vdwg.mxu0
        %6846 = vmatpush.bf16.msra.mxu0 %v5733
        %6847 = vmatpush.bf16.msra.mxu0 %v5726
        %6848 = vmatpush.bf16.msra.mxu0 %v5719
        %6849 = vmatpush.bf16.msra.mxu0 %v5712
        %6850 = vmatpush.bf16.msra.mxu0 %v5705
        %6851 = vmatpush.bf16.msra.mxu0 %v5698
        %6852 = vmatpush.bf16.msra.mxu0 %v5691
        %6853 = vmatpush.bf16.msra.mxu0 %v5684
        %6854 = vmatmul.bf16.gmra.mxu0 %v3683
        %v6855 = vpop.f32.mrf.mxu0
        %v6856 = vadd.f32 %v6843, %v6855
        %v6857 = vpop.f32.mrf.mxu0
        %6858 = vdwg.mxu0
        %6859 = vmatpush.bf16.msra.mxu0 %v5789
        %6860 = vmatpush.bf16.msra.mxu0 %v5782
        %6861 = vmatpush.bf16.msra.mxu0 %v5775
        %6862 = vmatpush.bf16.msra.mxu0 %v5768
        %6863 = vmatpush.bf16.msra.mxu0 %v5761
        %6864 = vmatpush.bf16.msra.mxu0 %v5754
        %6865 = vmatpush.bf16.msra.mxu0 %v5747
        %6866 = vmatpush.bf16.msra.mxu0 %v5740
        %6867 = vmatmul.bf16.gmra.mxu0 %v3684
        %v6868 = vpop.f32.mrf.mxu0
        %v6869 = vadd.f32 %v6856, %v6868
        %v6870 = vpop.f32.mrf.mxu0
        %6871 = vdwg.mxu0
        %6872 = vmatpush.bf16.msra.mxu0 %v5845
        %6873 = vmatpush.bf16.msra.mxu0 %v5838
        %6874 = vmatpush.bf16.msra.mxu0 %v5831
        %6875 = vmatpush.bf16.msra.mxu0 %v5824
        %6876 = vmatpush.bf16.msra.mxu0 %v5817
        %6877 = vmatpush.bf16.msra.mxu0 %v5810
        %6878 = vmatpush.bf16.msra.mxu0 %v5803
        %6879 = vmatpush.bf16.msra.mxu0 %v5796
        %6880 = vmatmul.bf16.gmra.mxu0 %v3685
        %v6881 = vpop.f32.mrf.mxu0
        %v6882 = vadd.f32 %v6869, %v6881
        %v6883 = vpop.f32.mrf.mxu0
        %6884 = vdwg.mxu0
        %6885 = vmatpush.bf16.msra.mxu0 %v5901
        %6886 = vmatpush.bf16.msra.mxu0 %v5894
        %6887 = vmatpush.bf16.msra.mxu0 %v5887
        %6888 = vmatpush.bf16.msra.mxu0 %v5880
        %6889 = vmatpush.bf16.msra.mxu0 %v5873
        %6890 = vmatpush.bf16.msra.mxu0 %v5866
        %6891 = vmatpush.bf16.msra.mxu0 %v5859
        %6892 = vmatpush.bf16.msra.mxu0 %v5852
        %6893 = vmatmul.bf16.gmra.mxu0 %v3686
        %v6894 = vpop.f32.mrf.mxu0
        %v6895 = vadd.f32 %v6882, %v6894
        %v6896 = vpop.f32.mrf.mxu0
        %6897 = vdwg.mxu0
        %6898 = vmatpush.bf16.msra.mxu0 %v5957
        %6899 = vmatpush.bf16.msra.mxu0 %v5950
        %6900 = vmatpush.bf16.msra.mxu0 %v5943
        %6901 = vmatpush.bf16.msra.mxu0 %v5936
        %6902 = vmatpush.bf16.msra.mxu0 %v5929
        %6903 = vmatpush.bf16.msra.mxu0 %v5922
        %6904 = vmatpush.bf16.msra.mxu0 %v5915
        %6905 = vmatpush.bf16.msra.mxu0 %v5908
        %6906 = vmatmul.bf16.gmra.mxu0 %v3687
        %v6907 = vpop.f32.mrf.mxu0
        %v6908 = vadd.f32 %v6895, %v6907
        %v6909 = vpop.f32.mrf.mxu0
        %6910 = vdwg.mxu0
        %6911 = vmatpush.bf16.msra.mxu0 %v6013
        %6912 = vmatpush.bf16.msra.mxu0 %v6006
        %6913 = vmatpush.bf16.msra.mxu0 %v5999
        %6914 = vmatpush.bf16.msra.mxu0 %v5992
        %6915 = vmatpush.bf16.msra.mxu0 %v5985
        %6916 = vmatpush.bf16.msra.mxu0 %v5978
        %6917 = vmatpush.bf16.msra.mxu0 %v5971
        %6918 = vmatpush.bf16.msra.mxu0 %v5964
        %6919 = vmatmul.bf16.gmra.mxu0 %v3688
        %v6920 = vpop.f32.mrf.mxu0
        %v6921 = vadd.f32 %v6908, %v6920
        %v6922 = vpop.f32.mrf.mxu0
        %6923 = vdwg.mxu0
        %6924 = vmatpush.bf16.msra.mxu0 %v6069
        %6925 = vmatpush.bf16.msra.mxu0 %v6062
        %6926 = vmatpush.bf16.msra.mxu0 %v6055
        %6927 = vmatpush.bf16.msra.mxu0 %v6048
        %6928 = vmatpush.bf16.msra.mxu0 %v6041
        %6929 = vmatpush.bf16.msra.mxu0 %v6034
        %6930 = vmatpush.bf16.msra.mxu0 %v6027
        %6931 = vmatpush.bf16.msra.mxu0 %v6020
        %6932 = vmatmul.bf16.gmra.mxu0 %v3689
        %v6933 = vpop.f32.mrf.mxu0
        %v6934 = vadd.f32 %v6921, %v6933
        %v6935 = vpop.f32.mrf.mxu0
        %6936 = vdwg.mxu0
        %6937 = vmatpush.bf16.msra.mxu0 %v5678
        %6938 = vmatpush.bf16.msra.mxu0 %v5671
        %6939 = vmatpush.bf16.msra.mxu0 %v5664
        %6940 = vmatpush.bf16.msra.mxu0 %v5657
        %6941 = vmatpush.bf16.msra.mxu0 %v5650
        %6942 = vmatpush.bf16.msra.mxu0 %v5643
        %6943 = vmatpush.bf16.msra.mxu0 %v5636
        %6944 = vmatpush.bf16.msra.mxu0 %v5629
        %6945 = vmatmul.bf16.gmra.mxu0 %v3682
        %v6946 = vpop.f32.mrf.mxu0
        %v6947 = vadd.f32 %v4207, %v6946
        %v6948 = vpop.f32.mrf.mxu0
        %6949 = vdwg.mxu0
        %6950 = vmatpush.bf16.msra.mxu0 %v5734
        %6951 = vmatpush.bf16.msra.mxu0 %v5727
        %6952 = vmatpush.bf16.msra.mxu0 %v5720
        %6953 = vmatpush.bf16.msra.mxu0 %v5713
        %6954 = vmatpush.bf16.msra.mxu0 %v5706
        %6955 = vmatpush.bf16.msra.mxu0 %v5699
        %6956 = vmatpush.bf16.msra.mxu0 %v5692
        %6957 = vmatpush.bf16.msra.mxu0 %v5685
        %6958 = vmatmul.bf16.gmra.mxu0 %v3683
        %v6959 = vpop.f32.mrf.mxu0
        %v6960 = vadd.f32 %v6947, %v6959
        %v6961 = vpop.f32.mrf.mxu0
        %6962 = vdwg.mxu0
        %6963 = vmatpush.bf16.msra.mxu0 %v5790
        %6964 = vmatpush.bf16.msra.mxu0 %v5783
        %6965 = vmatpush.bf16.msra.mxu0 %v5776
        %6966 = vmatpush.bf16.msra.mxu0 %v5769
        %6967 = vmatpush.bf16.msra.mxu0 %v5762
        %6968 = vmatpush.bf16.msra.mxu0 %v5755
        %6969 = vmatpush.bf16.msra.mxu0 %v5748
        %6970 = vmatpush.bf16.msra.mxu0 %v5741
        %6971 = vmatmul.bf16.gmra.mxu0 %v3684
        %v6972 = vpop.f32.mrf.mxu0
        %v6973 = vadd.f32 %v6960, %v6972
        %v6974 = vpop.f32.mrf.mxu0
        %6975 = vdwg.mxu0
        %6976 = vmatpush.bf16.msra.mxu0 %v5846
        %6977 = vmatpush.bf16.msra.mxu0 %v5839
        %6978 = vmatpush.bf16.msra.mxu0 %v5832
        %6979 = vmatpush.bf16.msra.mxu0 %v5825
        %6980 = vmatpush.bf16.msra.mxu0 %v5818
        %6981 = vmatpush.bf16.msra.mxu0 %v5811
        %6982 = vmatpush.bf16.msra.mxu0 %v5804
        %6983 = vmatpush.bf16.msra.mxu0 %v5797
        %6984 = vmatmul.bf16.gmra.mxu0 %v3685
        %v6985 = vpop.f32.mrf.mxu0
        %v6986 = vadd.f32 %v6973, %v6985
        %v6987 = vpop.f32.mrf.mxu0
        %6988 = vdwg.mxu0
        %6989 = vmatpush.bf16.msra.mxu0 %v5902
        %6990 = vmatpush.bf16.msra.mxu0 %v5895
        %6991 = vmatpush.bf16.msra.mxu0 %v5888
        %6992 = vmatpush.bf16.msra.mxu0 %v5881
        %6993 = vmatpush.bf16.msra.mxu0 %v5874
        %6994 = vmatpush.bf16.msra.mxu0 %v5867
        %6995 = vmatpush.bf16.msra.mxu0 %v5860
        %6996 = vmatpush.bf16.msra.mxu0 %v5853
        %6997 = vmatmul.bf16.gmra.mxu0 %v3686
        %v6998 = vpop.f32.mrf.mxu0
        %v6999 = vadd.f32 %v6986, %v6998
        %v7000 = vpop.f32.mrf.mxu0
        %7001 = vdwg.mxu0
        %7002 = vmatpush.bf16.msra.mxu0 %v5958
        %7003 = vmatpush.bf16.msra.mxu0 %v5951
        %7004 = vmatpush.bf16.msra.mxu0 %v5944
        %7005 = vmatpush.bf16.msra.mxu0 %v5937
        %7006 = vmatpush.bf16.msra.mxu0 %v5930
        %7007 = vmatpush.bf16.msra.mxu0 %v5923
        %7008 = vmatpush.bf16.msra.mxu0 %v5916
        %7009 = vmatpush.bf16.msra.mxu0 %v5909
        %7010 = vmatmul.bf16.gmra.mxu0 %v3687
        %v7011 = vpop.f32.mrf.mxu0
        %v7012 = vadd.f32 %v6999, %v7011
        %v7013 = vpop.f32.mrf.mxu0
        %7014 = vdwg.mxu0
        %7015 = vmatpush.bf16.msra.mxu0 %v6014
        %7016 = vmatpush.bf16.msra.mxu0 %v6007
        %7017 = vmatpush.bf16.msra.mxu0 %v6000
        %7018 = vmatpush.bf16.msra.mxu0 %v5993
        %7019 = vmatpush.bf16.msra.mxu0 %v5986
        %7020 = vmatpush.bf16.msra.mxu0 %v5979
        %7021 = vmatpush.bf16.msra.mxu0 %v5972
        %7022 = vmatpush.bf16.msra.mxu0 %v5965
        %7023 = vmatmul.bf16.gmra.mxu0 %v3688
        %v7024 = vpop.f32.mrf.mxu0
        %v7025 = vadd.f32 %v7012, %v7024
        %v7026 = vpop.f32.mrf.mxu0
        %7027 = vdwg.mxu0
        %7028 = vmatpush.bf16.msra.mxu0 %v6070
        %7029 = vmatpush.bf16.msra.mxu0 %v6063
        %7030 = vmatpush.bf16.msra.mxu0 %v6056
        %7031 = vmatpush.bf16.msra.mxu0 %v6049
        %7032 = vmatpush.bf16.msra.mxu0 %v6042
        %7033 = vmatpush.bf16.msra.mxu0 %v6035
        %7034 = vmatpush.bf16.msra.mxu0 %v6028
        %7035 = vmatpush.bf16.msra.mxu0 %v6021
        %7036 = vmatmul.bf16.gmra.mxu0 %v3689
        %v7037 = vpop.f32.mrf.mxu0
        %v7038 = vadd.f32 %v7025, %v7037
        %v7039 = vpop.f32.mrf.mxu0
        %7040 = vdwg.mxu0
        %7041 = vmatpush.bf16.msra.mxu0 %v5679
        %7042 = vmatpush.bf16.msra.mxu0 %v5672
        %7043 = vmatpush.bf16.msra.mxu0 %v5665
        %7044 = vmatpush.bf16.msra.mxu0 %v5658
        %7045 = vmatpush.bf16.msra.mxu0 %v5651
        %7046 = vmatpush.bf16.msra.mxu0 %v5644
        %7047 = vmatpush.bf16.msra.mxu0 %v5637
        %7048 = vmatpush.bf16.msra.mxu0 %v5630
        %7049 = vmatmul.bf16.gmra.mxu0 %v3682
        %v7050 = vpop.f32.mrf.mxu0
        %v7051 = vadd.f32 %v4208, %v7050
        %v7052 = vpop.f32.mrf.mxu0
        %7053 = vdwg.mxu0
        %7054 = vmatpush.bf16.msra.mxu0 %v5735
        %7055 = vmatpush.bf16.msra.mxu0 %v5728
        %7056 = vmatpush.bf16.msra.mxu0 %v5721
        %7057 = vmatpush.bf16.msra.mxu0 %v5714
        %7058 = vmatpush.bf16.msra.mxu0 %v5707
        %7059 = vmatpush.bf16.msra.mxu0 %v5700
        %7060 = vmatpush.bf16.msra.mxu0 %v5693
        %7061 = vmatpush.bf16.msra.mxu0 %v5686
        %7062 = vmatmul.bf16.gmra.mxu0 %v3683
        %v7063 = vpop.f32.mrf.mxu0
        %v7064 = vadd.f32 %v7051, %v7063
        %v7065 = vpop.f32.mrf.mxu0
        %7066 = vdwg.mxu0
        %7067 = vmatpush.bf16.msra.mxu0 %v5791
        %7068 = vmatpush.bf16.msra.mxu0 %v5784
        %7069 = vmatpush.bf16.msra.mxu0 %v5777
        %7070 = vmatpush.bf16.msra.mxu0 %v5770
        %7071 = vmatpush.bf16.msra.mxu0 %v5763
        %7072 = vmatpush.bf16.msra.mxu0 %v5756
        %7073 = vmatpush.bf16.msra.mxu0 %v5749
        %7074 = vmatpush.bf16.msra.mxu0 %v5742
        %7075 = vmatmul.bf16.gmra.mxu0 %v3684
        %v7076 = vpop.f32.mrf.mxu0
        %v7077 = vadd.f32 %v7064, %v7076
        %v7078 = vpop.f32.mrf.mxu0
        %7079 = vdwg.mxu0
        %7080 = vmatpush.bf16.msra.mxu0 %v5847
        %7081 = vmatpush.bf16.msra.mxu0 %v5840
        %7082 = vmatpush.bf16.msra.mxu0 %v5833
        %7083 = vmatpush.bf16.msra.mxu0 %v5826
        %7084 = vmatpush.bf16.msra.mxu0 %v5819
        %7085 = vmatpush.bf16.msra.mxu0 %v5812
        %7086 = vmatpush.bf16.msra.mxu0 %v5805
        %7087 = vmatpush.bf16.msra.mxu0 %v5798
        %7088 = vmatmul.bf16.gmra.mxu0 %v3685
        %v7089 = vpop.f32.mrf.mxu0
        %v7090 = vadd.f32 %v7077, %v7089
        %v7091 = vpop.f32.mrf.mxu0
        %7092 = vdwg.mxu0
        %7093 = vmatpush.bf16.msra.mxu0 %v5903
        %7094 = vmatpush.bf16.msra.mxu0 %v5896
        %7095 = vmatpush.bf16.msra.mxu0 %v5889
        %7096 = vmatpush.bf16.msra.mxu0 %v5882
        %7097 = vmatpush.bf16.msra.mxu0 %v5875
        %7098 = vmatpush.bf16.msra.mxu0 %v5868
        %7099 = vmatpush.bf16.msra.mxu0 %v5861
        %7100 = vmatpush.bf16.msra.mxu0 %v5854
        %7101 = vmatmul.bf16.gmra.mxu0 %v3686
        %v7102 = vpop.f32.mrf.mxu0
        %v7103 = vadd.f32 %v7090, %v7102
        %v7104 = vpop.f32.mrf.mxu0
        %7105 = vdwg.mxu0
        %7106 = vmatpush.bf16.msra.mxu0 %v5959
        %7107 = vmatpush.bf16.msra.mxu0 %v5952
        %7108 = vmatpush.bf16.msra.mxu0 %v5945
        %7109 = vmatpush.bf16.msra.mxu0 %v5938
        %7110 = vmatpush.bf16.msra.mxu0 %v5931
        %7111 = vmatpush.bf16.msra.mxu0 %v5924
        %7112 = vmatpush.bf16.msra.mxu0 %v5917
        %7113 = vmatpush.bf16.msra.mxu0 %v5910
        %7114 = vmatmul.bf16.gmra.mxu0 %v3687
        %v7115 = vpop.f32.mrf.mxu0
        %v7116 = vadd.f32 %v7103, %v7115
        %v7117 = vpop.f32.mrf.mxu0
        %7118 = vdwg.mxu0
        %7119 = vmatpush.bf16.msra.mxu0 %v6015
        %7120 = vmatpush.bf16.msra.mxu0 %v6008
        %7121 = vmatpush.bf16.msra.mxu0 %v6001
        %7122 = vmatpush.bf16.msra.mxu0 %v5994
        %7123 = vmatpush.bf16.msra.mxu0 %v5987
        %7124 = vmatpush.bf16.msra.mxu0 %v5980
        %7125 = vmatpush.bf16.msra.mxu0 %v5973
        %7126 = vmatpush.bf16.msra.mxu0 %v5966
        %7127 = vmatmul.bf16.gmra.mxu0 %v3688
        %v7128 = vpop.f32.mrf.mxu0
        %v7129 = vadd.f32 %v7116, %v7128
        %v7130 = vpop.f32.mrf.mxu0
        %7131 = vdwg.mxu0
        %7132 = vmatpush.bf16.msra.mxu0 %v6071
        %7133 = vmatpush.bf16.msra.mxu0 %v6064
        %7134 = vmatpush.bf16.msra.mxu0 %v6057
        %7135 = vmatpush.bf16.msra.mxu0 %v6050
        %7136 = vmatpush.bf16.msra.mxu0 %v6043
        %7137 = vmatpush.bf16.msra.mxu0 %v6036
        %7138 = vmatpush.bf16.msra.mxu0 %v6029
        %7139 = vmatpush.bf16.msra.mxu0 %v6022
        %7140 = vmatmul.bf16.gmra.mxu0 %v3689
        %v7141 = vpop.f32.mrf.mxu0
        %v7142 = vadd.f32 %v7129, %v7141
        %v7143 = vpop.f32.mrf.mxu0
        %7144 = vdwg.mxu0
        %7145 = vmatpush.bf16.msra.mxu0 %v5680
        %7146 = vmatpush.bf16.msra.mxu0 %v5673
        %7147 = vmatpush.bf16.msra.mxu0 %v5666
        %7148 = vmatpush.bf16.msra.mxu0 %v5659
        %7149 = vmatpush.bf16.msra.mxu0 %v5652
        %7150 = vmatpush.bf16.msra.mxu0 %v5645
        %7151 = vmatpush.bf16.msra.mxu0 %v5638
        %7152 = vmatpush.bf16.msra.mxu0 %v5631
        %7153 = vmatmul.bf16.gmra.mxu0 %v3682
        %v7154 = vpop.f32.mrf.mxu0
        %v7155 = vadd.f32 %v4209, %v7154
        %v7156 = vpop.f32.mrf.mxu0
        %7157 = vdwg.mxu0
        %7158 = vmatpush.bf16.msra.mxu0 %v5736
        %7159 = vmatpush.bf16.msra.mxu0 %v5729
        %7160 = vmatpush.bf16.msra.mxu0 %v5722
        %7161 = vmatpush.bf16.msra.mxu0 %v5715
        %7162 = vmatpush.bf16.msra.mxu0 %v5708
        %7163 = vmatpush.bf16.msra.mxu0 %v5701
        %7164 = vmatpush.bf16.msra.mxu0 %v5694
        %7165 = vmatpush.bf16.msra.mxu0 %v5687
        %7166 = vmatmul.bf16.gmra.mxu0 %v3683
        %v7167 = vpop.f32.mrf.mxu0
        %v7168 = vadd.f32 %v7155, %v7167
        %v7169 = vpop.f32.mrf.mxu0
        %7170 = vdwg.mxu0
        %7171 = vmatpush.bf16.msra.mxu0 %v5792
        %7172 = vmatpush.bf16.msra.mxu0 %v5785
        %7173 = vmatpush.bf16.msra.mxu0 %v5778
        %7174 = vmatpush.bf16.msra.mxu0 %v5771
        %7175 = vmatpush.bf16.msra.mxu0 %v5764
        %7176 = vmatpush.bf16.msra.mxu0 %v5757
        %7177 = vmatpush.bf16.msra.mxu0 %v5750
        %7178 = vmatpush.bf16.msra.mxu0 %v5743
        %7179 = vmatmul.bf16.gmra.mxu0 %v3684
        %v7180 = vpop.f32.mrf.mxu0
        %v7181 = vadd.f32 %v7168, %v7180
        %v7182 = vpop.f32.mrf.mxu0
        %7183 = vdwg.mxu0
        %7184 = vmatpush.bf16.msra.mxu0 %v5848
        %7185 = vmatpush.bf16.msra.mxu0 %v5841
        %7186 = vmatpush.bf16.msra.mxu0 %v5834
        %7187 = vmatpush.bf16.msra.mxu0 %v5827
        %7188 = vmatpush.bf16.msra.mxu0 %v5820
        %7189 = vmatpush.bf16.msra.mxu0 %v5813
        %7190 = vmatpush.bf16.msra.mxu0 %v5806
        %7191 = vmatpush.bf16.msra.mxu0 %v5799
        %7192 = vmatmul.bf16.gmra.mxu0 %v3685
        %v7193 = vpop.f32.mrf.mxu0
        %v7194 = vadd.f32 %v7181, %v7193
        %v7195 = vpop.f32.mrf.mxu0
        %7196 = vdwg.mxu0
        %7197 = vmatpush.bf16.msra.mxu0 %v5904
        %7198 = vmatpush.bf16.msra.mxu0 %v5897
        %7199 = vmatpush.bf16.msra.mxu0 %v5890
        %7200 = vmatpush.bf16.msra.mxu0 %v5883
        %7201 = vmatpush.bf16.msra.mxu0 %v5876
        %7202 = vmatpush.bf16.msra.mxu0 %v5869
        %7203 = vmatpush.bf16.msra.mxu0 %v5862
        %7204 = vmatpush.bf16.msra.mxu0 %v5855
        %7205 = vmatmul.bf16.gmra.mxu0 %v3686
        %v7206 = vpop.f32.mrf.mxu0
        %v7207 = vadd.f32 %v7194, %v7206
        %v7208 = vpop.f32.mrf.mxu0
        %7209 = vdwg.mxu0
        %7210 = vmatpush.bf16.msra.mxu0 %v5960
        %7211 = vmatpush.bf16.msra.mxu0 %v5953
        %7212 = vmatpush.bf16.msra.mxu0 %v5946
        %7213 = vmatpush.bf16.msra.mxu0 %v5939
        %7214 = vmatpush.bf16.msra.mxu0 %v5932
        %7215 = vmatpush.bf16.msra.mxu0 %v5925
        %7216 = vmatpush.bf16.msra.mxu0 %v5918
        %7217 = vmatpush.bf16.msra.mxu0 %v5911
        %7218 = vmatmul.bf16.gmra.mxu0 %v3687
        %v7219 = vpop.f32.mrf.mxu0
        %v7220 = vadd.f32 %v7207, %v7219
        %v7221 = vpop.f32.mrf.mxu0
        %7222 = vdwg.mxu0
        %7223 = vmatpush.bf16.msra.mxu0 %v6016
        %7224 = vmatpush.bf16.msra.mxu0 %v6009
        %7225 = vmatpush.bf16.msra.mxu0 %v6002
        %7226 = vmatpush.bf16.msra.mxu0 %v5995
        %7227 = vmatpush.bf16.msra.mxu0 %v5988
        %7228 = vmatpush.bf16.msra.mxu0 %v5981
        %7229 = vmatpush.bf16.msra.mxu0 %v5974
        %7230 = vmatpush.bf16.msra.mxu0 %v5967
        %7231 = vmatmul.bf16.gmra.mxu0 %v3688
        %v7232 = vpop.f32.mrf.mxu0
        %v7233 = vadd.f32 %v7220, %v7232
        %v7234 = vpop.f32.mrf.mxu0
        %7235 = vdwg.mxu0
        %7236 = vmatpush.bf16.msra.mxu0 %v6072
        %7237 = vmatpush.bf16.msra.mxu0 %v6065
        %7238 = vmatpush.bf16.msra.mxu0 %v6058
        %7239 = vmatpush.bf16.msra.mxu0 %v6051
        %7240 = vmatpush.bf16.msra.mxu0 %v6044
        %7241 = vmatpush.bf16.msra.mxu0 %v6037
        %7242 = vmatpush.bf16.msra.mxu0 %v6030
        %7243 = vmatpush.bf16.msra.mxu0 %v6023
        %7244 = vmatmul.bf16.gmra.mxu0 %v3689
        %v7245 = vpop.f32.mrf.mxu0
        %v7246 = vadd.f32 %v7233, %v7245
        %v7247 = vpop.f32.mrf.mxu0
        %7248 = vdwg.mxu0
        %v7249 = vxor.u32 %v6622, 2147483648
        %v7250 = vxor.u32 %v6726, 2147483648
        %v7251 = vxor.u32 %v6830, 2147483648
        %v7252 = vxor.u32 %v6934, 2147483648
        %v7253 = vxor.u32 %v7038, 2147483648
        %v7254 = vxor.u32 %v7142, 2147483648
        %v7255 = vxor.u32 %v7246, 2147483648
        %v7256 = vmul.f32 %v7249, 1.442695
        %v7257 = vpow.pop %v7256
        %v7258 = vmul.f32 %v7250, 1.442695
        %v7259 = vpow.pop %v7258
        %v7260 = vmul.f32 %v7251, 1.442695
        %v7261 = vpow.pop %v7260
        %v7262 = vmul.f32 %v7252, 1.442695
        %v7263 = vpow.pop %v7262
        %v7264 = vmul.f32 %v7253, 1.442695
        %v7265 = vpow.pop %v7264
        %v7266 = vmul.f32 %v7254, 1.442695
        %v7267 = vpow.pop %v7266
        %v7268 = vmul.f32 %v7255, 1.442695
        %v7269 = vpow.pop %v7268
        %v7270 = vadd.f32 %v7257, 1.0
        %v7271 = vadd.f32 %v7259, 1.0
        %v7272 = vadd.f32 %v7261, 1.0
        %v7273 = vadd.f32 %v7263, 1.0
        %v7274 = vadd.f32 %v7265, 1.0
        %v7275 = vadd.f32 %v7267, 1.0
        %v7276 = vadd.f32 %v7269, 1.0
        %v7277 = vrcp.pop %v7270
        %v7278 = vmul.f32 %v7270, %v7277
        %v7279 = vsub.f32 1.0, %v7278
        %v7280 = vmul.f32 %v7277, %v7279
        %v7281 = vadd.f32 %v7277, %v7280
        %vm7282 = vweird.f32 %v7270
        %vm7283 = vweird.f32 %v7277
        %vm7284 = vmor %vm7282, %vm7283
        %v7285 = vsel %vm7284, %v7277, %v7281
        %v7286 = vand.u32 2147483647, %v7270
        %vm7287 = vcmp.eq.f32.partialorder %v7286, 8.507059e+37
        %v7288 = vand.u32 %v7270, 2147483648
        %v7289 = vor.u32 1.1754944e-38, %v7288
        %v7290 = vsel %vm7287, %v7289, %v7285
        %v7291 = vmul.f32 1.0, %v7290
        %v7292 = vrcp.pop %v7271
        %v7293 = vmul.f32 %v7271, %v7292
        %v7294 = vsub.f32 1.0, %v7293
        %v7295 = vmul.f32 %v7292, %v7294
        %v7296 = vadd.f32 %v7292, %v7295
        %vm7297 = vweird.f32 %v7271
        %vm7298 = vweird.f32 %v7292
        %vm7299 = vmor %vm7297, %vm7298
        %v7300 = vsel %vm7299, %v7292, %v7296
        %v7301 = vand.u32 2147483647, %v7271
        %vm7302 = vcmp.eq.f32.partialorder %v7301, 8.507059e+37
        %v7303 = vand.u32 %v7271, 2147483648
        %v7304 = vor.u32 1.1754944e-38, %v7303
        %v7305 = vsel %vm7302, %v7304, %v7300
        %v7306 = vmul.f32 1.0, %v7305
        %v7307 = vrcp.pop %v7272
        %v7308 = vmul.f32 %v7272, %v7307
        %v7309 = vsub.f32 1.0, %v7308
        %v7310 = vmul.f32 %v7307, %v7309
        %v7311 = vadd.f32 %v7307, %v7310
        %vm7312 = vweird.f32 %v7272
        %vm7313 = vweird.f32 %v7307
        %vm7314 = vmor %vm7312, %vm7313
        %v7315 = vsel %vm7314, %v7307, %v7311
        %v7316 = vand.u32 2147483647, %v7272
        %vm7317 = vcmp.eq.f32.partialorder %v7316, 8.507059e+37
        %v7318 = vand.u32 %v7272, 2147483648
        %v7319 = vor.u32 1.1754944e-38, %v7318
        %v7320 = vsel %vm7317, %v7319, %v7315
        %v7321 = vmul.f32 1.0, %v7320
        %v7322 = vrcp.pop %v7273
        %v7323 = vmul.f32 %v7273, %v7322
        %v7324 = vsub.f32 1.0, %v7323
        %v7325 = vmul.f32 %v7322, %v7324
        %v7326 = vadd.f32 %v7322, %v7325
        %vm7327 = vweird.f32 %v7273
        %vm7328 = vweird.f32 %v7322
        %vm7329 = vmor %vm7327, %vm7328
        %v7330 = vsel %vm7329, %v7322, %v7326
        %v7331 = vand.u32 2147483647, %v7273
        %vm7332 = vcmp.eq.f32.partialorder %v7331, 8.507059e+37
        %v7333 = vand.u32 %v7273, 2147483648
        %v7334 = vor.u32 1.1754944e-38, %v7333
        %v7335 = vsel %vm7332, %v7334, %v7330
        %v7336 = vmul.f32 1.0, %v7335
        %v7337 = vrcp.pop %v7274
        %v7338 = vmul.f32 %v7274, %v7337
        %v7339 = vsub.f32 1.0, %v7338
        %v7340 = vmul.f32 %v7337, %v7339
        %v7341 = vadd.f32 %v7337, %v7340
        %vm7342 = vweird.f32 %v7274
        %vm7343 = vweird.f32 %v7337
        %vm7344 = vmor %vm7342, %vm7343
        %v7345 = vsel %vm7344, %v7337, %v7341
        %v7346 = vand.u32 2147483647, %v7274
        %vm7347 = vcmp.eq.f32.partialorder %v7346, 8.507059e+37
        %v7348 = vand.u32 %v7274, 2147483648
        %v7349 = vor.u32 1.1754944e-38, %v7348
        %v7350 = vsel %vm7347, %v7349, %v7345
        %v7351 = vmul.f32 1.0, %v7350
        %v7352 = vrcp.pop %v7275
        %v7353 = vmul.f32 %v7275, %v7352
        %v7354 = vsub.f32 1.0, %v7353
        %v7355 = vmul.f32 %v7352, %v7354
        %v7356 = vadd.f32 %v7352, %v7355
        %vm7357 = vweird.f32 %v7275
        %vm7358 = vweird.f32 %v7352
        %vm7359 = vmor %vm7357, %vm7358
        %v7360 = vsel %vm7359, %v7352, %v7356
        %v7361 = vand.u32 2147483647, %v7275
        %vm7362 = vcmp.eq.f32.partialorder %v7361, 8.507059e+37
        %v7363 = vand.u32 %v7275, 2147483648
        %v7364 = vor.u32 1.1754944e-38, %v7363
        %v7365 = vsel %vm7362, %v7364, %v7360
        %v7366 = vmul.f32 1.0, %v7365
        %v7367 = vrcp.pop %v7276
        %v7368 = vmul.f32 %v7276, %v7367
        %v7369 = vsub.f32 1.0, %v7368
        %v7370 = vmul.f32 %v7367, %v7369
        %v7371 = vadd.f32 %v7367, %v7370
        %vm7372 = vweird.f32 %v7276
        %vm7373 = vweird.f32 %v7367
        %vm7374 = vmor %vm7372, %vm7373
        %v7375 = vsel %vm7374, %v7367, %v7371
        %v7376 = vand.u32 2147483647, %v7276
        %vm7377 = vcmp.eq.f32.partialorder %v7376, 8.507059e+37
        %v7378 = vand.u32 %v7276, 2147483648
        %v7379 = vor.u32 1.1754944e-38, %v7378
        %v7380 = vsel %vm7377, %v7379, %v7375
        %v7381 = vmul.f32 1.0, %v7380
        %7382 = vst [vmem:[%s392] sm:$0xff] %v7291
        %7383 = vst [vmem:[%s392 + $0x8] sm:$0xff] %v7306
        %7384 = vst [vmem:[%s392 + $0x10] sm:$0xff] %v7321
        %7385 = vst [vmem:[%s392 + $0x18] sm:$0xff] %v7336
        %7386 = vst [vmem:[%s392 + $0x20] sm:$0xff] %v7351
        %7387 = vst [vmem:[%s392 + $0x28] sm:$0xff] %v7366
        %7388 = vst [vmem:[%s392 + $0x30] sm:$0xff] %v7381
        %s7389 = sand.u32 %s187, 1
        %s7390 = scalar_lea.sflag [#allocation4], %s7389
        %s7391 = sand.u32 %s187, 1
        %s7392 = smul.addr %s7391, 56
        %s7393 = scalar_lea.vmem [#allocation14], %s7392
        // Predicated region
        $region77: #{generator_forward_batched.1} parent=47 // pred_check
          %p7394 = pneg %p197
        $region78: #{generator_forward_batched.1} parent=47 // pred_check_branch
          %7396 = sbr.rel (%p7394) target = $region80
        $region79: #{generator_forward_batched.1} parent=47 // pred_region
          %7398 = vsyncadd %s7390, 0
          %s7399 = smul.addr %s27, 7
          %s7400 = smul.addr %s7399, 8
          %s7401 = scalar_lea.hbm %s7, %s7400
          %s7403 = sshll.u32 %s7393, 4
          %s7404 = int_to_ptr.vmem [resolvable:$true] %s7403
          %s7405 = sshll.u32 %s7401, 4
          %s7406 = int_to_ptr.hbm [resolvable:$true] %s7405
          %7408 = dma.vmem_to_hbm [thread:$0]  %s7404, 896, %s7406, %s7390
        $region80: #{generator_forward_batched.1} parent=47 // pred_fallthru
          _
      $region48: #{generator_forward_batched.1} parent=5 // pred_fallthru
        _
      %p7409 = scmp.le.s32.totalorder 2, %s22
      // Predicated region
      $region81: #{generator_forward_batched.1} parent=5 // pred_check
        %p7410 = pneg %p7409
      $region82: #{generator_forward_batched.1} parent=5 // pred_check_branch
        %7412 = sbr.rel (%p7410) target = $region84
      $region83: #{generator_forward_batched.1} parent=5 // pred_region
        %s7413 = ssub.s32 %s22, 2
        // Predicated region
        $region85: #{generator_forward_batched.1} parent=83 // pred_check
          %p7414 = pneg %p203
        $region86: #{generator_forward_batched.1} parent=83 // pred_check_branch
          %7416 = sbr.rel (%p7414) target = $region88
        $region87: #{generator_forward_batched.1} parent=83 // pred_region
          %s7417 = sand.u32 %s188, 1
          %s7418 = scalar_lea.sflag [#allocation4], %s7417
          %s7419 = sand.u32 %s188, 1
          %s7420 = smul.addr %s7419, 56
          %s7421 = scalar_lea.vmem [#allocation14], %s7420
          %7423 = dma.done %s7418, 896
        $region88: #{generator_forward_batched.1} parent=83 // pred_fallthru
          _
      $region84: #{generator_forward_batched.1} parent=5 // pred_fallthru
        _
    $region6: #{generator_forward_batched.1} parent=1 // loop_footer
      %s26 = sadd.s32 1, %s22
    $region7: #{generator_forward_batched.1} parent=1 // loop_footer_branch
      %21 = sbr.rel target = $region3
    $region8: #{generator_forward_batched.1} parent=1 // loop_exit
      _
    %7424 = vsyncpa [#allocation3], 1
    %s7425 = scalar_lea.sflag [#allocation3], 1
    %7426 = vsyncpa %s7425, 1
    %7427 = vsyncpa [#allocation6], 1
    %7428 = vsyncpa [#allocation9], 1
    %7429 = vsyncpa [#allocation12], 1
    %7430 = vsyncpa [#allocation4], 1
    %s7431 = scalar_lea.sflag [#allocation4], 1
    %7432 = vsyncpa %s7431, 1

</llo_original>
